<compile_context>
chip_gen: v7x
topology: tpu7x:2x2x1
jax: 0.10.0
libtpu: 0.0.40
codegen_flags: <defaults>
</compile_context>

<pallas_src>
import functools

import jax
import jax.numpy as jnp
from jax.experimental import pallas as pl
from jax.experimental.pallas import tpu as pltpu

_BIG = 1e30  # additive-mask sentinel for max/min aggregation (f32-safe, never +/-inf)


def _round_up(x, m):
    return ((x + m - 1) // m) * m


# ----------------------------- weight packing -----------------------------

def _pack_weights(params, hidden_dim, n_layers):
    """Concatenate every weight/bias into one (R, H) f32 slab.

    Each section is padded to a multiple of 8 rows (sublane aligned) and to H
    columns so in-kernel ref slices are cheap and lane-uniform.  Returns the
    slab and a dict of static row offsets.
    """
    H = hidden_dim
    pieces = []
    offs = {}

    def add(name, arr):
        a = jnp.asarray(arr, jnp.float32)
        if a.shape[1] < H:
            a = jnp.pad(a, ((0, 0), (0, H - a.shape[1])))
        pad_r = (-a.shape[0]) % 8
        if pad_r:
            a = jnp.pad(a, ((0, pad_r), (0, 0)))
        offs[name] = sum(p.shape[0] for p in pieces)
        pieces.append(a)

    add("W_p", params["W_p"])
    add("b_p", params["b_p"])
    for l in range(n_layers):
        add(f"Ws{l}", params["Ws"][l])
        add(f"Wd{l}", params["Wd"][l])
        add(f"We{l}", params["We"][l])
        add(f"b_pre{l}", params["b_pre"][l])
        add(f"Wph{l}", params["W_post_h"][l])
        add(f"Wa{l}", params["W_post_agg"][l])
        add(f"b_post{l}", params["b_post"][l])
    # MLPReadout chain kept H lanes wide: pad each weight to H rows / H cols
    # (padded rows/cols are zero, so the extra lanes stay exactly zero).
    w2 = jnp.pad(params["mlp_w2"], ((0, H - params["mlp_w2"].shape[0]), (0, 0)))
    w3 = jnp.pad(params["mlp_w3"], ((0, H - params["mlp_w3"].shape[0]), (0, 0)))
    add("w1", params["mlp_w1"])
    add("b1", params["mlp_b1"])
    add("w2", w2)
    add("b2", params["mlp_b2"])
    add("w3", w3)
    add("b3", params["mlp_b3"])
    return jnp.concatenate(pieces, axis=0), offs


# ----------------------------- fused Pallas kernel -----------------------------

def _pna_fused_kernel(
    h_emb_ref, p_ref, e_emb_ref, src_oh_ref, dst_oh_ref,
    dst_mask_ref, nscal_ref, readout_ref, wpack_ref,
    out_ref,
    *, n_layers, hidden_dim, pos_enc_dim, offs):
    """Whole PNANet forward (eval mode) on VMEM-resident tiles."""
    H = hidden_dim
    dot = lambda a, b: jnp.dot(a, b, preferred_element_type=jnp.float32)
    w = lambda name, rows: wpack_ref[offs[name]:offs[name] + rows, :]

    # ---- input embeddings:  h = Emb_h(atom) + Linear(p) ;  e = Emb_e(bond) ----
    # (embedding row gathers were folded host-side; only the p-Linear is a matmul)
    h = h_emb_ref[...] + dot(p_ref[...], w("W_p", pos_enc_dim)) + w("b_p", 1)
    e = e_emb_ref[...]

    nscal = nscal_ref[...]                  # (N, 8) packed [1/deg, amp, att, has, snorm, 0,0,0]
    inv_deg = nscal[:, 0:1]
    s_amp = nscal[:, 1:2]
    s_att = nscal[:, 2:3]
    has = nscal[:, 3:4]
    snorm = nscal[:, 4:5]

    src_oh = src_oh_ref[...]                # (E, N)  one-hot gather matrix
    dst_oh = dst_oh_ref[...]                # (E, N)
    dst_mask = dst_mask_ref[...]            # (N, E)  binary incoming-edge mask
    negmask = (dst_mask - 1.0) * _BIG       # (N, E)  additive mask for max/min

    for l in range(n_layers):
        h_in = h

        # pretrans: split-K form of Linear([h_src, h_dst, e]) -> no gather / concat.
        msg = (dot(dot(src_oh, h), w(f"Ws{l}", H))
               + dot(dot(dst_oh, h), w(f"Wd{l}", H))
               + dot(e, w(f"We{l}", H)) + w(f"b_pre{l}", 1))              # (E, H)

        # mean / second moment: two small mask-matmuls (no lane concat), f32 1/deg scale.
        mean = dot(dst_mask, msg) * inv_deg
        ex2 = dot(dst_mask, msg * msg) * inv_deg
        std = jnp.sqrt(jnp.maximum(ex2 - mean * mean, 0.0) + 1e-5)

        # max / min: additive mask, no 3-D where-selects.
        # TODO(synk): chunk the E axis with a fori_loop for large batched graphs (VMEM).
        msg_b = msg[None, :, :]
        mx = jnp.max(msg_b + negmask[:, :, None], axis=1) * has
        mn = jnp.min(msg_b - negmask[:, :, None], axis=1) * has

        # posttrans: fully split-K Linear([h | agg | agg*amp | agg*att]);
        # the (12H, O) Wa is never materialised — sliced per H-row chunk from the ref.
        post = dot(h, w(f"Wph{l}", H)) + w(f"b_post{l}", 1)
        wa_base = offs[f"Wa{l}"]
        for s_idx, scale in enumerate((None, s_amp, s_att)):
            for a_idx, agg in enumerate((mean, mx, mn, std)):
                r0 = wa_base + (4 * s_idx + a_idx) * H
                av = agg if scale is None else agg * scale
                post = post + dot(av, wpack_ref[r0:r0 + H, :])

        # graph_norm; BN (eval, fresh stats) = id; dropout (eval) = id; residual.
        h = h_in + post * snorm

    # ---- mean readout + MLPReadout (epilogue, no extra launches) ----
    hg = dot(readout_ref[...], h)                                         # (G, H)
    y = jnp.maximum(dot(hg, w("w1", H)) + w("b1", 1), 0.0)
    y = jnp.maximum(dot(y, w("w2", H)) + w("b2", 1), 0.0)
    y = dot(y, w("w3", H)) + w("b3", 1)
    out_ref[...] = y[:, 0:1]


def pna_net_forward(params, graph, atom_ids, p_feat, bond_ids, snorm_n, hodge_emb=None):
    """Mirrors PNANet.forward(g, h, p, e, snorm_n, hodge_emb) in eval mode (one pallas_call)."""
    del hodge_emb  # use_hodge=None -> "Not using hodge"
    f32 = jnp.float32
    H = params["emb_h"].shape[1]
    P = params["W_p"].shape[0]
    n_layers = params["Ws"].shape[0]

    wpack, offs = _pack_weights(params, H, n_layers)

    # host-side embedding row gathers (K=28 / K=4 matmuls are poor MXU shapes)
    h_emb = params["emb_h"][atom_ids].astype(f32)          # (N_pad, H)
    e_emb = params["emb_e"][bond_ids].astype(f32)          # (E_pad, H)

    n_pad = h_emb.shape[0]
    nscal = jnp.concatenate(
        [graph["inv_deg"], graph["scale_amp"], graph["scale_att"], graph["has_deg"],
         snorm_n.astype(f32), jnp.zeros((n_pad, 3), f32)], axis=1)        # (N_pad, 8)

    inputs = [
        h_emb, p_feat.astype(f32), e_emb,
        graph["src_onehot"], graph["dst_onehot"], graph["dst_mask"],
        nscal, graph["readout_mask"], wpack,
    ]
    n_graphs = graph["readout_mask"].shape[0]
    out_shape = jax.ShapeDtypeStruct((n_graphs, 1), f32)

    return pl.pallas_call(
        functools.partial(_pna_fused_kernel, n_layers=n_layers, hidden_dim=H,
                          pos_enc_dim=P, offs=offs),
        out_shape=out_shape,
        # no grid: single invocation, whole-array VMEM residency, no double-buffering
        in_specs=[pl.BlockSpec(memory_space=pltpu.MemorySpace.VMEM) for _ in inputs],
        out_specs=pl.BlockSpec(memory_space=pltpu.MemorySpace.VMEM),
    )(*inputs)


# ----------------------------- params & graph construction -----------------------------

def init_params(key, *, num_atom_type=28, num_bond_type=4, hidden_dim=32,
                out_dim=32, edge_dim=32, pos_enc_dim=8, n_layers=2):
    assert hidden_dim == out_dim  # residual requires in_dim == out_dim
    ks = jax.random.split(key, 8 + 6 * n_layers)

    def dense(k, shape, fan_in):
        return jax.random.normal(k, shape, jnp.float32) / jnp.sqrt(jnp.float32(fan_in))

    pre_fan = 2 * hidden_dim + edge_dim         # K of the original pretrans Linear
    post_fan = (4 * 3 + 1) * hidden_dim         # K of the original posttrans Linear

    params = {
        "emb_h": jax.random.normal(ks[0], (num_atom_type, hidden_dim), jnp.float32) * 0.1,
        "emb_e": jax.random.normal(ks[1], (num_bond_type, edge_dim), jnp.float32) * 0.1,
        "W_p": dense(ks[2], (pos_enc_dim, hidden_dim), pos_enc_dim),
        "b_p": jnp.zeros((1, hidden_dim), jnp.float32),
        # pretrans Linear split along its K axis -> [W_src | W_dst | W_e], stacked over layers
        "Ws": jnp.stack([dense(ks[3 + 6 * l], (hidden_dim, hidden_dim), pre_fan)
                         for l in range(n_layers)]),
        "Wd": jnp.stack([dense(ks[4 + 6 * l], (hidden_dim, hidden_dim), pre_fan)
                         for l in range(n_layers)]),
        "We": jnp.stack([dense(ks[5 + 6 * l], (edge_dim, hidden_dim), pre_fan)
                         for l in range(n_layers)]),
        "b_pre": jnp.zeros((n_layers, 1, hidden_dim), jnp.float32),
        # posttrans Linear split along K: [h | agg | agg*amp | agg*att]
        "W_post_h": jnp.stack([dense(ks[6 + 6 * l], (hidden_dim, out_dim), post_fan)
                               for l in range(n_layers)]),
        "W_post_agg": jnp.stack([dense(ks[7 + 6 * l], (12 * hidden_dim, out_dim), post_fan)
                                 for l in range(n_layers)]),
        "b_post": jnp.zeros((n_layers, 1, out_dim), jnp.float32),
    }
    kk = 3 + 6 * n_layers
    # MLPReadout(out_dim, 1, L=2): 32 -> 16 (ReLU) -> 8 (ReLU) -> 1
    params["mlp_w1"] = dense(ks[kk], (out_dim, out_dim // 2), out_dim)
    params["mlp_b1"] = jnp.zeros((1, out_dim // 2), jnp.float32)
    params["mlp_w2"] = dense(ks[kk + 1], (out_dim // 2, out_dim // 4), out_dim // 2)
    params["mlp_b2"] = jnp.zeros((1, out_dim // 4), jnp.float32)
    params["mlp_w3"] = dense(ks[kk + 2], (out_dim // 4, 1), out_dim // 4)
    params["mlp_b3"] = jnp.zeros((1, 1), jnp.float32)
    return params


def build_graph():
    """Batched DGL-style graph (6-cycle + 5-node path), bidirected; padded to 8-row multiples."""
    src, dst, gid = [], [], []
    for i in range(6):                          # graph 0: 6-cycle
        j = (i + 1) % 6
        src += [i, j]
        dst += [j, i]
    gid += [0] * 6
    for i in range(6, 10):                      # graph 1: path 6-7-8-9-10
        src += [i, i + 1]
        dst += [i + 1, i]
    gid += [1] * 5

    src = jnp.asarray(src, jnp.int32)
    dst = jnp.asarray(dst, jnp.int32)
    gid = jnp.asarray(gid, jnp.int32)
    n_nodes = int(gid.shape[0])                 # 11
    n_edges = int(src.shape[0])                 # 22
    n_graphs = int(gid.max()) + 1               # 2
    N = _round_up(n_nodes, 8)                   # 16  (sublane aligned)
    E = _round_up(n_edges, 8)                   # 24

    node_iota = jnp.arange(N, dtype=jnp.int32)
    edge_valid = jnp.arange(E) < n_edges
    node_valid = jnp.arange(N) < n_nodes
    src_p = jnp.where(edge_valid, jnp.pad(src, (0, E - n_edges)), -1)
    dst_p = jnp.where(edge_valid, jnp.pad(dst, (0, E - n_edges)), -1)

    # one-hot gather matrices: h[src] == src_onehot @ h ; padded edges -> all-zero rows
    src_onehot = (src_p[:, None] == node_iota[None, :]).astype(jnp.float32)   # (E, N)
    dst_onehot = (dst_p[:, None] == node_iota[None, :]).astype(jnp.float32)   # (E, N)
    dst_mask = dst_onehot.T                                                   # (N, E) binary

    deg = dst_mask.sum(axis=1, keepdims=True)                                 # (N, 1); 0 on pads
    inv_deg = 1.0 / jnp.maximum(deg, 1.0)
    has_deg = (deg > 0.0).astype(jnp.float32)

    graph_sizes = jnp.asarray([(gid == b).sum() for b in range(n_graphs)], jnp.float32)
    gid_p = jnp.pad(gid, (0, N - n_nodes), constant_values=-1)
    snorm_vals = (1.0 / jnp.sqrt(graph_sizes))[jnp.clip(gid_p, 0, n_graphs - 1)]
    snorm_n = jnp.where(node_valid, snorm_vals, 0.0).reshape(N, 1)

    # PNA degree scalers (avg_d from this batch — see TODO in header)
    logd = jnp.log(deg + 1.0)
    avg_d_log = jnp.sum(jnp.where(node_valid[:, None], logd, 0.0)) / n_nodes
    scale_amp = logd / avg_d_log
    scale_att = avg_d_log / jnp.maximum(logd, 1e-6)

    member = (gid_p[None, :] == jnp.arange(n_graphs, dtype=jnp.int32)[:, None]).astype(jnp.float32)
    readout_mask = member / graph_sizes[:, None]                              # (G, N) mean readout

    graph = dict(src_onehot=src_onehot, dst_onehot=dst_onehot, dst_mask=dst_mask,
                 inv_deg=inv_deg, scale_amp=scale_amp, scale_att=scale_att,
                 has_deg=has_deg, readout_mask=readout_mask)
    return graph, n_nodes, n_edges, N, E, n_graphs, snorm_n


# ----------------------------- pure-JAX reference (correctness check) -----------------------------

def _reference_forward(params, graph, atom_ids, p_feat, bond_ids, snorm_n):
    H = params["emb_h"].shape[1]
    h = params["emb_h"][atom_ids] + p_feat @ params["W_p"] + params["b_p"]
    e = params["emb_e"][bond_ids]
    inv_deg, s_amp, s_att, has = (graph["inv_deg"], graph["scale_amp"],
                                  graph["scale_att"], graph["has_deg"])
    dst_mask = graph["dst_mask"]
    negmask = (dst_mask - 1.0) * _BIG
    for l in range(params["Ws"].shape[0]):
        h_in = h
        msg = (graph["src_onehot"] @ h @ params["Ws"][l]
               + graph["dst_onehot"] @ h @ params["Wd"][l]
               + e @ params["We"][l] + params["b_pre"][l])
        mean = (dst_mask @ msg) * inv_deg
        ex2 = (dst_mask @ (msg * msg)) * inv_deg
        std = jnp.sqrt(jnp.maximum(ex2 - mean * mean, 0.0) + 1e-5)
        mx = jnp.max(msg[None] + negmask[:, :, None], axis=1) * has
        mn = jnp.min(msg[None] - negmask[:, :, None], axis=1) * has
        agg = jnp.concatenate([mean, mx, mn, std], axis=-1)
        Wa = params["W_post_agg"][l]
        post = (h @ params["W_post_h"][l] + agg @ Wa[:4 * H]
                + (agg * s_amp) @ Wa[4 * H:8 * H]
                + (agg * s_att) @ Wa[8 * H:] + params["b_post"][l])
        h = h_in + post * snorm_n
    hg = graph["readout_mask"] @ h
    y = jnp.maximum(hg @ params["mlp_w1"] + params["mlp_b1"], 0.0)
    y = jnp.maximum(y @ params["mlp_w2"] + params["mlp_b2"], 0.0)
    return y @ params["mlp_w3"] + params["mlp_b3"]


if __name__ == "__main__":
    key = jax.random.PRNGKey(0)
    k_param, k_atom, k_bond, k_pe = jax.random.split(key, 4)

    graph, n_nodes, n_edges, n_pad, e_pad, n_graphs, snorm_n = build_graph()

    num_atom_type, num_bond_type = 28, 4
    hidden_dim = out_dim = edge_dim = 32
    pos_enc_dim = 8
    n_layers = 2

    params = init_params(k_param, num_atom_type=num_atom_type, num_bond_type=num_bond_type,
                         hidden_dim=hidden_dim, out_dim=out_dim, edge_dim=edge_dim,
                         pos_enc_dim=pos_enc_dim, n_layers=n_layers)

    atom_ids = jax.random.randint(k_atom, (n_nodes,), 0, num_atom_type, jnp.int32)
    atom_ids = jnp.pad(atom_ids, (0, n_pad - n_nodes))
    bond_ids = jax.random.randint(k_bond, (n_edges,), 0, num_bond_type, jnp.int32)
    bond_ids = jnp.pad(bond_ids, (0, e_pad - n_edges))
    p_feat = jax.random.normal(k_pe, (n_nodes, pos_enc_dim), jnp.float32)
    p_feat = jnp.pad(p_feat, ((0, n_pad - n_nodes), (0, 0)))

    scores = pna_net_forward(params, graph, atom_ids, p_feat, bond_ids, snorm_n, hodge_emb=None)
    scores = jax.block_until_ready(scores)

    assert scores.shape == (n_graphs, 1)
    assert bool(jnp.all(jnp.isfinite(scores)))

    ref = _reference_forward(params, graph, atom_ids, p_feat, bond_ids, snorm_n)
    assert bool(jnp.allclose(scores, ref, rtol=1e-3, atol=1e-3)), (scores, ref)

    print("KERNEL_OK")
</pallas_src>

<mosaic_0001>
module attributes {stable_mosaic.version = 11 : i64} {
  func.func @_pna_fused_kernel(%arg0: memref<16x32xf32, #tpu.memory_space<vmem>>, %arg1: memref<16x8xf32, #tpu.memory_space<vmem>>, %arg2: memref<24x32xf32, #tpu.memory_space<vmem>>, %arg3: memref<24x16xf32, #tpu.memory_space<vmem>>, %arg4: memref<24x16xf32, #tpu.memory_space<vmem>>, %arg5: memref<16x24xf32, #tpu.memory_space<vmem>>, %arg6: memref<16x8xf32, #tpu.memory_space<vmem>>, %arg7: memref<2x16xf32, #tpu.memory_space<vmem>>, %arg8: memref<1192x32xf32, #tpu.memory_space<vmem>>, %arg9: memref<2x1xf32, #tpu.memory_space<vmem>>) attributes {dimension_semantics = [], scalar_prefetch = 0 : i64, scratch_operands = 0 : i64, tpu.core_type = #tpu.core_type<tc>} {
    %c0 = arith.constant 0 : index
    %c0_0 = arith.constant 0 : index
    %0 = vector.load %arg0[%c0, %c0_0] : memref<16x32xf32, #tpu.memory_space<vmem>>, vector<16x32xf32>
    %c0_1 = arith.constant 0 : index
    %c0_2 = arith.constant 0 : index
    %1 = vector.load %arg1[%c0_1, %c0_2] : memref<16x8xf32, #tpu.memory_space<vmem>>, vector<16x8xf32>
    %c0_3 = arith.constant 0 : index
    %c0_4 = arith.constant 0 : index
    %2 = vector.load %arg8[%c0_3, %c0_4] : memref<1192x32xf32, #tpu.memory_space<vmem>>, vector<8x32xf32>
    %cst = arith.constant dense<0.000000e+00> : vector<16x32xf32>
    %3 = tpu.matmul %1, %2, %cst {dimension_numbers = #tpu.dot_dimension_numbers<[1], [0], [0], [1], [0, 0, 1, 1], [], []>} : vector<16x8xf32>, vector<8x32xf32>, vector<16x32xf32> -> vector<16x32xf32>
    %4 = arith.addf %0, %3 : vector<16x32xf32>
    %c8 = arith.constant 8 : index
    %c0_5 = arith.constant 0 : index
    %5 = vector.load %arg8[%c8, %c0_5] : memref<1192x32xf32, #tpu.memory_space<vmem>>, vector<1x32xf32>
    %6 = vector.broadcast %5 : vector<1x32xf32> to vector<16x32xf32>
    %7 = arith.addf %4, %6 : vector<16x32xf32>
    %c0_6 = arith.constant 0 : index
    %c0_7 = arith.constant 0 : index
    %8 = vector.load %arg2[%c0_6, %c0_7] : memref<24x32xf32, #tpu.memory_space<vmem>>, vector<24x32xf32>
    %c0_8 = arith.constant 0 : index
    %c0_9 = arith.constant 0 : index
    %9 = vector.load %arg6[%c0_8, %c0_9] : memref<16x8xf32, #tpu.memory_space<vmem>>, vector<16x8xf32>
    %10 = vector.extract_strided_slice %9 {offsets = [0, 0], sizes = [16, 1], strides = [1, 1]} : vector<16x8xf32> to vector<16x1xf32>
    %11 = vector.extract_strided_slice %9 {offsets = [0, 1], sizes = [16, 1], strides = [1, 1]} : vector<16x8xf32> to vector<16x1xf32>
    %12 = vector.extract_strided_slice %9 {offsets = [0, 2], sizes = [16, 1], strides = [1, 1]} : vector<16x8xf32> to vector<16x1xf32>
    %13 = vector.extract_strided_slice %9 {offsets = [0, 3], sizes = [16, 1], strides = [1, 1]} : vector<16x8xf32> to vector<16x1xf32>
    %14 = vector.extract_strided_slice %9 {offsets = [0, 4], sizes = [16, 1], strides = [1, 1]} : vector<16x8xf32> to vector<16x1xf32>
    %c0_10 = arith.constant 0 : index
    %c0_11 = arith.constant 0 : index
    %15 = vector.load %arg3[%c0_10, %c0_11] : memref<24x16xf32, #tpu.memory_space<vmem>>, vector<24x16xf32>
    %c0_12 = arith.constant 0 : index
    %c0_13 = arith.constant 0 : index
    %16 = vector.load %arg4[%c0_12, %c0_13] : memref<24x16xf32, #tpu.memory_space<vmem>>, vector<24x16xf32>
    %c0_14 = arith.constant 0 : index
    %c0_15 = arith.constant 0 : index
    %17 = vector.load %arg5[%c0_14, %c0_15] : memref<16x24xf32, #tpu.memory_space<vmem>>, vector<16x24xf32>
    %cst_16 = arith.constant 1.000000e+00 : f32
    %18 = vector.broadcast %cst_16 : f32 to vector<16x24xf32>
    %19 = arith.subf %17, %18 : vector<16x24xf32>
    %cst_17 = arith.constant 1.000000e+30 : f32
    %20 = vector.broadcast %cst_17 : f32 to vector<16x24xf32>
    %21 = arith.mulf %19, %20 : vector<16x24xf32>
    %cst_18 = arith.constant dense<0.000000e+00> : vector<24x32xf32>
    %22 = tpu.matmul %15, %7, %cst_18 {dimension_numbers = #tpu.dot_dimension_numbers<[1], [0], [0], [1], [0, 0, 1, 1], [], []>} : vector<24x16xf32>, vector<16x32xf32>, vector<24x32xf32> -> vector<24x32xf32>
    %c16 = arith.constant 16 : index
    %c0_19 = arith.constant 0 : index
    %23 = vector.load %arg8[%c16, %c0_19] : memref<1192x32xf32, #tpu.memory_space<vmem>>, vector<32x32xf32>
    %cst_20 = arith.constant dense<0.000000e+00> : vector<24x32xf32>
    %24 = tpu.matmul %22, %23, %cst_20 {dimension_numbers = #tpu.dot_dimension_numbers<[1], [0], [0], [1], [0, 0, 1, 1], [], []>} : vector<24x32xf32>, vector<32x32xf32>, vector<24x32xf32> -> vector<24x32xf32>
    %cst_21 = arith.constant dense<0.000000e+00> : vector<24x32xf32>
    %25 = tpu.matmul %16, %7, %cst_21 {dimension_numbers = #tpu.dot_dimension_numbers<[1], [0], [0], [1], [0, 0, 1, 1], [], []>} : vector<24x16xf32>, vector<16x32xf32>, vector<24x32xf32> -> vector<24x32xf32>
    %c48 = arith.constant 48 : index
    %c0_22 = arith.constant 0 : index
    %26 = vector.load %arg8[%c48, %c0_22] : memref<1192x32xf32, #tpu.memory_space<vmem>>, vector<32x32xf32>
    %cst_23 = arith.constant dense<0.000000e+00> : vector<24x32xf32>
    %27 = tpu.matmul %25, %26, %cst_23 {dimension_numbers = #tpu.dot_dimension_numbers<[1], [0], [0], [1], [0, 0, 1, 1], [], []>} : vector<24x32xf32>, vector<32x32xf32>, vector<24x32xf32> -> vector<24x32xf32>
    %28 = arith.addf %24, %27 : vector<24x32xf32>
    %c80 = arith.constant 80 : index
    %c0_24 = arith.constant 0 : index
    %29 = vector.load %arg8[%c80, %c0_24] : memref<1192x32xf32, #tpu.memory_space<vmem>>, vector<32x32xf32>
    %cst_25 = arith.constant dense<0.000000e+00> : vector<24x32xf32>
    %30 = tpu.matmul %8, %29, %cst_25 {dimension_numbers = #tpu.dot_dimension_numbers<[1], [0], [0], [1], [0, 0, 1, 1], [], []>} : vector<24x32xf32>, vector<32x32xf32>, vector<24x32xf32> -> vector<24x32xf32>
    %31 = arith.addf %28, %30 : vector<24x32xf32>
    %c112 = arith.constant 112 : index
    %c0_26 = arith.constant 0 : index
    %32 = vector.load %arg8[%c112, %c0_26] : memref<1192x32xf32, #tpu.memory_space<vmem>>, vector<1x32xf32>
    %33 = vector.broadcast %32 : vector<1x32xf32> to vector<24x32xf32>
    %34 = arith.addf %31, %33 : vector<24x32xf32>
    %cst_27 = arith.constant dense<0.000000e+00> : vector<16x32xf32>
    %35 = tpu.matmul %17, %34, %cst_27 {dimension_numbers = #tpu.dot_dimension_numbers<[1], [0], [0], [1], [0, 0, 1, 1], [], []>} : vector<16x24xf32>, vector<24x32xf32>, vector<16x32xf32> -> vector<16x32xf32>
    %36 = vector.broadcast %10 : vector<16x1xf32> to vector<16x32xf32>
    %37 = arith.mulf %35, %36 : vector<16x32xf32>
    %38 = arith.mulf %34, %34 : vector<24x32xf32>
    %cst_28 = arith.constant dense<0.000000e+00> : vector<16x32xf32>
    %39 = tpu.matmul %17, %38, %cst_28 {dimension_numbers = #tpu.dot_dimension_numbers<[1], [0], [0], [1], [0, 0, 1, 1], [], []>} : vector<16x24xf32>, vector<24x32xf32>, vector<16x32xf32> -> vector<16x32xf32>
    %40 = vector.broadcast %10 : vector<16x1xf32> to vector<16x32xf32>
    %41 = arith.mulf %39, %40 : vector<16x32xf32>
    %42 = arith.mulf %37, %37 : vector<16x32xf32>
    %43 = arith.subf %41, %42 : vector<16x32xf32>
    %cst_29 = arith.constant 0.000000e+00 : f32
    %44 = vector.broadcast %cst_29 : f32 to vector<16x32xf32>
    %45 = arith.maximumf %43, %44 : vector<16x32xf32>
    %cst_30 = arith.constant 9.99999974E-6 : f32
    %46 = vector.broadcast %cst_30 : f32 to vector<16x32xf32>
    %47 = arith.addf %45, %46 : vector<16x32xf32>
    %48 = math.sqrt %47 : vector<16x32xf32>
    %49 = vector.shape_cast %34 : vector<24x32xf32> to vector<1x24x32xf32>
    %50 = vector.shape_cast %21 : vector<16x24xf32> to vector<16x24x1xf32>
    %51 = vector.broadcast %49 : vector<1x24x32xf32> to vector<16x24x32xf32>
    %52 = vector.broadcast %50 : vector<16x24x1xf32> to vector<16x24x32xf32>
    %53 = arith.addf %51, %52 : vector<16x24x32xf32>
    %cst_31 = arith.constant dense<0xFF800000> : vector<16x32xf32>
    %54 = vector.multi_reduction <maximumf>, %53, %cst_31 [1] : vector<16x24x32xf32> to vector<16x32xf32>
    %55 = vector.broadcast %13 : vector<16x1xf32> to vector<16x32xf32>
    %56 = arith.mulf %54, %55 : vector<16x32xf32>
    %57 = vector.shape_cast %21 : vector<16x24xf32> to vector<16x24x1xf32>
    %58 = vector.broadcast %49 : vector<1x24x32xf32> to vector<16x24x32xf32>
    %59 = vector.broadcast %57 : vector<16x24x1xf32> to vector<16x24x32xf32>
    %60 = arith.subf %58, %59 : vector<16x24x32xf32>
    %cst_32 = arith.constant dense<0x7F800000> : vector<16x32xf32>
    %61 = vector.multi_reduction <minimumf>, %60, %cst_32 [1] : vector<16x24x32xf32> to vector<16x32xf32>
    %62 = vector.broadcast %13 : vector<16x1xf32> to vector<16x32xf32>
    %63 = arith.mulf %61, %62 : vector<16x32xf32>
    %c120 = arith.constant 120 : index
    %c0_33 = arith.constant 0 : index
    %64 = vector.load %arg8[%c120, %c0_33] : memref<1192x32xf32, #tpu.memory_space<vmem>>, vector<32x32xf32>
    %cst_34 = arith.constant dense<0.000000e+00> : vector<16x32xf32>
    %65 = tpu.matmul %7, %64, %cst_34 {dimension_numbers = #tpu.dot_dimension_numbers<[1], [0], [0], [1], [0, 0, 1, 1], [], []>} : vector<16x32xf32>, vector<32x32xf32>, vector<16x32xf32> -> vector<16x32xf32>
    %c536 = arith.constant 536 : index
    %c0_35 = arith.constant 0 : index
    %66 = vector.load %arg8[%c536, %c0_35] : memref<1192x32xf32, #tpu.memory_space<vmem>>, vector<1x32xf32>
    %67 = vector.broadcast %66 : vector<1x32xf32> to vector<16x32xf32>
    %68 = arith.addf %65, %67 : vector<16x32xf32>
    %c152 = arith.constant 152 : index
    %c0_36 = arith.constant 0 : index
    %69 = vector.load %arg8[%c152, %c0_36] : memref<1192x32xf32, #tpu.memory_space<vmem>>, vector<32x32xf32>
    %cst_37 = arith.constant dense<0.000000e+00> : vector<16x32xf32>
    %70 = tpu.matmul %37, %69, %cst_37 {dimension_numbers = #tpu.dot_dimension_numbers<[1], [0], [0], [1], [0, 0, 1, 1], [], []>} : vector<16x32xf32>, vector<32x32xf32>, vector<16x32xf32> -> vector<16x32xf32>
    %71 = arith.addf %68, %70 : vector<16x32xf32>
    %c184 = arith.constant 184 : index
    %c0_38 = arith.constant 0 : index
    %72 = vector.load %arg8[%c184, %c0_38] : memref<1192x32xf32, #tpu.memory_space<vmem>>, vector<32x32xf32>
    %cst_39 = arith.constant dense<0.000000e+00> : vector<16x32xf32>
    %73 = tpu.matmul %56, %72, %cst_39 {dimension_numbers = #tpu.dot_dimension_numbers<[1], [0], [0], [1], [0, 0, 1, 1], [], []>} : vector<16x32xf32>, vector<32x32xf32>, vector<16x32xf32> -> vector<16x32xf32>
    %74 = arith.addf %71, %73 : vector<16x32xf32>
    %c216 = arith.constant 216 : index
    %c0_40 = arith.constant 0 : index
    %75 = vector.load %arg8[%c216, %c0_40] : memref<1192x32xf32, #tpu.memory_space<vmem>>, vector<32x32xf32>
    %cst_41 = arith.constant dense<0.000000e+00> : vector<16x32xf32>
    %76 = tpu.matmul %63, %75, %cst_41 {dimension_numbers = #tpu.dot_dimension_numbers<[1], [0], [0], [1], [0, 0, 1, 1], [], []>} : vector<16x32xf32>, vector<32x32xf32>, vector<16x32xf32> -> vector<16x32xf32>
    %77 = arith.addf %74, %76 : vector<16x32xf32>
    %c248 = arith.constant 248 : index
    %c0_42 = arith.constant 0 : index
    %78 = vector.load %arg8[%c248, %c0_42] : memref<1192x32xf32, #tpu.memory_space<vmem>>, vector<32x32xf32>
    %cst_43 = arith.constant dense<0.000000e+00> : vector<16x32xf32>
    %79 = tpu.matmul %48, %78, %cst_43 {dimension_numbers = #tpu.dot_dimension_numbers<[1], [0], [0], [1], [0, 0, 1, 1], [], []>} : vector<16x32xf32>, vector<32x32xf32>, vector<16x32xf32> -> vector<16x32xf32>
    %80 = arith.addf %77, %79 : vector<16x32xf32>
    %81 = vector.broadcast %11 : vector<16x1xf32> to vector<16x32xf32>
    %82 = arith.mulf %37, %81 : vector<16x32xf32>
    %c280 = arith.constant 280 : index
    %c0_44 = arith.constant 0 : index
    %83 = vector.load %arg8[%c280, %c0_44] : memref<1192x32xf32, #tpu.memory_space<vmem>>, vector<32x32xf32>
    %cst_45 = arith.constant dense<0.000000e+00> : vector<16x32xf32>
    %84 = tpu.matmul %82, %83, %cst_45 {dimension_numbers = #tpu.dot_dimension_numbers<[1], [0], [0], [1], [0, 0, 1, 1], [], []>} : vector<16x32xf32>, vector<32x32xf32>, vector<16x32xf32> -> vector<16x32xf32>
    %85 = arith.addf %80, %84 : vector<16x32xf32>
    %86 = vector.broadcast %11 : vector<16x1xf32> to vector<16x32xf32>
    %87 = arith.mulf %56, %86 : vector<16x32xf32>
    %c312 = arith.constant 312 : index
    %c0_46 = arith.constant 0 : index
    %88 = vector.load %arg8[%c312, %c0_46] : memref<1192x32xf32, #tpu.memory_space<vmem>>, vector<32x32xf32>
    %cst_47 = arith.constant dense<0.000000e+00> : vector<16x32xf32>
    %89 = tpu.matmul %87, %88, %cst_47 {dimension_numbers = #tpu.dot_dimension_numbers<[1], [0], [0], [1], [0, 0, 1, 1], [], []>} : vector<16x32xf32>, vector<32x32xf32>, vector<16x32xf32> -> vector<16x32xf32>
    %90 = arith.addf %85, %89 : vector<16x32xf32>
    %91 = vector.broadcast %11 : vector<16x1xf32> to vector<16x32xf32>
    %92 = arith.mulf %63, %91 : vector<16x32xf32>
    %c344 = arith.constant 344 : index
    %c0_48 = arith.constant 0 : index
    %93 = vector.load %arg8[%c344, %c0_48] : memref<1192x32xf32, #tpu.memory_space<vmem>>, vector<32x32xf32>
    %cst_49 = arith.constant dense<0.000000e+00> : vector<16x32xf32>
    %94 = tpu.matmul %92, %93, %cst_49 {dimension_numbers = #tpu.dot_dimension_numbers<[1], [0], [0], [1], [0, 0, 1, 1], [], []>} : vector<16x32xf32>, vector<32x32xf32>, vector<16x32xf32> -> vector<16x32xf32>
    %95 = arith.addf %90, %94 : vector<16x32xf32>
    %96 = vector.broadcast %11 : vector<16x1xf32> to vector<16x32xf32>
    %97 = arith.mulf %48, %96 : vector<16x32xf32>
    %c376 = arith.constant 376 : index
    %c0_50 = arith.constant 0 : index
    %98 = vector.load %arg8[%c376, %c0_50] : memref<1192x32xf32, #tpu.memory_space<vmem>>, vector<32x32xf32>
    %cst_51 = arith.constant dense<0.000000e+00> : vector<16x32xf32>
    %99 = tpu.matmul %97, %98, %cst_51 {dimension_numbers = #tpu.dot_dimension_numbers<[1], [0], [0], [1], [0, 0, 1, 1], [], []>} : vector<16x32xf32>, vector<32x32xf32>, vector<16x32xf32> -> vector<16x32xf32>
    %100 = arith.addf %95, %99 : vector<16x32xf32>
    %101 = vector.broadcast %12 : vector<16x1xf32> to vector<16x32xf32>
    %102 = arith.mulf %37, %101 : vector<16x32xf32>
    %c408 = arith.constant 408 : index
    %c0_52 = arith.constant 0 : index
    %103 = vector.load %arg8[%c408, %c0_52] : memref<1192x32xf32, #tpu.memory_space<vmem>>, vector<32x32xf32>
    %cst_53 = arith.constant dense<0.000000e+00> : vector<16x32xf32>
    %104 = tpu.matmul %102, %103, %cst_53 {dimension_numbers = #tpu.dot_dimension_numbers<[1], [0], [0], [1], [0, 0, 1, 1], [], []>} : vector<16x32xf32>, vector<32x32xf32>, vector<16x32xf32> -> vector<16x32xf32>
    %105 = arith.addf %100, %104 : vector<16x32xf32>
    %106 = vector.broadcast %12 : vector<16x1xf32> to vector<16x32xf32>
    %107 = arith.mulf %56, %106 : vector<16x32xf32>
    %c440 = arith.constant 440 : index
    %c0_54 = arith.constant 0 : index
    %108 = vector.load %arg8[%c440, %c0_54] : memref<1192x32xf32, #tpu.memory_space<vmem>>, vector<32x32xf32>
    %cst_55 = arith.constant dense<0.000000e+00> : vector<16x32xf32>
    %109 = tpu.matmul %107, %108, %cst_55 {dimension_numbers = #tpu.dot_dimension_numbers<[1], [0], [0], [1], [0, 0, 1, 1], [], []>} : vector<16x32xf32>, vector<32x32xf32>, vector<16x32xf32> -> vector<16x32xf32>
    %110 = arith.addf %105, %109 : vector<16x32xf32>
    %111 = vector.broadcast %12 : vector<16x1xf32> to vector<16x32xf32>
    %112 = arith.mulf %63, %111 : vector<16x32xf32>
    %c472 = arith.constant 472 : index
    %c0_56 = arith.constant 0 : index
    %113 = vector.load %arg8[%c472, %c0_56] : memref<1192x32xf32, #tpu.memory_space<vmem>>, vector<32x32xf32>
    %cst_57 = arith.constant dense<0.000000e+00> : vector<16x32xf32>
    %114 = tpu.matmul %112, %113, %cst_57 {dimension_numbers = #tpu.dot_dimension_numbers<[1], [0], [0], [1], [0, 0, 1, 1], [], []>} : vector<16x32xf32>, vector<32x32xf32>, vector<16x32xf32> -> vector<16x32xf32>
    %115 = arith.addf %110, %114 : vector<16x32xf32>
    %116 = vector.broadcast %12 : vector<16x1xf32> to vector<16x32xf32>
    %117 = arith.mulf %48, %116 : vector<16x32xf32>
    %c504 = arith.constant 504 : index
    %c0_58 = arith.constant 0 : index
    %118 = vector.load %arg8[%c504, %c0_58] : memref<1192x32xf32, #tpu.memory_space<vmem>>, vector<32x32xf32>
    %cst_59 = arith.constant dense<0.000000e+00> : vector<16x32xf32>
    %119 = tpu.matmul %117, %118, %cst_59 {dimension_numbers = #tpu.dot_dimension_numbers<[1], [0], [0], [1], [0, 0, 1, 1], [], []>} : vector<16x32xf32>, vector<32x32xf32>, vector<16x32xf32> -> vector<16x32xf32>
    %120 = arith.addf %115, %119 : vector<16x32xf32>
    %121 = vector.broadcast %14 : vector<16x1xf32> to vector<16x32xf32>
    %122 = arith.mulf %120, %121 : vector<16x32xf32>
    %123 = arith.addf %7, %122 : vector<16x32xf32>
    %cst_60 = arith.constant dense<0.000000e+00> : vector<24x32xf32>
    %124 = tpu.matmul %15, %123, %cst_60 {dimension_numbers = #tpu.dot_dimension_numbers<[1], [0], [0], [1], [0, 0, 1, 1], [], []>} : vector<24x16xf32>, vector<16x32xf32>, vector<24x32xf32> -> vector<24x32xf32>
    %c544 = arith.constant 544 : index
    %c0_61 = arith.constant 0 : index
    %125 = vector.load %arg8[%c544, %c0_61] : memref<1192x32xf32, #tpu.memory_space<vmem>>, vector<32x32xf32>
    %cst_62 = arith.constant dense<0.000000e+00> : vector<24x32xf32>
    %126 = tpu.matmul %124, %125, %cst_62 {dimension_numbers = #tpu.dot_dimension_numbers<[1], [0], [0], [1], [0, 0, 1, 1], [], []>} : vector<24x32xf32>, vector<32x32xf32>, vector<24x32xf32> -> vector<24x32xf32>
    %cst_63 = arith.constant dense<0.000000e+00> : vector<24x32xf32>
    %127 = tpu.matmul %16, %123, %cst_63 {dimension_numbers = #tpu.dot_dimension_numbers<[1], [0], [0], [1], [0, 0, 1, 1], [], []>} : vector<24x16xf32>, vector<16x32xf32>, vector<24x32xf32> -> vector<24x32xf32>
    %c576 = arith.constant 576 : index
    %c0_64 = arith.constant 0 : index
    %128 = vector.load %arg8[%c576, %c0_64] : memref<1192x32xf32, #tpu.memory_space<vmem>>, vector<32x32xf32>
    %cst_65 = arith.constant dense<0.000000e+00> : vector<24x32xf32>
    %129 = tpu.matmul %127, %128, %cst_65 {dimension_numbers = #tpu.dot_dimension_numbers<[1], [0], [0], [1], [0, 0, 1, 1], [], []>} : vector<24x32xf32>, vector<32x32xf32>, vector<24x32xf32> -> vector<24x32xf32>
    %130 = arith.addf %126, %129 : vector<24x32xf32>
    %c608 = arith.constant 608 : index
    %c0_66 = arith.constant 0 : index
    %131 = vector.load %arg8[%c608, %c0_66] : memref<1192x32xf32, #tpu.memory_space<vmem>>, vector<32x32xf32>
    %cst_67 = arith.constant dense<0.000000e+00> : vector<24x32xf32>
    %132 = tpu.matmul %8, %131, %cst_67 {dimension_numbers = #tpu.dot_dimension_numbers<[1], [0], [0], [1], [0, 0, 1, 1], [], []>} : vector<24x32xf32>, vector<32x32xf32>, vector<24x32xf32> -> vector<24x32xf32>
    %133 = arith.addf %130, %132 : vector<24x32xf32>
    %c640 = arith.constant 640 : index
    %c0_68 = arith.constant 0 : index
    %134 = vector.load %arg8[%c640, %c0_68] : memref<1192x32xf32, #tpu.memory_space<vmem>>, vector<1x32xf32>
    %135 = vector.broadcast %134 : vector<1x32xf32> to vector<24x32xf32>
    %136 = arith.addf %133, %135 : vector<24x32xf32>
    %cst_69 = arith.constant dense<0.000000e+00> : vector<16x32xf32>
    %137 = tpu.matmul %17, %136, %cst_69 {dimension_numbers = #tpu.dot_dimension_numbers<[1], [0], [0], [1], [0, 0, 1, 1], [], []>} : vector<16x24xf32>, vector<24x32xf32>, vector<16x32xf32> -> vector<16x32xf32>
    %138 = vector.broadcast %10 : vector<16x1xf32> to vector<16x32xf32>
    %139 = arith.mulf %137, %138 : vector<16x32xf32>
    %140 = arith.mulf %136, %136 : vector<24x32xf32>
    %cst_70 = arith.constant dense<0.000000e+00> : vector<16x32xf32>
    %141 = tpu.matmul %17, %140, %cst_70 {dimension_numbers = #tpu.dot_dimension_numbers<[1], [0], [0], [1], [0, 0, 1, 1], [], []>} : vector<16x24xf32>, vector<24x32xf32>, vector<16x32xf32> -> vector<16x32xf32>
    %142 = vector.broadcast %10 : vector<16x1xf32> to vector<16x32xf32>
    %143 = arith.mulf %141, %142 : vector<16x32xf32>
    %144 = arith.mulf %139, %139 : vector<16x32xf32>
    %145 = arith.subf %143, %144 : vector<16x32xf32>
    %cst_71 = arith.constant 0.000000e+00 : f32
    %146 = vector.broadcast %cst_71 : f32 to vector<16x32xf32>
    %147 = arith.maximumf %145, %146 : vector<16x32xf32>
    %cst_72 = arith.constant 9.99999974E-6 : f32
    %148 = vector.broadcast %cst_72 : f32 to vector<16x32xf32>
    %149 = arith.addf %147, %148 : vector<16x32xf32>
    %150 = math.sqrt %149 : vector<16x32xf32>
    %151 = vector.shape_cast %136 : vector<24x32xf32> to vector<1x24x32xf32>
    %152 = vector.shape_cast %21 : vector<16x24xf32> to vector<16x24x1xf32>
    %153 = vector.broadcast %151 : vector<1x24x32xf32> to vector<16x24x32xf32>
    %154 = vector.broadcast %152 : vector<16x24x1xf32> to vector<16x24x32xf32>
    %155 = arith.addf %153, %154 : vector<16x24x32xf32>
    %cst_73 = arith.constant dense<0xFF800000> : vector<16x32xf32>
    %156 = vector.multi_reduction <maximumf>, %155, %cst_73 [1] : vector<16x24x32xf32> to vector<16x32xf32>
    %157 = vector.broadcast %13 : vector<16x1xf32> to vector<16x32xf32>
    %158 = arith.mulf %156, %157 : vector<16x32xf32>
    %159 = vector.shape_cast %21 : vector<16x24xf32> to vector<16x24x1xf32>
    %160 = vector.broadcast %151 : vector<1x24x32xf32> to vector<16x24x32xf32>
    %161 = vector.broadcast %159 : vector<16x24x1xf32> to vector<16x24x32xf32>
    %162 = arith.subf %160, %161 : vector<16x24x32xf32>
    %cst_74 = arith.constant dense<0x7F800000> : vector<16x32xf32>
    %163 = vector.multi_reduction <minimumf>, %162, %cst_74 [1] : vector<16x24x32xf32> to vector<16x32xf32>
    %164 = vector.broadcast %13 : vector<16x1xf32> to vector<16x32xf32>
    %165 = arith.mulf %163, %164 : vector<16x32xf32>
    %c648 = arith.constant 648 : index
    %c0_75 = arith.constant 0 : index
    %166 = vector.load %arg8[%c648, %c0_75] : memref<1192x32xf32, #tpu.memory_space<vmem>>, vector<32x32xf32>
    %cst_76 = arith.constant dense<0.000000e+00> : vector<16x32xf32>
    %167 = tpu.matmul %123, %166, %cst_76 {dimension_numbers = #tpu.dot_dimension_numbers<[1], [0], [0], [1], [0, 0, 1, 1], [], []>} : vector<16x32xf32>, vector<32x32xf32>, vector<16x32xf32> -> vector<16x32xf32>
    %c1064 = arith.constant 1064 : index
    %c0_77 = arith.constant 0 : index
    %168 = vector.load %arg8[%c1064, %c0_77] : memref<1192x32xf32, #tpu.memory_space<vmem>>, vector<1x32xf32>
    %169 = vector.broadcast %168 : vector<1x32xf32> to vector<16x32xf32>
    %170 = arith.addf %167, %169 : vector<16x32xf32>
    %c680 = arith.constant 680 : index
    %c0_78 = arith.constant 0 : index
    %171 = vector.load %arg8[%c680, %c0_78] : memref<1192x32xf32, #tpu.memory_space<vmem>>, vector<32x32xf32>
    %cst_79 = arith.constant dense<0.000000e+00> : vector<16x32xf32>
    %172 = tpu.matmul %139, %171, %cst_79 {dimension_numbers = #tpu.dot_dimension_numbers<[1], [0], [0], [1], [0, 0, 1, 1], [], []>} : vector<16x32xf32>, vector<32x32xf32>, vector<16x32xf32> -> vector<16x32xf32>
    %173 = arith.addf %170, %172 : vector<16x32xf32>
    %c712 = arith.constant 712 : index
    %c0_80 = arith.constant 0 : index
    %174 = vector.load %arg8[%c712, %c0_80] : memref<1192x32xf32, #tpu.memory_space<vmem>>, vector<32x32xf32>
    %cst_81 = arith.constant dense<0.000000e+00> : vector<16x32xf32>
    %175 = tpu.matmul %158, %174, %cst_81 {dimension_numbers = #tpu.dot_dimension_numbers<[1], [0], [0], [1], [0, 0, 1, 1], [], []>} : vector<16x32xf32>, vector<32x32xf32>, vector<16x32xf32> -> vector<16x32xf32>
    %176 = arith.addf %173, %175 : vector<16x32xf32>
    %c744 = arith.constant 744 : index
    %c0_82 = arith.constant 0 : index
    %177 = vector.load %arg8[%c744, %c0_82] : memref<1192x32xf32, #tpu.memory_space<vmem>>, vector<32x32xf32>
    %cst_83 = arith.constant dense<0.000000e+00> : vector<16x32xf32>
    %178 = tpu.matmul %165, %177, %cst_83 {dimension_numbers = #tpu.dot_dimension_numbers<[1], [0], [0], [1], [0, 0, 1, 1], [], []>} : vector<16x32xf32>, vector<32x32xf32>, vector<16x32xf32> -> vector<16x32xf32>
    %179 = arith.addf %176, %178 : vector<16x32xf32>
    %c776 = arith.constant 776 : index
    %c0_84 = arith.constant 0 : index
    %180 = vector.load %arg8[%c776, %c0_84] : memref<1192x32xf32, #tpu.memory_space<vmem>>, vector<32x32xf32>
    %cst_85 = arith.constant dense<0.000000e+00> : vector<16x32xf32>
    %181 = tpu.matmul %150, %180, %cst_85 {dimension_numbers = #tpu.dot_dimension_numbers<[1], [0], [0], [1], [0, 0, 1, 1], [], []>} : vector<16x32xf32>, vector<32x32xf32>, vector<16x32xf32> -> vector<16x32xf32>
    %182 = arith.addf %179, %181 : vector<16x32xf32>
    %183 = vector.broadcast %11 : vector<16x1xf32> to vector<16x32xf32>
    %184 = arith.mulf %139, %183 : vector<16x32xf32>
    %c808 = arith.constant 808 : index
    %c0_86 = arith.constant 0 : index
    %185 = vector.load %arg8[%c808, %c0_86] : memref<1192x32xf32, #tpu.memory_space<vmem>>, vector<32x32xf32>
    %cst_87 = arith.constant dense<0.000000e+00> : vector<16x32xf32>
    %186 = tpu.matmul %184, %185, %cst_87 {dimension_numbers = #tpu.dot_dimension_numbers<[1], [0], [0], [1], [0, 0, 1, 1], [], []>} : vector<16x32xf32>, vector<32x32xf32>, vector<16x32xf32> -> vector<16x32xf32>
    %187 = arith.addf %182, %186 : vector<16x32xf32>
    %188 = vector.broadcast %11 : vector<16x1xf32> to vector<16x32xf32>
    %189 = arith.mulf %158, %188 : vector<16x32xf32>
    %c840 = arith.constant 840 : index
    %c0_88 = arith.constant 0 : index
    %190 = vector.load %arg8[%c840, %c0_88] : memref<1192x32xf32, #tpu.memory_space<vmem>>, vector<32x32xf32>
    %cst_89 = arith.constant dense<0.000000e+00> : vector<16x32xf32>
    %191 = tpu.matmul %189, %190, %cst_89 {dimension_numbers = #tpu.dot_dimension_numbers<[1], [0], [0], [1], [0, 0, 1, 1], [], []>} : vector<16x32xf32>, vector<32x32xf32>, vector<16x32xf32> -> vector<16x32xf32>
    %192 = arith.addf %187, %191 : vector<16x32xf32>
    %193 = vector.broadcast %11 : vector<16x1xf32> to vector<16x32xf32>
    %194 = arith.mulf %165, %193 : vector<16x32xf32>
    %c872 = arith.constant 872 : index
    %c0_90 = arith.constant 0 : index
    %195 = vector.load %arg8[%c872, %c0_90] : memref<1192x32xf32, #tpu.memory_space<vmem>>, vector<32x32xf32>
    %cst_91 = arith.constant dense<0.000000e+00> : vector<16x32xf32>
    %196 = tpu.matmul %194, %195, %cst_91 {dimension_numbers = #tpu.dot_dimension_numbers<[1], [0], [0], [1], [0, 0, 1, 1], [], []>} : vector<16x32xf32>, vector<32x32xf32>, vector<16x32xf32> -> vector<16x32xf32>
    %197 = arith.addf %192, %196 : vector<16x32xf32>
    %198 = vector.broadcast %11 : vector<16x1xf32> to vector<16x32xf32>
    %199 = arith.mulf %150, %198 : vector<16x32xf32>
    %c904 = arith.constant 904 : index
    %c0_92 = arith.constant 0 : index
    %200 = vector.load %arg8[%c904, %c0_92] : memref<1192x32xf32, #tpu.memory_space<vmem>>, vector<32x32xf32>
    %cst_93 = arith.constant dense<0.000000e+00> : vector<16x32xf32>
    %201 = tpu.matmul %199, %200, %cst_93 {dimension_numbers = #tpu.dot_dimension_numbers<[1], [0], [0], [1], [0, 0, 1, 1], [], []>} : vector<16x32xf32>, vector<32x32xf32>, vector<16x32xf32> -> vector<16x32xf32>
    %202 = arith.addf %197, %201 : vector<16x32xf32>
    %203 = vector.broadcast %12 : vector<16x1xf32> to vector<16x32xf32>
    %204 = arith.mulf %139, %203 : vector<16x32xf32>
    %c936 = arith.constant 936 : index
    %c0_94 = arith.constant 0 : index
    %205 = vector.load %arg8[%c936, %c0_94] : memref<1192x32xf32, #tpu.memory_space<vmem>>, vector<32x32xf32>
    %cst_95 = arith.constant dense<0.000000e+00> : vector<16x32xf32>
    %206 = tpu.matmul %204, %205, %cst_95 {dimension_numbers = #tpu.dot_dimension_numbers<[1], [0], [0], [1], [0, 0, 1, 1], [], []>} : vector<16x32xf32>, vector<32x32xf32>, vector<16x32xf32> -> vector<16x32xf32>
    %207 = arith.addf %202, %206 : vector<16x32xf32>
    %208 = vector.broadcast %12 : vector<16x1xf32> to vector<16x32xf32>
    %209 = arith.mulf %158, %208 : vector<16x32xf32>
    %c968 = arith.constant 968 : index
    %c0_96 = arith.constant 0 : index
    %210 = vector.load %arg8[%c968, %c0_96] : memref<1192x32xf32, #tpu.memory_space<vmem>>, vector<32x32xf32>
    %cst_97 = arith.constant dense<0.000000e+00> : vector<16x32xf32>
    %211 = tpu.matmul %209, %210, %cst_97 {dimension_numbers = #tpu.dot_dimension_numbers<[1], [0], [0], [1], [0, 0, 1, 1], [], []>} : vector<16x32xf32>, vector<32x32xf32>, vector<16x32xf32> -> vector<16x32xf32>
    %212 = arith.addf %207, %211 : vector<16x32xf32>
    %213 = vector.broadcast %12 : vector<16x1xf32> to vector<16x32xf32>
    %214 = arith.mulf %165, %213 : vector<16x32xf32>
    %c1000 = arith.constant 1000 : index
    %c0_98 = arith.constant 0 : index
    %215 = vector.load %arg8[%c1000, %c0_98] : memref<1192x32xf32, #tpu.memory_space<vmem>>, vector<32x32xf32>
    %cst_99 = arith.constant dense<0.000000e+00> : vector<16x32xf32>
    %216 = tpu.matmul %214, %215, %cst_99 {dimension_numbers = #tpu.dot_dimension_numbers<[1], [0], [0], [1], [0, 0, 1, 1], [], []>} : vector<16x32xf32>, vector<32x32xf32>, vector<16x32xf32> -> vector<16x32xf32>
    %217 = arith.addf %212, %216 : vector<16x32xf32>
    %218 = vector.broadcast %12 : vector<16x1xf32> to vector<16x32xf32>
    %219 = arith.mulf %150, %218 : vector<16x32xf32>
    %c1032 = arith.constant 1032 : index
    %c0_100 = arith.constant 0 : index
    %220 = vector.load %arg8[%c1032, %c0_100] : memref<1192x32xf32, #tpu.memory_space<vmem>>, vector<32x32xf32>
    %cst_101 = arith.constant dense<0.000000e+00> : vector<16x32xf32>
    %221 = tpu.matmul %219, %220, %cst_101 {dimension_numbers = #tpu.dot_dimension_numbers<[1], [0], [0], [1], [0, 0, 1, 1], [], []>} : vector<16x32xf32>, vector<32x32xf32>, vector<16x32xf32> -> vector<16x32xf32>
    %222 = arith.addf %217, %221 : vector<16x32xf32>
    %223 = vector.broadcast %14 : vector<16x1xf32> to vector<16x32xf32>
    %224 = arith.mulf %222, %223 : vector<16x32xf32>
    %225 = arith.addf %123, %224 : vector<16x32xf32>
    %c0_102 = arith.constant 0 : index
    %c0_103 = arith.constant 0 : index
    %226 = vector.load %arg7[%c0_102, %c0_103] : memref<2x16xf32, #tpu.memory_space<vmem>>, vector<2x16xf32>
    %cst_104 = arith.constant dense<0.000000e+00> : vector<2x32xf32>
    %227 = tpu.matmul %226, %225, %cst_104 {dimension_numbers = #tpu.dot_dimension_numbers<[1], [0], [0], [1], [0, 0, 1, 1], [], []>} : vector<2x16xf32>, vector<16x32xf32>, vector<2x32xf32> -> vector<2x32xf32>
    %c1072 = arith.constant 1072 : index
    %c0_105 = arith.constant 0 : index
    %228 = vector.load %arg8[%c1072, %c0_105] : memref<1192x32xf32, #tpu.memory_space<vmem>>, vector<32x32xf32>
    %cst_106 = arith.constant dense<0.000000e+00> : vector<2x32xf32>
    %229 = tpu.matmul %227, %228, %cst_106 {dimension_numbers = #tpu.dot_dimension_numbers<[1], [0], [0], [1], [0, 0, 1, 1], [], []>} : vector<2x32xf32>, vector<32x32xf32>, vector<2x32xf32> -> vector<2x32xf32>
    %c1104 = arith.constant 1104 : index
    %c0_107 = arith.constant 0 : index
    %230 = vector.load %arg8[%c1104, %c0_107] : memref<1192x32xf32, #tpu.memory_space<vmem>>, vector<1x32xf32>
    %231 = vector.broadcast %230 : vector<1x32xf32> to vector<2x32xf32>
    %232 = arith.addf %229, %231 : vector<2x32xf32>
    %cst_108 = arith.constant 0.000000e+00 : f32
    %233 = vector.broadcast %cst_108 : f32 to vector<2x32xf32>
    %234 = arith.maximumf %232, %233 : vector<2x32xf32>
    %c1112 = arith.constant 1112 : index
    %c0_109 = arith.constant 0 : index
    %235 = vector.load %arg8[%c1112, %c0_109] : memref<1192x32xf32, #tpu.memory_space<vmem>>, vector<32x32xf32>
    %cst_110 = arith.constant dense<0.000000e+00> : vector<2x32xf32>
    %236 = tpu.matmul %234, %235, %cst_110 {dimension_numbers = #tpu.dot_dimension_numbers<[1], [0], [0], [1], [0, 0, 1, 1], [], []>} : vector<2x32xf32>, vector<32x32xf32>, vector<2x32xf32> -> vector<2x32xf32>
    %c1144 = arith.constant 1144 : index
    %c0_111 = arith.constant 0 : index
    %237 = vector.load %arg8[%c1144, %c0_111] : memref<1192x32xf32, #tpu.memory_space<vmem>>, vector<1x32xf32>
    %238 = vector.broadcast %237 : vector<1x32xf32> to vector<2x32xf32>
    %239 = arith.addf %236, %238 : vector<2x32xf32>
    %cst_112 = arith.constant 0.000000e+00 : f32
    %240 = vector.broadcast %cst_112 : f32 to vector<2x32xf32>
    %241 = arith.maximumf %239, %240 : vector<2x32xf32>
    %c1152 = arith.constant 1152 : index
    %c0_113 = arith.constant 0 : index
    %242 = vector.load %arg8[%c1152, %c0_113] : memref<1192x32xf32, #tpu.memory_space<vmem>>, vector<32x32xf32>
    %cst_114 = arith.constant dense<0.000000e+00> : vector<2x32xf32>
    %243 = tpu.matmul %241, %242, %cst_114 {dimension_numbers = #tpu.dot_dimension_numbers<[1], [0], [0], [1], [0, 0, 1, 1], [], []>} : vector<2x32xf32>, vector<32x32xf32>, vector<2x32xf32> -> vector<2x32xf32>
    %c1184 = arith.constant 1184 : index
    %c0_115 = arith.constant 0 : index
    %244 = vector.load %arg8[%c1184, %c0_115] : memref<1192x32xf32, #tpu.memory_space<vmem>>, vector<1x32xf32>
    %245 = vector.broadcast %244 : vector<1x32xf32> to vector<2x32xf32>
    %246 = arith.addf %243, %245 : vector<2x32xf32>
    %247 = vector.extract_strided_slice %246 {offsets = [0, 0], sizes = [2, 1], strides = [1, 1]} : vector<2x32xf32> to vector<2x1xf32>
    %c0_116 = arith.constant 0 : index
    %c0_117 = arith.constant 0 : index
    %248 = vector.load %arg9[%c0_116, %c0_117] : memref<2x1xf32, #tpu.memory_space<vmem>>, vector<2x1xf32>
    tpu.vector_store %arg9[%c0_116, %c0_117], %247 {strides = array<i32>} : memref<2x1xf32, #tpu.memory_space<vmem>>, vector<2x1xf32>,
    return
  }
}

</mosaic_0001>

<llo_original>
// kernel: tpu_custom_call.1
$region0: #{tpu_custom_call.1}
  #allocation0 [shape = 'u32[]', space=smem, size = 0x4, offset = 0x4, fixed_abs, tag = 'smem constant byte address 0x4 - core index']
  #allocation1 [shape = 'u32[144,128]{1,0:T(1,128)}', space=vmem, size = 0x12000, scoped, tag = 'internal scratch']
  %s0 = inlined_call_operand.vmem [shape: f32[16,32], index: 0, kind: input, shape index: {}]
  %s1 = inlined_call_operand.vmem [shape: f32[16,8], index: 1, kind: input, shape index: {}]
  %s2 = inlined_call_operand.vmem [shape: f32[24,32], index: 2, kind: input, shape index: {}]
  %s3 = inlined_call_operand.vmem [shape: f32[24,16], index: 3, kind: input, shape index: {}]
  %s4 = inlined_call_operand.vmem [shape: f32[24,16], index: 4, kind: input, shape index: {}]
  %s5 = inlined_call_operand.vmem [shape: f32[16,24], index: 5, kind: input, shape index: {}]
  %s6 = inlined_call_operand.vmem [shape: f32[16,8], index: 6, kind: input, shape index: {}]
  %s7 = inlined_call_operand.vmem [shape: f32[2,16], index: 7, kind: input, shape index: {}]
  %s8 = inlined_call_operand.vmem [shape: f32[1192,32], index: 8, kind: input, shape index: {}]
  %s9 = inlined_call_operand.vmem [shape: f32[2,1], index: 9, kind: output, shape index: {}]
  %s10 = sld [smem:[#allocation0]]
  $region46: #{tpu_custom_call.1} parent=0
    _
  %s12 = ssub.s32 1, %s10
  %s13 = scalar_select 0, %s12, %s10
  // Predicated region
  $region2: #{tpu_custom_call.1} parent=0 // pred_check
    _
  $region3: #{tpu_custom_call.1} parent=0 // pred_check_branch
    %15 = sbr.rel (0) target = $region5
  $region4: #{tpu_custom_call.1} parent=0 // pred_region
    _
  $region5: #{tpu_custom_call.1} parent=0 // pred_fallthru
    _
  // Predicated region
  $region6: #{tpu_custom_call.1} parent=0 // pred_check
    _
  $region7: #{tpu_custom_call.1} parent=0 // pred_check_branch
    %17 = sbr.rel (0) target = $region9
  $region8: #{tpu_custom_call.1} parent=0 // pred_region
    _
  $region9: #{tpu_custom_call.1} parent=0 // pred_fallthru
    _
  // Predicated region
  $region10: #{tpu_custom_call.1} parent=0 // pred_check
    _
  $region11: #{tpu_custom_call.1} parent=0 // pred_check_branch
    %19 = sbr.rel (0) target = $region13
  $region12: #{tpu_custom_call.1} parent=0 // pred_region
    _
  $region13: #{tpu_custom_call.1} parent=0 // pred_fallthru
    _
  // Predicated region
  $region14: #{tpu_custom_call.1} parent=0 // pred_check
    _
  $region15: #{tpu_custom_call.1} parent=0 // pred_check_branch
    %21 = sbr.rel (0) target = $region17
  $region16: #{tpu_custom_call.1} parent=0 // pred_region
    _
  $region17: #{tpu_custom_call.1} parent=0 // pred_fallthru
    _
  // Predicated region
  $region18: #{tpu_custom_call.1} parent=0 // pred_check
    _
  $region19: #{tpu_custom_call.1} parent=0 // pred_check_branch
    %23 = sbr.rel (0) target = $region21
  $region20: #{tpu_custom_call.1} parent=0 // pred_region
    _
  $region21: #{tpu_custom_call.1} parent=0 // pred_fallthru
    _
  // Predicated region
  $region22: #{tpu_custom_call.1} parent=0 // pred_check
    _
  $region23: #{tpu_custom_call.1} parent=0 // pred_check_branch
    %25 = sbr.rel (0) target = $region25
  $region24: #{tpu_custom_call.1} parent=0 // pred_region
    _
  $region25: #{tpu_custom_call.1} parent=0 // pred_fallthru
    _
  // Predicated region
  $region26: #{tpu_custom_call.1} parent=0 // pred_check
    _
  $region27: #{tpu_custom_call.1} parent=0 // pred_check_branch
    %27 = sbr.rel (0) target = $region29
  $region28: #{tpu_custom_call.1} parent=0 // pred_region
    _
  $region29: #{tpu_custom_call.1} parent=0 // pred_fallthru
    _
  // Predicated region
  $region30: #{tpu_custom_call.1} parent=0 // pred_check
    _
  $region31: #{tpu_custom_call.1} parent=0 // pred_check_branch
    %29 = sbr.rel (0) target = $region33
  $region32: #{tpu_custom_call.1} parent=0 // pred_region
    _
  $region33: #{tpu_custom_call.1} parent=0 // pred_fallthru
    _
  // Predicated region
  $region34: #{tpu_custom_call.1} parent=0 // pred_check
    _
  $region35: #{tpu_custom_call.1} parent=0 // pred_check_branch
    %31 = sbr.rel (0) target = $region37
  $region36: #{tpu_custom_call.1} parent=0 // pred_region
    _
  $region37: #{tpu_custom_call.1} parent=0 // pred_fallthru
    _
  %v32 = vld [vmem:[%s0] sm:$0xff]
  %v33 = vld [vmem:[%s0 + $0x8] sm:$0xff]
  %v34 = vld [vmem:[%s1] sm:$0xff]
  %v35 = vld [vmem:[%s1 + $0x8] sm:$0xff]
  %v36 = vld [vmem:[%s8] sm:$0xff]
  %vm37 = vcmask 64512
  %v39 = vsel %vm37, %v34, 0
  %v42 = vsel %vm37, %v35, 0
  %44 = vmatprep.subr.mxu0 0.0
  %45 = vmatpush1.msra.mxu0 %v36
  %46 = vmatprep.subr.mxu0 0.0
  %47 = vmatpush1.msra.mxu0 0.0
  %48 = vmatprep.subr.mxu0 0.0
  %49 = vmatpush1.msra.mxu0 0.0
  %50 = vmatprep.subr.mxu0 0.0
  %51 = vmatpush1.msra.mxu0 0.0
  %52 = vmatprep.subr.mxu0 0.0
  %53 = vmatpush1.msra.mxu0 0.0
  %54 = vmatprep.subr.mxu0 0.0
  %55 = vmatpush1.msra.mxu0 0.0
  %56 = vmatprep.subr.mxu0 0.0
  %57 = vmatpush1.msra.mxu0 0.0
  %58 = vmatprep.subr.mxu0 0.0
  %59 = vmatpush1.msra.mxu0 0.0
  %60 = vmatprep.subr.mxu0 0.0
  %61 = vmatpush1.msra.mxu0 0.0
  %62 = vmatprep.subr.mxu0 0.0
  %63 = vmatpush1.msra.mxu0 0.0
  %64 = vmatprep.subr.mxu0 0.0
  %65 = vmatpush1.msra.mxu0 0.0
  %66 = vmatprep.subr.mxu0 0.0
  %67 = vmatpush1.msra.mxu0 0.0
  %68 = vmatprep.subr.mxu0 0.0
  %69 = vmatpush1.msra.mxu0 0.0
  %70 = vmatprep.subr.mxu0 0.0
  %71 = vmatpush1.msra.mxu0 0.0
  %72 = vmatprep.subr.mxu0 0.0
  %73 = vmatpush1.msra.mxu0 0.0
  %74 = vmatprep.subr.mxu0 0.0
  %75 = vmatpush1.msra.mxu0 0.0
  %76 = vmatprep.subr.mxu0 0.0
  %77 = vmatpush1.msra.mxu0 0.0
  %78 = vmatprep.subr.mxu0 0.0
  %79 = vmatpush1.msra.mxu0 0.0
  %80 = vmatprep.subr.mxu0 0.0
  %81 = vmatpush1.msra.mxu0 0.0
  %82 = vmatprep.subr.mxu0 0.0
  %83 = vmatpush1.msra.mxu0 0.0
  %84 = vmatprep.subr.mxu0 0.0
  %85 = vmatpush1.msra.mxu0 0.0
  %86 = vmatprep.subr.mxu0 0.0
  %87 = vmatpush1.msra.mxu0 0.0
  %88 = vmatprep.subr.mxu0 0.0
  %89 = vmatpush1.msra.mxu0 0.0
  %90 = vmatprep.subr.mxu0 0.0
  %91 = vmatpush1.msra.mxu0 0.0
  %92 = vmatprep.subr.mxu0 0.0
  %93 = vmatpush1.msra.mxu0 0.0
  %94 = vmatprep.subr.mxu0 0.0
  %95 = vmatpush1.msra.mxu0 0.0
  %96 = vmatprep.subr.mxu0 0.0
  %97 = vmatpush1.msra.mxu0 0.0
  %98 = vmatprep.subr.mxu0 0.0
  %99 = vmatpush1.msra.mxu0 0.0
  %100 = vmatprep.subr.mxu0 0.0
  %101 = vmatpush1.msra.mxu0 0.0
  %102 = vmatprep.subr.mxu0 0.0
  %103 = vmatpush1.msra.mxu0 0.0
  %104 = vmatprep.subr.mxu0 0.0
  %105 = vmatpush1.msra.mxu0 0.0
  %106 = vmatprep.subr.mxu0 0.0
  %107 = vmatpush1.msra.mxu0 0.0
  %108 = vmatprep.mubr.f32.mxu0 0.0
  %109 = vmatmul.mubr.f32.gmra.mrb[0].mxu0 %v39
  %v110 = vpop.f32.mrb[0].mxu0
  %v111 = vadd.f32 0.0, %v110
  %v112 = vpop.f32.mrb[0].mxu0
  %113 = vmatprep.mubr.f32.mxu0 0.0
  %114 = vmatmul.mubr.f32.gmra.mrb[0].mxu0 %v42
  %v115 = vpop.f32.mrb[0].mxu0
  %v116 = vadd.f32 0.0, %v115
  %v117 = vpop.f32.mrb[0].mxu0
  %118 = vdwg.mxu0
  %v119 = vadd.f32 %v32, %v111
  %v120 = vadd.f32 %v33, %v116
  %v121 = vld [vmem:[%s8 + $0x8] sm:$0x1]
  %v122 = vlaneseq
  %v123 = vshrl.u32 %v122, 7
  %v124 = vsub.s32 0, %v123
  %v125 = vrot.slane %v121, %v124
  %v126 = vadd.f32 %v119, %v125
  %v127 = vadd.f32 %v120, %v125
  %v128 = vld [vmem:[%s2] sm:$0xff]
  %v129 = vld [vmem:[%s2 + $0x8] sm:$0xff]
  %v130 = vld [vmem:[%s2 + $0x10] sm:$0xff]
  %v131 = vld [vmem:[%s6] sm:$0xff]
  %v132 = vld [vmem:[%s6 + $0x8] sm:$0xff]
  %v133 = vld [vmem:[%s3] sm:$0xff]
  %v134 = vld [vmem:[%s3 + $0x8] sm:$0xff]
  %v135 = vld [vmem:[%s3 + $0x10] sm:$0xff]
  %v136 = vld [vmem:[%s4] sm:$0xff]
  %v137 = vld [vmem:[%s4 + $0x8] sm:$0xff]
  %v138 = vld [vmem:[%s4 + $0x10] sm:$0xff]
  %v139 = vld [vmem:[%s5] sm:$0xff]
  %v140 = vld [vmem:[%s5 + $0x8] sm:$0xff]
  %v141 = vsub.f32 %v139, 1.0
  %v142 = vsub.f32 %v140, 1.0
  %v143 = vmul.f32 %v141, 1e+30
  %v144 = vmul.f32 %v142, 1e+30
  %vm145 = vcmask 130048
  %v147 = vsel %vm145, %v133, 0
  %v150 = vsel %vm145, %v134, 0
  %v153 = vsel %vm145, %v135, 0
  %155 = vmatprep.subr.mxu0 0.0
  %156 = vmatpush1.msra.mxu0 %v126
  %157 = vmatprep.subr.mxu0 0.0
  %158 = vmatpush1.msra.mxu0 %v127
  %159 = vmatprep.subr.mxu0 0.0
  %160 = vmatpush1.msra.mxu0 0.0
  %161 = vmatprep.subr.mxu0 0.0
  %162 = vmatpush1.msra.mxu0 0.0
  %163 = vmatprep.subr.mxu0 0.0
  %164 = vmatpush1.msra.mxu0 0.0
  %165 = vmatprep.subr.mxu0 0.0
  %166 = vmatpush1.msra.mxu0 0.0
  %167 = vmatprep.subr.mxu0 0.0
  %168 = vmatpush1.msra.mxu0 0.0
  %169 = vmatprep.subr.mxu0 0.0
  %170 = vmatpush1.msra.mxu0 0.0
  %171 = vmatprep.subr.mxu0 0.0
  %172 = vmatpush1.msra.mxu0 0.0
  %173 = vmatprep.subr.mxu0 0.0
  %174 = vmatpush1.msra.mxu0 0.0
  %175 = vmatprep.subr.mxu0 0.0
  %176 = vmatpush1.msra.mxu0 0.0
  %177 = vmatprep.subr.mxu0 0.0
  %178 = vmatpush1.msra.mxu0 0.0
  %179 = vmatprep.subr.mxu0 0.0
  %180 = vmatpush1.msra.mxu0 0.0
  %181 = vmatprep.subr.mxu0 0.0
  %182 = vmatpush1.msra.mxu0 0.0
  %183 = vmatprep.subr.mxu0 0.0
  %184 = vmatpush1.msra.mxu0 0.0
  %185 = vmatprep.subr.mxu0 0.0
  %186 = vmatpush1.msra.mxu0 0.0
  %187 = vmatprep.subr.mxu0 0.0
  %188 = vmatpush1.msra.mxu0 0.0
  %189 = vmatprep.subr.mxu0 0.0
  %190 = vmatpush1.msra.mxu0 0.0
  %191 = vmatprep.subr.mxu0 0.0
  %192 = vmatpush1.msra.mxu0 0.0
  %193 = vmatprep.subr.mxu0 0.0
  %194 = vmatpush1.msra.mxu0 0.0
  %195 = vmatprep.subr.mxu0 0.0
  %196 = vmatpush1.msra.mxu0 0.0
  %197 = vmatprep.subr.mxu0 0.0
  %198 = vmatpush1.msra.mxu0 0.0
  %199 = vmatprep.subr.mxu0 0.0
  %200 = vmatpush1.msra.mxu0 0.0
  %201 = vmatprep.subr.mxu0 0.0
  %202 = vmatpush1.msra.mxu0 0.0
  %203 = vmatprep.subr.mxu0 0.0
  %204 = vmatpush1.msra.mxu0 0.0
  %205 = vmatprep.subr.mxu0 0.0
  %206 = vmatpush1.msra.mxu0 0.0
  %207 = vmatprep.subr.mxu0 0.0
  %208 = vmatpush1.msra.mxu0 0.0
  %209 = vmatprep.subr.mxu0 0.0
  %210 = vmatpush1.msra.mxu0 0.0
  %211 = vmatprep.subr.mxu0 0.0
  %212 = vmatpush1.msra.mxu0 0.0
  %213 = vmatprep.subr.mxu0 0.0
  %214 = vmatpush1.msra.mxu0 0.0
  %215 = vmatprep.subr.mxu0 0.0
  %216 = vmatpush1.msra.mxu0 0.0
  %217 = vmatprep.subr.mxu0 0.0
  %218 = vmatpush1.msra.mxu0 0.0
  %219 = vmatprep.mubr.f32.mxu0 0.0
  %220 = vmatmul.mubr.f32.gmra.mrb[0].mxu0 %v147
  %v221 = vpop.f32.mrb[0].mxu0
  %v222 = vadd.f32 0.0, %v221
  %v223 = vpop.f32.mrb[0].mxu0
  %224 = vmatprep.mubr.f32.mxu0 0.0
  %225 = vmatmul.mubr.f32.gmra.mrb[0].mxu0 %v150
  %v226 = vpop.f32.mrb[0].mxu0
  %v227 = vadd.f32 0.0, %v226
  %v228 = vpop.f32.mrb[0].mxu0
  %229 = vmatprep.mubr.f32.mxu0 0.0
  %230 = vmatmul.mubr.f32.gmra.mrb[0].mxu0 %v153
  %v231 = vpop.f32.mrb[0].mxu0
  %v232 = vadd.f32 0.0, %v231
  %v233 = vpop.f32.mrb[0].mxu0
  %234 = vdwg.mxu0
  %v235 = vld [vmem:[%s8 + $0x10] sm:$0xff]
  %v236 = vld [vmem:[%s8 + $0x18] sm:$0xff]
  %v237 = vld [vmem:[%s8 + $0x20] sm:$0xff]
  %v238 = vld [vmem:[%s8 + $0x28] sm:$0xff]
  %v240 = vsel %vm145, %v136, 0
  %v243 = vsel %vm145, %v137, 0
  %v246 = vsel %vm145, %v138, 0
  %248 = vmatprep.subr.mxu0 0.0
  %249 = vmatpush1.msra.mxu0 %v126
  %250 = vmatprep.subr.mxu0 0.0
  %251 = vmatpush1.msra.mxu0 %v127
  %252 = vmatprep.subr.mxu0 0.0
  %253 = vmatpush1.msra.mxu0 0.0
  %254 = vmatprep.subr.mxu0 0.0
  %255 = vmatpush1.msra.mxu0 0.0
  %256 = vmatprep.subr.mxu0 0.0
  %257 = vmatpush1.msra.mxu0 0.0
  %258 = vmatprep.subr.mxu0 0.0
  %259 = vmatpush1.msra.mxu0 0.0
  %260 = vmatprep.subr.mxu0 0.0
  %261 = vmatpush1.msra.mxu0 0.0
  %262 = vmatprep.subr.mxu0 0.0
  %263 = vmatpush1.msra.mxu0 0.0
  %264 = vmatprep.subr.mxu0 0.0
  %265 = vmatpush1.msra.mxu0 0.0
  %266 = vmatprep.subr.mxu0 0.0
  %267 = vmatpush1.msra.mxu0 0.0
  %268 = vmatprep.subr.mxu0 0.0
  %269 = vmatpush1.msra.mxu0 0.0
  %270 = vmatprep.subr.mxu0 0.0
  %271 = vmatpush1.msra.mxu0 0.0
  %272 = vmatprep.subr.mxu0 0.0
  %273 = vmatpush1.msra.mxu0 0.0
  %274 = vmatprep.subr.mxu0 0.0
  %275 = vmatpush1.msra.mxu0 0.0
  %276 = vmatprep.subr.mxu0 0.0
  %277 = vmatpush1.msra.mxu0 0.0
  %278 = vmatprep.subr.mxu0 0.0
  %279 = vmatpush1.msra.mxu0 0.0
  %280 = vmatprep.subr.mxu0 0.0
  %281 = vmatpush1.msra.mxu0 0.0
  %282 = vmatprep.subr.mxu0 0.0
  %283 = vmatpush1.msra.mxu0 0.0
  %284 = vmatprep.subr.mxu0 0.0
  %285 = vmatpush1.msra.mxu0 0.0
  %286 = vmatprep.subr.mxu0 0.0
  %287 = vmatpush1.msra.mxu0 0.0
  %288 = vmatprep.subr.mxu0 0.0
  %289 = vmatpush1.msra.mxu0 0.0
  %290 = vmatprep.subr.mxu0 0.0
  %291 = vmatpush1.msra.mxu0 0.0
  %292 = vmatprep.subr.mxu0 0.0
  %293 = vmatpush1.msra.mxu0 0.0
  %294 = vmatprep.subr.mxu0 0.0
  %295 = vmatpush1.msra.mxu0 0.0
  %296 = vmatprep.subr.mxu0 0.0
  %297 = vmatpush1.msra.mxu0 0.0
  %298 = vmatprep.subr.mxu0 0.0
  %299 = vmatpush1.msra.mxu0 0.0
  %300 = vmatprep.subr.mxu0 0.0
  %301 = vmatpush1.msra.mxu0 0.0
  %302 = vmatprep.subr.mxu0 0.0
  %303 = vmatpush1.msra.mxu0 0.0
  %304 = vmatprep.subr.mxu0 0.0
  %305 = vmatpush1.msra.mxu0 0.0
  %306 = vmatprep.subr.mxu0 0.0
  %307 = vmatpush1.msra.mxu0 0.0
  %308 = vmatprep.subr.mxu0 0.0
  %309 = vmatpush1.msra.mxu0 0.0
  %310 = vmatprep.subr.mxu0 0.0
  %311 = vmatpush1.msra.mxu0 0.0
  %312 = vmatprep.mubr.f32.mxu0 0.0
  %313 = vmatmul.mubr.f32.gmra.mrb[0].mxu0 %v240
  %v314 = vpop.f32.mrb[0].mxu0
  %v315 = vadd.f32 0.0, %v314
  %v316 = vpop.f32.mrb[0].mxu0
  %317 = vmatprep.mubr.f32.mxu0 0.0
  %318 = vmatmul.mubr.f32.gmra.mrb[0].mxu0 %v243
  %v319 = vpop.f32.mrb[0].mxu0
  %v320 = vadd.f32 0.0, %v319
  %v321 = vpop.f32.mrb[0].mxu0
  %322 = vmatprep.mubr.f32.mxu0 0.0
  %323 = vmatmul.mubr.f32.gmra.mrb[0].mxu0 %v246
  %v324 = vpop.f32.mrb[0].mxu0
  %v325 = vadd.f32 0.0, %v324
  %v326 = vpop.f32.mrb[0].mxu0
  %327 = vdwg.mxu0
  %v328 = vld [vmem:[%s8 + $0x30] sm:$0xff]
  %v329 = vld [vmem:[%s8 + $0x38] sm:$0xff]
  %v330 = vld [vmem:[%s8 + $0x40] sm:$0xff]
  %v331 = vld [vmem:[%s8 + $0x48] sm:$0xff]
  %vm332 = vcmask 261120
  %v334 = vsel %vm332, %v315, 0
  %v337 = vsel %vm332, %v320, 0
  %v340 = vsel %vm332, %v325, 0
  %342 = vmatprep.subr.mxu0 0.0
  %343 = vmatpush1.msra.mxu0 %v328
  %344 = vmatprep.subr.mxu0 0.0
  %345 = vmatpush1.msra.mxu0 %v329
  %346 = vmatprep.subr.mxu0 0.0
  %347 = vmatpush1.msra.mxu0 %v330
  %348 = vmatprep.subr.mxu0 0.0
  %349 = vmatpush1.msra.mxu0 %v331
  %350 = vmatprep.subr.mxu0 0.0
  %351 = vmatpush1.msra.mxu0 0.0
  %352 = vmatprep.subr.mxu0 0.0
  %353 = vmatpush1.msra.mxu0 0.0
  %354 = vmatprep.subr.mxu0 0.0
  %355 = vmatpush1.msra.mxu0 0.0
  %356 = vmatprep.subr.mxu0 0.0
  %357 = vmatpush1.msra.mxu0 0.0
  %358 = vmatprep.subr.mxu0 0.0
  %359 = vmatpush1.msra.mxu0 0.0
  %360 = vmatprep.subr.mxu0 0.0
  %361 = vmatpush1.msra.mxu0 0.0
  %362 = vmatprep.subr.mxu0 0.0
  %363 = vmatpush1.msra.mxu0 0.0
  %364 = vmatprep.subr.mxu0 0.0
  %365 = vmatpush1.msra.mxu0 0.0
  %366 = vmatprep.subr.mxu0 0.0
  %367 = vmatpush1.msra.mxu0 0.0
  %368 = vmatprep.subr.mxu0 0.0
  %369 = vmatpush1.msra.mxu0 0.0
  %370 = vmatprep.subr.mxu0 0.0
  %371 = vmatpush1.msra.mxu0 0.0
  %372 = vmatprep.subr.mxu0 0.0
  %373 = vmatpush1.msra.mxu0 0.0
  %374 = vmatprep.subr.mxu0 0.0
  %375 = vmatpush1.msra.mxu0 0.0
  %376 = vmatprep.subr.mxu0 0.0
  %377 = vmatpush1.msra.mxu0 0.0
  %378 = vmatprep.subr.mxu0 0.0
  %379 = vmatpush1.msra.mxu0 0.0
  %380 = vmatprep.subr.mxu0 0.0
  %381 = vmatpush1.msra.mxu0 0.0
  %382 = vmatprep.subr.mxu0 0.0
  %383 = vmatpush1.msra.mxu0 0.0
  %384 = vmatprep.subr.mxu0 0.0
  %385 = vmatpush1.msra.mxu0 0.0
  %386 = vmatprep.subr.mxu0 0.0
  %387 = vmatpush1.msra.mxu0 0.0
  %388 = vmatprep.subr.mxu0 0.0
  %389 = vmatpush1.msra.mxu0 0.0
  %390 = vmatprep.subr.mxu0 0.0
  %391 = vmatpush1.msra.mxu0 0.0
  %392 = vmatprep.subr.mxu0 0.0
  %393 = vmatpush1.msra.mxu0 0.0
  %394 = vmatprep.subr.mxu0 0.0
  %395 = vmatpush1.msra.mxu0 0.0
  %396 = vmatprep.subr.mxu0 0.0
  %397 = vmatpush1.msra.mxu0 0.0
  %398 = vmatprep.subr.mxu0 0.0
  %399 = vmatpush1.msra.mxu0 0.0
  %400 = vmatprep.subr.mxu0 0.0
  %401 = vmatpush1.msra.mxu0 0.0
  %402 = vmatprep.subr.mxu0 0.0
  %403 = vmatpush1.msra.mxu0 0.0
  %404 = vmatprep.subr.mxu0 0.0
  %405 = vmatpush1.msra.mxu0 0.0
  %406 = vmatprep.mubr.f32.mxu0 0.0
  %407 = vmatmul.mubr.f32.gmra.mrb[0].mxu0 %v334
  %v408 = vpop.f32.mrb[0].mxu0
  %v409 = vadd.f32 0.0, %v408
  %v410 = vpop.f32.mrb[0].mxu0
  %411 = vmatprep.mubr.f32.mxu0 0.0
  %412 = vmatmul.mubr.f32.gmra.mrb[0].mxu0 %v337
  %v413 = vpop.f32.mrb[0].mxu0
  %v414 = vadd.f32 0.0, %v413
  %v415 = vpop.f32.mrb[0].mxu0
  %416 = vmatprep.mubr.f32.mxu0 0.0
  %417 = vmatmul.mubr.f32.gmra.mrb[0].mxu0 %v340
  %v418 = vpop.f32.mrb[0].mxu0
  %v419 = vadd.f32 0.0, %v418
  %v420 = vpop.f32.mrb[0].mxu0
  %421 = vdwg.mxu0
  %v423 = vsel %vm332, %v222, 0
  %v426 = vsel %vm332, %v227, 0
  %v429 = vsel %vm332, %v232, 0
  %431 = vmatprep.subr.mxu0 0.0
  %432 = vmatpush1.msra.mxu0 %v235
  %433 = vmatprep.subr.mxu0 0.0
  %434 = vmatpush1.msra.mxu0 %v236
  %435 = vmatprep.subr.mxu0 0.0
  %436 = vmatpush1.msra.mxu0 %v237
  %437 = vmatprep.subr.mxu0 0.0
  %438 = vmatpush1.msra.mxu0 %v238
  %439 = vmatprep.subr.mxu0 0.0
  %440 = vmatpush1.msra.mxu0 0.0
  %441 = vmatprep.subr.mxu0 0.0
  %442 = vmatpush1.msra.mxu0 0.0
  %443 = vmatprep.subr.mxu0 0.0
  %444 = vmatpush1.msra.mxu0 0.0
  %445 = vmatprep.subr.mxu0 0.0
  %446 = vmatpush1.msra.mxu0 0.0
  %447 = vmatprep.subr.mxu0 0.0
  %448 = vmatpush1.msra.mxu0 0.0
  %449 = vmatprep.subr.mxu0 0.0
  %450 = vmatpush1.msra.mxu0 0.0
  %451 = vmatprep.subr.mxu0 0.0
  %452 = vmatpush1.msra.mxu0 0.0
  %453 = vmatprep.subr.mxu0 0.0
  %454 = vmatpush1.msra.mxu0 0.0
  %455 = vmatprep.subr.mxu0 0.0
  %456 = vmatpush1.msra.mxu0 0.0
  %457 = vmatprep.subr.mxu0 0.0
  %458 = vmatpush1.msra.mxu0 0.0
  %459 = vmatprep.subr.mxu0 0.0
  %460 = vmatpush1.msra.mxu0 0.0
  %461 = vmatprep.subr.mxu0 0.0
  %462 = vmatpush1.msra.mxu0 0.0
  %463 = vmatprep.subr.mxu0 0.0
  %464 = vmatpush1.msra.mxu0 0.0
  %465 = vmatprep.subr.mxu0 0.0
  %466 = vmatpush1.msra.mxu0 0.0
  %467 = vmatprep.subr.mxu0 0.0
  %468 = vmatpush1.msra.mxu0 0.0
  %469 = vmatprep.subr.mxu0 0.0
  %470 = vmatpush1.msra.mxu0 0.0
  %471 = vmatprep.subr.mxu0 0.0
  %472 = vmatpush1.msra.mxu0 0.0
  %473 = vmatprep.subr.mxu0 0.0
  %474 = vmatpush1.msra.mxu0 0.0
  %475 = vmatprep.subr.mxu0 0.0
  %476 = vmatpush1.msra.mxu0 0.0
  %477 = vmatprep.subr.mxu0 0.0
  %478 = vmatpush1.msra.mxu0 0.0
  %479 = vmatprep.subr.mxu0 0.0
  %480 = vmatpush1.msra.mxu0 0.0
  %481 = vmatprep.subr.mxu0 0.0
  %482 = vmatpush1.msra.mxu0 0.0
  %483 = vmatprep.subr.mxu0 0.0
  %484 = vmatpush1.msra.mxu0 0.0
  %485 = vmatprep.subr.mxu0 0.0
  %486 = vmatpush1.msra.mxu0 0.0
  %487 = vmatprep.subr.mxu0 0.0
  %488 = vmatpush1.msra.mxu0 0.0
  %489 = vmatprep.subr.mxu0 0.0
  %490 = vmatpush1.msra.mxu0 0.0
  %491 = vmatprep.subr.mxu0 0.0
  %492 = vmatpush1.msra.mxu0 0.0
  %493 = vmatprep.subr.mxu0 0.0
  %494 = vmatpush1.msra.mxu0 0.0
  %495 = vmatprep.mubr.f32.mxu0 0.0
  %496 = vmatmul.mubr.f32.gmra.mrb[0].mxu0 %v423
  %v497 = vpop.f32.mrb[0].mxu0
  %v498 = vadd.f32 %v409, %v497
  %v499 = vpop.f32.mrb[0].mxu0
  %500 = vmatprep.mubr.f32.mxu0 0.0
  %501 = vmatmul.mubr.f32.gmra.mrb[0].mxu0 %v426
  %v502 = vpop.f32.mrb[0].mxu0
  %v503 = vadd.f32 %v414, %v502
  %v504 = vpop.f32.mrb[0].mxu0
  %505 = vmatprep.mubr.f32.mxu0 0.0
  %506 = vmatmul.mubr.f32.gmra.mrb[0].mxu0 %v429
  %v507 = vpop.f32.mrb[0].mxu0
  %v508 = vadd.f32 %v419, %v507
  %v509 = vpop.f32.mrb[0].mxu0
  %510 = vdwg.mxu0
  %v511 = vld [vmem:[%s8 + $0x50] sm:$0xff]
  %v512 = vld [vmem:[%s8 + $0x58] sm:$0xff]
  %v513 = vld [vmem:[%s8 + $0x60] sm:$0xff]
  %v514 = vld [vmem:[%s8 + $0x68] sm:$0xff]
  %v516 = vsel %vm332, %v128, 0
  %v519 = vsel %vm332, %v129, 0
  %v522 = vsel %vm332, %v130, 0
  %524 = vmatprep.subr.mxu0 0.0
  %525 = vmatpush1.msra.mxu0 %v511
  %526 = vmatprep.subr.mxu0 0.0
  %527 = vmatpush1.msra.mxu0 %v512
  %528 = vmatprep.subr.mxu0 0.0
  %529 = vmatpush1.msra.mxu0 %v513
  %530 = vmatprep.subr.mxu0 0.0
  %531 = vmatpush1.msra.mxu0 %v514
  %532 = vmatprep.subr.mxu0 0.0
  %533 = vmatpush1.msra.mxu0 0.0
  %534 = vmatprep.subr.mxu0 0.0
  %535 = vmatpush1.msra.mxu0 0.0
  %536 = vmatprep.subr.mxu0 0.0
  %537 = vmatpush1.msra.mxu0 0.0
  %538 = vmatprep.subr.mxu0 0.0
  %539 = vmatpush1.msra.mxu0 0.0
  %540 = vmatprep.subr.mxu0 0.0
  %541 = vmatpush1.msra.mxu0 0.0
  %542 = vmatprep.subr.mxu0 0.0
  %543 = vmatpush1.msra.mxu0 0.0
  %544 = vmatprep.subr.mxu0 0.0
  %545 = vmatpush1.msra.mxu0 0.0
  %546 = vmatprep.subr.mxu0 0.0
  %547 = vmatpush1.msra.mxu0 0.0
  %548 = vmatprep.subr.mxu0 0.0
  %549 = vmatpush1.msra.mxu0 0.0
  %550 = vmatprep.subr.mxu0 0.0
  %551 = vmatpush1.msra.mxu0 0.0
  %552 = vmatprep.subr.mxu0 0.0
  %553 = vmatpush1.msra.mxu0 0.0
  %554 = vmatprep.subr.mxu0 0.0
  %555 = vmatpush1.msra.mxu0 0.0
  %556 = vmatprep.subr.mxu0 0.0
  %557 = vmatpush1.msra.mxu0 0.0
  %558 = vmatprep.subr.mxu0 0.0
  %559 = vmatpush1.msra.mxu0 0.0
  %560 = vmatprep.subr.mxu0 0.0
  %561 = vmatpush1.msra.mxu0 0.0
  %562 = vmatprep.subr.mxu0 0.0
  %563 = vmatpush1.msra.mxu0 0.0
  %564 = vmatprep.subr.mxu0 0.0
  %565 = vmatpush1.msra.mxu0 0.0
  %566 = vmatprep.subr.mxu0 0.0
  %567 = vmatpush1.msra.mxu0 0.0
  %568 = vmatprep.subr.mxu0 0.0
  %569 = vmatpush1.msra.mxu0 0.0
  %570 = vmatprep.subr.mxu0 0.0
  %571 = vmatpush1.msra.mxu0 0.0
  %572 = vmatprep.subr.mxu0 0.0
  %573 = vmatpush1.msra.mxu0 0.0
  %574 = vmatprep.subr.mxu0 0.0
  %575 = vmatpush1.msra.mxu0 0.0
  %576 = vmatprep.subr.mxu0 0.0
  %577 = vmatpush1.msra.mxu0 0.0
  %578 = vmatprep.subr.mxu0 0.0
  %579 = vmatpush1.msra.mxu0 0.0
  %580 = vmatprep.subr.mxu0 0.0
  %581 = vmatpush1.msra.mxu0 0.0
  %582 = vmatprep.subr.mxu0 0.0
  %583 = vmatpush1.msra.mxu0 0.0
  %584 = vmatprep.subr.mxu0 0.0
  %585 = vmatpush1.msra.mxu0 0.0
  %586 = vmatprep.subr.mxu0 0.0
  %587 = vmatpush1.msra.mxu0 0.0
  %588 = vmatprep.mubr.f32.mxu0 0.0
  %589 = vmatmul.mubr.f32.gmra.mrb[0].mxu0 %v516
  %v590 = vpop.f32.mrb[0].mxu0
  %v591 = vadd.f32 0.0, %v590
  %v592 = vpop.f32.mrb[0].mxu0
  %593 = vmatprep.mubr.f32.mxu0 0.0
  %594 = vmatmul.mubr.f32.gmra.mrb[0].mxu0 %v519
  %v595 = vpop.f32.mrb[0].mxu0
  %v596 = vadd.f32 0.0, %v595
  %v597 = vpop.f32.mrb[0].mxu0
  %598 = vmatprep.mubr.f32.mxu0 0.0
  %599 = vmatmul.mubr.f32.gmra.mrb[0].mxu0 %v522
  %v600 = vpop.f32.mrb[0].mxu0
  %v601 = vadd.f32 0.0, %v600
  %v602 = vpop.f32.mrb[0].mxu0
  %603 = vdwg.mxu0
  %v604 = vadd.f32 %v498, %v591
  %v605 = vadd.f32 %v503, %v596
  %v606 = vadd.f32 %v508, %v601
  %v607 = vld [vmem:[%s8 + $0x70] sm:$0x1]
  %v608 = vlaneseq
  %v609 = vshrl.u32 %v608, 7
  %v610 = vsub.s32 0, %v609
  %v611 = vrot.slane %v607, %v610
  %v612 = vadd.f32 %v604, %v611
  %v613 = vadd.f32 %v605, %v611
  %v614 = vadd.f32 %v606, %v611
  %vm615 = vcmask 195584
  %v617 = vsel %vm615, %v139, 0
  %v620 = vsel %vm615, %v140, 0
  %622 = vmatprep.subr.mxu0 0.0
  %623 = vmatpush1.msra.mxu0 %v612
  %624 = vmatprep.subr.mxu0 0.0
  %625 = vmatpush1.msra.mxu0 %v613
  %626 = vmatprep.subr.mxu0 0.0
  %627 = vmatpush1.msra.mxu0 %v614
  %628 = vmatprep.subr.mxu0 0.0
  %629 = vmatpush1.msra.mxu0 0.0
  %630 = vmatprep.subr.mxu0 0.0
  %631 = vmatpush1.msra.mxu0 0.0
  %632 = vmatprep.subr.mxu0 0.0
  %633 = vmatpush1.msra.mxu0 0.0
  %634 = vmatprep.subr.mxu0 0.0
  %635 = vmatpush1.msra.mxu0 0.0
  %636 = vmatprep.subr.mxu0 0.0
  %637 = vmatpush1.msra.mxu0 0.0
  %638 = vmatprep.subr.mxu0 0.0
  %639 = vmatpush1.msra.mxu0 0.0
  %640 = vmatprep.subr.mxu0 0.0
  %641 = vmatpush1.msra.mxu0 0.0
  %642 = vmatprep.subr.mxu0 0.0
  %643 = vmatpush1.msra.mxu0 0.0
  %644 = vmatprep.subr.mxu0 0.0
  %645 = vmatpush1.msra.mxu0 0.0
  %646 = vmatprep.subr.mxu0 0.0
  %647 = vmatpush1.msra.mxu0 0.0
  %648 = vmatprep.subr.mxu0 0.0
  %649 = vmatpush1.msra.mxu0 0.0
  %650 = vmatprep.subr.mxu0 0.0
  %651 = vmatpush1.msra.mxu0 0.0
  %652 = vmatprep.subr.mxu0 0.0
  %653 = vmatpush1.msra.mxu0 0.0
  %654 = vmatprep.subr.mxu0 0.0
  %655 = vmatpush1.msra.mxu0 0.0
  %656 = vmatprep.subr.mxu0 0.0
  %657 = vmatpush1.msra.mxu0 0.0
  %658 = vmatprep.subr.mxu0 0.0
  %659 = vmatpush1.msra.mxu0 0.0
  %660 = vmatprep.subr.mxu0 0.0
  %661 = vmatpush1.msra.mxu0 0.0
  %662 = vmatprep.subr.mxu0 0.0
  %663 = vmatpush1.msra.mxu0 0.0
  %664 = vmatprep.subr.mxu0 0.0
  %665 = vmatpush1.msra.mxu0 0.0
  %666 = vmatprep.subr.mxu0 0.0
  %667 = vmatpush1.msra.mxu0 0.0
  %668 = vmatprep.subr.mxu0 0.0
  %669 = vmatpush1.msra.mxu0 0.0
  %670 = vmatprep.subr.mxu0 0.0
  %671 = vmatpush1.msra.mxu0 0.0
  %672 = vmatprep.subr.mxu0 0.0
  %673 = vmatpush1.msra.mxu0 0.0
  %674 = vmatprep.subr.mxu0 0.0
  %675 = vmatpush1.msra.mxu0 0.0
  %676 = vmatprep.subr.mxu0 0.0
  %677 = vmatpush1.msra.mxu0 0.0
  %678 = vmatprep.subr.mxu0 0.0
  %679 = vmatpush1.msra.mxu0 0.0
  %680 = vmatprep.subr.mxu0 0.0
  %681 = vmatpush1.msra.mxu0 0.0
  %682 = vmatprep.subr.mxu0 0.0
  %683 = vmatpush1.msra.mxu0 0.0
  %684 = vmatprep.subr.mxu0 0.0
  %685 = vmatpush1.msra.mxu0 0.0
  %686 = vmatprep.mubr.f32.mxu0 0.0
  %687 = vmatmul.mubr.f32.gmra.mrb[0].mxu0 %v617
  %v688 = vpop.f32.mrb[0].mxu0
  %v689 = vadd.f32 0.0, %v688
  %v690 = vpop.f32.mrb[0].mxu0
  %691 = vmatprep.mubr.f32.mxu0 0.0
  %692 = vmatmul.mubr.f32.gmra.mrb[0].mxu0 %v620
  %v693 = vpop.f32.mrb[0].mxu0
  %v694 = vadd.f32 0.0, %v693
  %v695 = vpop.f32.mrb[0].mxu0
  %696 = vdwg.mxu0
  %698 = vset.pattern.permute.xlu0 0
  %699 = vperm.xlu0 %698, %v131
  %v700 = vpop.permute.xlu0 %699
  %703 = vset.pattern.permute.xlu0 0
  %704 = vperm.xlu0 %703, %v132
  %v705 = vpop.permute.xlu0 %704
  %v707 = vmul.f32 %v689, %v700
  %v708 = vmul.f32 %v694, %v705
  %v709 = vmul.f32 %v612, %v612
  %v710 = vmul.f32 %v613, %v613
  %v711 = vmul.f32 %v614, %v614
  %712 = vmatprep.subr.mxu0 0.0
  %713 = vmatpush1.msra.mxu0 %v709
  %714 = vmatprep.subr.mxu0 0.0
  %715 = vmatpush1.msra.mxu0 %v710
  %716 = vmatprep.subr.mxu0 0.0
  %717 = vmatpush1.msra.mxu0 %v711
  %718 = vmatprep.subr.mxu0 0.0
  %719 = vmatpush1.msra.mxu0 0.0
  %720 = vmatprep.subr.mxu0 0.0
  %721 = vmatpush1.msra.mxu0 0.0
  %722 = vmatprep.subr.mxu0 0.0
  %723 = vmatpush1.msra.mxu0 0.0
  %724 = vmatprep.subr.mxu0 0.0
  %725 = vmatpush1.msra.mxu0 0.0
  %726 = vmatprep.subr.mxu0 0.0
  %727 = vmatpush1.msra.mxu0 0.0
  %728 = vmatprep.subr.mxu0 0.0
  %729 = vmatpush1.msra.mxu0 0.0
  %730 = vmatprep.subr.mxu0 0.0
  %731 = vmatpush1.msra.mxu0 0.0
  %732 = vmatprep.subr.mxu0 0.0
  %733 = vmatpush1.msra.mxu0 0.0
  %734 = vmatprep.subr.mxu0 0.0
  %735 = vmatpush1.msra.mxu0 0.0
  %736 = vmatprep.subr.mxu0 0.0
  %737 = vmatpush1.msra.mxu0 0.0
  %738 = vmatprep.subr.mxu0 0.0
  %739 = vmatpush1.msra.mxu0 0.0
  %740 = vmatprep.subr.mxu0 0.0
  %741 = vmatpush1.msra.mxu0 0.0
  %742 = vmatprep.subr.mxu0 0.0
  %743 = vmatpush1.msra.mxu0 0.0
  %744 = vmatprep.subr.mxu0 0.0
  %745 = vmatpush1.msra.mxu0 0.0
  %746 = vmatprep.subr.mxu0 0.0
  %747 = vmatpush1.msra.mxu0 0.0
  %748 = vmatprep.subr.mxu0 0.0
  %749 = vmatpush1.msra.mxu0 0.0
  %750 = vmatprep.subr.mxu0 0.0
  %751 = vmatpush1.msra.mxu0 0.0
  %752 = vmatprep.subr.mxu0 0.0
  %753 = vmatpush1.msra.mxu0 0.0
  %754 = vmatprep.subr.mxu0 0.0
  %755 = vmatpush1.msra.mxu0 0.0
  %756 = vmatprep.subr.mxu0 0.0
  %757 = vmatpush1.msra.mxu0 0.0
  %758 = vmatprep.subr.mxu0 0.0
  %759 = vmatpush1.msra.mxu0 0.0
  %760 = vmatprep.subr.mxu0 0.0
  %761 = vmatpush1.msra.mxu0 0.0
  %762 = vmatprep.subr.mxu0 0.0
  %763 = vmatpush1.msra.mxu0 0.0
  %764 = vmatprep.subr.mxu0 0.0
  %765 = vmatpush1.msra.mxu0 0.0
  %766 = vmatprep.subr.mxu0 0.0
  %767 = vmatpush1.msra.mxu0 0.0
  %768 = vmatprep.subr.mxu0 0.0
  %769 = vmatpush1.msra.mxu0 0.0
  %770 = vmatprep.subr.mxu0 0.0
  %771 = vmatpush1.msra.mxu0 0.0
  %772 = vmatprep.subr.mxu0 0.0
  %773 = vmatpush1.msra.mxu0 0.0
  %774 = vmatprep.subr.mxu0 0.0
  %775 = vmatpush1.msra.mxu0 0.0
  %776 = vmatprep.mubr.f32.mxu0 0.0
  %777 = vmatmul.mubr.f32.gmra.mrb[0].mxu0 %v617
  %v778 = vpop.f32.mrb[0].mxu0
  %v779 = vadd.f32 0.0, %v778
  %v780 = vpop.f32.mrb[0].mxu0
  %781 = vmatprep.mubr.f32.mxu0 0.0
  %782 = vmatmul.mubr.f32.gmra.mrb[0].mxu0 %v620
  %v783 = vpop.f32.mrb[0].mxu0
  %v784 = vadd.f32 0.0, %v783
  %v785 = vpop.f32.mrb[0].mxu0
  %786 = vdwg.mxu0
  %v787 = vmul.f32 %v779, %v700
  %v788 = vmul.f32 %v784, %v705
  %v789 = vmul.f32 %v707, %v707
  %v790 = vmul.f32 %v708, %v708
  %v791 = vsub.f32 %v787, %v789
  %v792 = vsub.f32 %v788, %v790
  %v793 = vmax.f32 %v791, 0.0
  %v794 = vmax.f32 %v792, 0.0
  %v795 = vadd.f32 %v793, 1e-05
  %v796 = vadd.f32 %v794, 1e-05
  %v797 = vrsqrt.pop %v795
  %v798 = vmul.f32 %v795, %v797
  %vm799 = vcmp.eq.f32.partialorder %v795, inf
  %v800 = vsel %vm799, %v795, %v798
  %vm801 = vcmp.eq.f32.partialorder %v795, 0.0
  %v802 = vand.u32 %v795, 2147483648
  %v803 = vsel %vm801, %v802, %v800
  %v804 = vrsqrt.pop %v796
  %v805 = vmul.f32 %v796, %v804
  %vm806 = vcmp.eq.f32.partialorder %v796, inf
  %v807 = vsel %vm806, %v796, %v805
  %vm808 = vcmp.eq.f32.partialorder %v796, 0.0
  %v809 = vand.u32 %v796, 2147483648
  %v810 = vsel %vm808, %v809, %v807
  %v811 = vlaneseq
  %v812 = vshrl.u32 %v811, 7
  %v813 = vsub.s32 0, %v812
  %v814 = vrot.slane %v143, %v813
  %816 = vbcast.lane.b32.xlu0 %v814, 256
  %v817 = vpop.permute.xlu0 %816
  %s819 = sor.u32 256, 8
  %820 = vbcast.lane.b32.xlu0 %v814, %s819
  %v821 = vpop.permute.xlu0 %820
  %s823 = sor.u32 256, 16
  %824 = vbcast.lane.b32.xlu0 %v814, %s823
  %v825 = vpop.permute.xlu0 %824
  %v826 = vlaneseq
  %v827 = vshrl.u32 %v826, 7
  %v828 = vsub.s32 1, %v827
  %v829 = vrot.slane %v143, %v828
  %831 = vbcast.lane.b32.xlu0 %v829, 256
  %v832 = vpop.permute.xlu0 %831
  %s834 = sor.u32 256, 8
  %835 = vbcast.lane.b32.xlu0 %v829, %s834
  %v836 = vpop.permute.xlu0 %835
  %s838 = sor.u32 256, 16
  %839 = vbcast.lane.b32.xlu0 %v829, %s838
  %v840 = vpop.permute.xlu0 %839
  %v841 = vlaneseq
  %v842 = vshrl.u32 %v841, 7
  %v843 = vsub.s32 2, %v842
  %v844 = vrot.slane %v143, %v843
  %846 = vbcast.lane.b32.xlu0 %v844, 256
  %v847 = vpop.permute.xlu0 %846
  %s849 = sor.u32 256, 8
  %850 = vbcast.lane.b32.xlu0 %v844, %s849
  %v851 = vpop.permute.xlu0 %850
  %s853 = sor.u32 256, 16
  %854 = vbcast.lane.b32.xlu0 %v844, %s853
  %v855 = vpop.permute.xlu0 %854
  %v856 = vlaneseq
  %v857 = vshrl.u32 %v856, 7
  %v858 = vsub.s32 3, %v857
  %v859 = vrot.slane %v143, %v858
  %861 = vbcast.lane.b32.xlu0 %v859, 256
  %v862 = vpop.permute.xlu0 %861
  %s864 = sor.u32 256, 8
  %865 = vbcast.lane.b32.xlu0 %v859, %s864
  %v866 = vpop.permute.xlu0 %865
  %s868 = sor.u32 256, 16
  %869 = vbcast.lane.b32.xlu0 %v859, %s868
  %v870 = vpop.permute.xlu0 %869
  %v871 = vlaneseq
  %v872 = vshrl.u32 %v871, 7
  %v873 = vsub.s32 4, %v872
  %v874 = vrot.slane %v143, %v873
  %876 = vbcast.lane.b32.xlu0 %v874, 256
  %v877 = vpop.permute.xlu0 %876
  %s879 = sor.u32 256, 8
  %880 = vbcast.lane.b32.xlu0 %v874, %s879
  %v881 = vpop.permute.xlu0 %880
  %s883 = sor.u32 256, 16
  %884 = vbcast.lane.b32.xlu0 %v874, %s883
  %v885 = vpop.permute.xlu0 %884
  %v886 = vlaneseq
  %v887 = vshrl.u32 %v886, 7
  %v888 = vsub.s32 5, %v887
  %v889 = vrot.slane %v143, %v888
  %891 = vbcast.lane.b32.xlu0 %v889, 256
  %v892 = vpop.permute.xlu0 %891
  %s894 = sor.u32 256, 8
  %895 = vbcast.lane.b32.xlu0 %v889, %s894
  %v896 = vpop.permute.xlu0 %895
  %s898 = sor.u32 256, 16
  %899 = vbcast.lane.b32.xlu0 %v889, %s898
  %v900 = vpop.permute.xlu0 %899
  %v901 = vlaneseq
  %v902 = vshrl.u32 %v901, 7
  %v903 = vsub.s32 6, %v902
  %v904 = vrot.slane %v143, %v903
  %906 = vbcast.lane.b32.xlu0 %v904, 256
  %v907 = vpop.permute.xlu0 %906
  %s909 = sor.u32 256, 8
  %910 = vbcast.lane.b32.xlu0 %v904, %s909
  %v911 = vpop.permute.xlu0 %910
  %s913 = sor.u32 256, 16
  %914 = vbcast.lane.b32.xlu0 %v904, %s913
  %v915 = vpop.permute.xlu0 %914
  %v916 = vlaneseq
  %v917 = vshrl.u32 %v916, 7
  %v918 = vsub.s32 7, %v917
  %v919 = vrot.slane %v143, %v918
  %921 = vbcast.lane.b32.xlu0 %v919, 256
  %v922 = vpop.permute.xlu0 %921
  %s924 = sor.u32 256, 8
  %925 = vbcast.lane.b32.xlu0 %v919, %s924
  %v926 = vpop.permute.xlu0 %925
  %s928 = sor.u32 256, 16
  %929 = vbcast.lane.b32.xlu0 %v919, %s928
  %v930 = vpop.permute.xlu0 %929
  %v931 = vlaneseq
  %v932 = vshrl.u32 %v931, 7
  %v933 = vsub.s32 0, %v932
  %v934 = vrot.slane %v144, %v933
  %936 = vbcast.lane.b32.xlu0 %v934, 256
  %v937 = vpop.permute.xlu0 %936
  %s939 = sor.u32 256, 8
  %940 = vbcast.lane.b32.xlu0 %v934, %s939
  %v941 = vpop.permute.xlu0 %940
  %s943 = sor.u32 256, 16
  %944 = vbcast.lane.b32.xlu0 %v934, %s943
  %v945 = vpop.permute.xlu0 %944
  %v946 = vlaneseq
  %v947 = vshrl.u32 %v946, 7
  %v948 = vsub.s32 1, %v947
  %v949 = vrot.slane %v144, %v948
  %951 = vbcast.lane.b32.xlu0 %v949, 256
  %v952 = vpop.permute.xlu0 %951
  %s954 = sor.u32 256, 8
  %955 = vbcast.lane.b32.xlu0 %v949, %s954
  %v956 = vpop.permute.xlu0 %955
  %s958 = sor.u32 256, 16
  %959 = vbcast.lane.b32.xlu0 %v949, %s958
  %v960 = vpop.permute.xlu0 %959
  %v961 = vlaneseq
  %v962 = vshrl.u32 %v961, 7
  %v963 = vsub.s32 2, %v962
  %v964 = vrot.slane %v144, %v963
  %966 = vbcast.lane.b32.xlu0 %v964, 256
  %v967 = vpop.permute.xlu0 %966
  %s969 = sor.u32 256, 8
  %970 = vbcast.lane.b32.xlu0 %v964, %s969
  %v971 = vpop.permute.xlu0 %970
  %s973 = sor.u32 256, 16
  %974 = vbcast.lane.b32.xlu0 %v964, %s973
  %v975 = vpop.permute.xlu0 %974
  %v976 = vlaneseq
  %v977 = vshrl.u32 %v976, 7
  %v978 = vsub.s32 3, %v977
  %v979 = vrot.slane %v144, %v978
  %981 = vbcast.lane.b32.xlu0 %v979, 256
  %v982 = vpop.permute.xlu0 %981
  %s984 = sor.u32 256, 8
  %985 = vbcast.lane.b32.xlu0 %v979, %s984
  %v986 = vpop.permute.xlu0 %985
  %s988 = sor.u32 256, 16
  %989 = vbcast.lane.b32.xlu0 %v979, %s988
  %v990 = vpop.permute.xlu0 %989
  %v991 = vlaneseq
  %v992 = vshrl.u32 %v991, 7
  %v993 = vsub.s32 4, %v992
  %v994 = vrot.slane %v144, %v993
  %996 = vbcast.lane.b32.xlu0 %v994, 256
  %v997 = vpop.permute.xlu0 %996
  %s999 = sor.u32 256, 8
  %1000 = vbcast.lane.b32.xlu0 %v994, %s999
  %v1001 = vpop.permute.xlu0 %1000
  %s1003 = sor.u32 256, 16
  %1004 = vbcast.lane.b32.xlu0 %v994, %s1003
  %v1005 = vpop.permute.xlu0 %1004
  %v1006 = vlaneseq
  %v1007 = vshrl.u32 %v1006, 7
  %v1008 = vsub.s32 5, %v1007
  %v1009 = vrot.slane %v144, %v1008
  %1011 = vbcast.lane.b32.xlu0 %v1009, 256
  %v1012 = vpop.permute.xlu0 %1011
  %s1014 = sor.u32 256, 8
  %1015 = vbcast.lane.b32.xlu0 %v1009, %s1014
  %v1016 = vpop.permute.xlu0 %1015
  %s1018 = sor.u32 256, 16
  %1019 = vbcast.lane.b32.xlu0 %v1009, %s1018
  %v1020 = vpop.permute.xlu0 %1019
  %v1021 = vlaneseq
  %v1022 = vshrl.u32 %v1021, 7
  %v1023 = vsub.s32 6, %v1022
  %v1024 = vrot.slane %v144, %v1023
  %1026 = vbcast.lane.b32.xlu0 %v1024, 256
  %v1027 = vpop.permute.xlu0 %1026
  %s1029 = sor.u32 256, 8
  %1030 = vbcast.lane.b32.xlu0 %v1024, %s1029
  %v1031 = vpop.permute.xlu0 %1030
  %s1033 = sor.u32 256, 16
  %1034 = vbcast.lane.b32.xlu0 %v1024, %s1033
  %v1035 = vpop.permute.xlu0 %1034
  %v1036 = vlaneseq
  %v1037 = vshrl.u32 %v1036, 7
  %v1038 = vsub.s32 7, %v1037
  %v1039 = vrot.slane %v144, %v1038
  %1041 = vbcast.lane.b32.xlu0 %v1039, 256
  %v1042 = vpop.permute.xlu0 %1041
  %s1044 = sor.u32 256, 8
  %1045 = vbcast.lane.b32.xlu0 %v1039, %s1044
  %v1046 = vpop.permute.xlu0 %1045
  %s1048 = sor.u32 256, 16
  %1049 = vbcast.lane.b32.xlu0 %v1039, %s1048
  %v1050 = vpop.permute.xlu0 %1049
  %v1051 = vadd.f32 %v612, %v817
  %v1052 = vadd.f32 %v613, %v821
  %v1053 = vadd.f32 %v614, %v825
  %v1054 = vadd.f32 %v612, %v832
  %v1055 = vadd.f32 %v613, %v836
  %v1056 = vadd.f32 %v614, %v840
  %v1057 = vadd.f32 %v612, %v847
  %v1058 = vadd.f32 %v613, %v851
  %v1059 = vadd.f32 %v614, %v855
  %v1060 = vadd.f32 %v612, %v862
  %v1061 = vadd.f32 %v613, %v866
  %v1062 = vadd.f32 %v614, %v870
  %v1063 = vadd.f32 %v612, %v877
  %v1064 = vadd.f32 %v613, %v881
  %v1065 = vadd.f32 %v614, %v885
  %v1066 = vadd.f32 %v612, %v892
  %v1067 = vadd.f32 %v613, %v896
  %v1068 = vadd.f32 %v614, %v900
  %v1069 = vadd.f32 %v612, %v907
  %v1070 = vadd.f32 %v613, %v911
  %v1071 = vadd.f32 %v614, %v915
  %v1072 = vadd.f32 %v612, %v922
  %v1073 = vadd.f32 %v613, %v926
  %v1074 = vadd.f32 %v614, %v930
  %v1075 = vadd.f32 %v612, %v937
  %v1076 = vadd.f32 %v613, %v941
  %v1077 = vadd.f32 %v614, %v945
  %v1078 = vadd.f32 %v612, %v952
  %v1079 = vadd.f32 %v613, %v956
  %v1080 = vadd.f32 %v614, %v960
  %v1081 = vadd.f32 %v612, %v967
  %v1082 = vadd.f32 %v613, %v971
  %v1083 = vadd.f32 %v614, %v975
  %v1084 = vadd.f32 %v612, %v982
  %v1085 = vadd.f32 %v613, %v986
  %v1086 = vadd.f32 %v614, %v990
  %v1087 = vadd.f32 %v612, %v997
  %v1088 = vadd.f32 %v613, %v1001
  %v1089 = vadd.f32 %v614, %v1005
  %v1090 = vadd.f32 %v612, %v1012
  %v1091 = vadd.f32 %v613, %v1016
  %v1092 = vadd.f32 %v614, %v1020
  %v1093 = vadd.f32 %v612, %v1027
  %v1094 = vadd.f32 %v613, %v1031
  %v1095 = vadd.f32 %v614, %v1035
  %v1096 = vadd.f32 %v612, %v1042
  %v1097 = vadd.f32 %v613, %v1046
  %v1098 = vadd.f32 %v614, %v1050
  %v1099 = vsel %vm332, %v1051, -inf
  %v1100 = vsel %vm332, %v1052, -inf
  %v1101 = vmax.f32 %v1099, %v1100
  %v1102 = vsel %vm332, %v1053, -inf
  %v1103 = vmax.f32 %v1101, %v1102
  %v1104 = vrot.slane %v1103, 4
  %v1105 = vmax.f32 %v1103, %v1104
  %v1106 = vrot.slane %v1105, 2
  %v1107 = vmax.f32 %v1105, %v1106
  %v1108 = vrot.slane %v1107, 1
  %v1109 = vmax.f32 %v1107, %v1108
  %v1110 = vsel %vm332, %v1054, -inf
  %v1111 = vsel %vm332, %v1055, -inf
  %v1112 = vmax.f32 %v1110, %v1111
  %v1113 = vsel %vm332, %v1056, -inf
  %v1114 = vmax.f32 %v1112, %v1113
  %v1115 = vrot.slane %v1114, 4
  %v1116 = vmax.f32 %v1114, %v1115
  %v1117 = vrot.slane %v1116, 2
  %v1118 = vmax.f32 %v1116, %v1117
  %v1119 = vrot.slane %v1118, 1
  %v1120 = vmax.f32 %v1118, %v1119
  %v1121 = vsel %vm332, %v1057, -inf
  %v1122 = vsel %vm332, %v1058, -inf
  %v1123 = vmax.f32 %v1121, %v1122
  %v1124 = vsel %vm332, %v1059, -inf
  %v1125 = vmax.f32 %v1123, %v1124
  %v1126 = vrot.slane %v1125, 4
  %v1127 = vmax.f32 %v1125, %v1126
  %v1128 = vrot.slane %v1127, 2
  %v1129 = vmax.f32 %v1127, %v1128
  %v1130 = vrot.slane %v1129, 1
  %v1131 = vmax.f32 %v1129, %v1130
  %v1132 = vsel %vm332, %v1060, -inf
  %v1133 = vsel %vm332, %v1061, -inf
  %v1134 = vmax.f32 %v1132, %v1133
  %v1135 = vsel %vm332, %v1062, -inf
  %v1136 = vmax.f32 %v1134, %v1135
  %v1137 = vrot.slane %v1136, 4
  %v1138 = vmax.f32 %v1136, %v1137
  %v1139 = vrot.slane %v1138, 2
  %v1140 = vmax.f32 %v1138, %v1139
  %v1141 = vrot.slane %v1140, 1
  %v1142 = vmax.f32 %v1140, %v1141
  %v1143 = vsel %vm332, %v1063, -inf
  %v1144 = vsel %vm332, %v1064, -inf
  %v1145 = vmax.f32 %v1143, %v1144
  %v1146 = vsel %vm332, %v1065, -inf
  %v1147 = vmax.f32 %v1145, %v1146
  %v1148 = vrot.slane %v1147, 4
  %v1149 = vmax.f32 %v1147, %v1148
  %v1150 = vrot.slane %v1149, 2
  %v1151 = vmax.f32 %v1149, %v1150
  %v1152 = vrot.slane %v1151, 1
  %v1153 = vmax.f32 %v1151, %v1152
  %v1154 = vsel %vm332, %v1066, -inf
  %v1155 = vsel %vm332, %v1067, -inf
  %v1156 = vmax.f32 %v1154, %v1155
  %v1157 = vsel %vm332, %v1068, -inf
  %v1158 = vmax.f32 %v1156, %v1157
  %v1159 = vrot.slane %v1158, 4
  %v1160 = vmax.f32 %v1158, %v1159
  %v1161 = vrot.slane %v1160, 2
  %v1162 = vmax.f32 %v1160, %v1161
  %v1163 = vrot.slane %v1162, 1
  %v1164 = vmax.f32 %v1162, %v1163
  %v1165 = vsel %vm332, %v1069, -inf
  %v1166 = vsel %vm332, %v1070, -inf
  %v1167 = vmax.f32 %v1165, %v1166
  %v1168 = vsel %vm332, %v1071, -inf
  %v1169 = vmax.f32 %v1167, %v1168
  %v1170 = vrot.slane %v1169, 4
  %v1171 = vmax.f32 %v1169, %v1170
  %v1172 = vrot.slane %v1171, 2
  %v1173 = vmax.f32 %v1171, %v1172
  %v1174 = vrot.slane %v1173, 1
  %v1175 = vmax.f32 %v1173, %v1174
  %v1176 = vsel %vm332, %v1072, -inf
  %v1177 = vsel %vm332, %v1073, -inf
  %v1178 = vmax.f32 %v1176, %v1177
  %v1179 = vsel %vm332, %v1074, -inf
  %v1180 = vmax.f32 %v1178, %v1179
  %v1181 = vrot.slane %v1180, 4
  %v1182 = vmax.f32 %v1180, %v1181
  %v1183 = vrot.slane %v1182, 2
  %v1184 = vmax.f32 %v1182, %v1183
  %v1185 = vrot.slane %v1184, 1
  %v1186 = vmax.f32 %v1184, %v1185
  %v1187 = vsel %vm332, %v1075, -inf
  %v1188 = vsel %vm332, %v1076, -inf
  %v1189 = vmax.f32 %v1187, %v1188
  %v1190 = vsel %vm332, %v1077, -inf
  %v1191 = vmax.f32 %v1189, %v1190
  %v1192 = vrot.slane %v1191, 4
  %v1193 = vmax.f32 %v1191, %v1192
  %v1194 = vrot.slane %v1193, 2
  %v1195 = vmax.f32 %v1193, %v1194
  %v1196 = vrot.slane %v1195, 1
  %v1197 = vmax.f32 %v1195, %v1196
  %v1198 = vsel %vm332, %v1078, -inf
  %v1199 = vsel %vm332, %v1079, -inf
  %v1200 = vmax.f32 %v1198, %v1199
  %v1201 = vsel %vm332, %v1080, -inf
  %v1202 = vmax.f32 %v1200, %v1201
  %v1203 = vrot.slane %v1202, 4
  %v1204 = vmax.f32 %v1202, %v1203
  %v1205 = vrot.slane %v1204, 2
  %v1206 = vmax.f32 %v1204, %v1205
  %v1207 = vrot.slane %v1206, 1
  %v1208 = vmax.f32 %v1206, %v1207
  %v1209 = vsel %vm332, %v1081, -inf
  %v1210 = vsel %vm332, %v1082, -inf
  %v1211 = vmax.f32 %v1209, %v1210
  %v1212 = vsel %vm332, %v1083, -inf
  %v1213 = vmax.f32 %v1211, %v1212
  %v1214 = vrot.slane %v1213, 4
  %v1215 = vmax.f32 %v1213, %v1214
  %v1216 = vrot.slane %v1215, 2
  %v1217 = vmax.f32 %v1215, %v1216
  %v1218 = vrot.slane %v1217, 1
  %v1219 = vmax.f32 %v1217, %v1218
  %v1220 = vsel %vm332, %v1084, -inf
  %v1221 = vsel %vm332, %v1085, -inf
  %v1222 = vmax.f32 %v1220, %v1221
  %v1223 = vsel %vm332, %v1086, -inf
  %v1224 = vmax.f32 %v1222, %v1223
  %v1225 = vrot.slane %v1224, 4
  %v1226 = vmax.f32 %v1224, %v1225
  %v1227 = vrot.slane %v1226, 2
  %v1228 = vmax.f32 %v1226, %v1227
  %v1229 = vrot.slane %v1228, 1
  %v1230 = vmax.f32 %v1228, %v1229
  %v1231 = vsel %vm332, %v1087, -inf
  %v1232 = vsel %vm332, %v1088, -inf
  %v1233 = vmax.f32 %v1231, %v1232
  %v1234 = vsel %vm332, %v1089, -inf
  %v1235 = vmax.f32 %v1233, %v1234
  %v1236 = vrot.slane %v1235, 4
  %v1237 = vmax.f32 %v1235, %v1236
  %v1238 = vrot.slane %v1237, 2
  %v1239 = vmax.f32 %v1237, %v1238
  %v1240 = vrot.slane %v1239, 1
  %v1241 = vmax.f32 %v1239, %v1240
  %v1242 = vsel %vm332, %v1090, -inf
  %v1243 = vsel %vm332, %v1091, -inf
  %v1244 = vmax.f32 %v1242, %v1243
  %v1245 = vsel %vm332, %v1092, -inf
  %v1246 = vmax.f32 %v1244, %v1245
  %v1247 = vrot.slane %v1246, 4
  %v1248 = vmax.f32 %v1246, %v1247
  %v1249 = vrot.slane %v1248, 2
  %v1250 = vmax.f32 %v1248, %v1249
  %v1251 = vrot.slane %v1250, 1
  %v1252 = vmax.f32 %v1250, %v1251
  %v1253 = vsel %vm332, %v1093, -inf
  %v1254 = vsel %vm332, %v1094, -inf
  %v1255 = vmax.f32 %v1253, %v1254
  %v1256 = vsel %vm332, %v1095, -inf
  %v1257 = vmax.f32 %v1255, %v1256
  %v1258 = vrot.slane %v1257, 4
  %v1259 = vmax.f32 %v1257, %v1258
  %v1260 = vrot.slane %v1259, 2
  %v1261 = vmax.f32 %v1259, %v1260
  %v1262 = vrot.slane %v1261, 1
  %v1263 = vmax.f32 %v1261, %v1262
  %v1264 = vsel %vm332, %v1096, -inf
  %v1265 = vsel %vm332, %v1097, -inf
  %v1266 = vmax.f32 %v1264, %v1265
  %v1267 = vsel %vm332, %v1098, -inf
  %v1268 = vmax.f32 %v1266, %v1267
  %v1269 = vrot.slane %v1268, 4
  %v1270 = vmax.f32 %v1268, %v1269
  %v1271 = vrot.slane %v1270, 2
  %v1272 = vmax.f32 %v1270, %v1271
  %v1273 = vrot.slane %v1272, 1
  %v1274 = vmax.f32 %v1272, %v1273
  %1275 = vset.pattern.permute.xlu0 3
  %1276 = vperm.xlu0 %1275, %v131
  %v1277 = vpop.permute.xlu0 %1276
  %1278 = vset.pattern.permute.xlu0 3
  %1279 = vperm.xlu0 %1278, %v132
  %v1280 = vpop.permute.xlu0 %1279
  %v1281 = vrot.slane %v1277, 1
  %v1282 = vrot.slane %v1277, 2
  %v1283 = vrot.slane %v1277, 3
  %v1284 = vrot.slane %v1277, 4
  %v1285 = vrot.slane %v1277, 5
  %v1286 = vrot.slane %v1277, 6
  %v1287 = vrot.slane %v1277, 7
  %v1288 = vrot.slane %v1280, 1
  %v1289 = vrot.slane %v1280, 2
  %v1290 = vrot.slane %v1280, 3
  %v1291 = vrot.slane %v1280, 4
  %v1292 = vrot.slane %v1280, 5
  %v1293 = vrot.slane %v1280, 6
  %v1294 = vrot.slane %v1280, 7
  %v1311 = vmul.f32 %v1109, %v1277
  %v1312 = vmul.f32 %v1120, %v1281
  %v1313 = vmul.f32 %v1131, %v1282
  %v1314 = vmul.f32 %v1142, %v1283
  %v1315 = vmul.f32 %v1153, %v1284
  %v1316 = vmul.f32 %v1164, %v1285
  %v1317 = vmul.f32 %v1175, %v1286
  %v1318 = vmul.f32 %v1186, %v1287
  %v1319 = vmul.f32 %v1197, %v1280
  %v1320 = vmul.f32 %v1208, %v1288
  %v1321 = vmul.f32 %v1219, %v1289
  %v1322 = vmul.f32 %v1230, %v1290
  %v1323 = vmul.f32 %v1241, %v1291
  %v1324 = vmul.f32 %v1252, %v1292
  %v1325 = vmul.f32 %v1263, %v1293
  %v1326 = vmul.f32 %v1274, %v1294
  %v1327 = vsub.f32 %v612, %v817
  %v1328 = vsub.f32 %v613, %v821
  %v1329 = vsub.f32 %v614, %v825
  %v1330 = vsub.f32 %v612, %v832
  %v1331 = vsub.f32 %v613, %v836
  %v1332 = vsub.f32 %v614, %v840
  %v1333 = vsub.f32 %v612, %v847
  %v1334 = vsub.f32 %v613, %v851
  %v1335 = vsub.f32 %v614, %v855
  %v1336 = vsub.f32 %v612, %v862
  %v1337 = vsub.f32 %v613, %v866
  %v1338 = vsub.f32 %v614, %v870
  %v1339 = vsub.f32 %v612, %v877
  %v1340 = vsub.f32 %v613, %v881
  %v1341 = vsub.f32 %v614, %v885
  %v1342 = vsub.f32 %v612, %v892
  %v1343 = vsub.f32 %v613, %v896
  %v1344 = vsub.f32 %v614, %v900
  %v1345 = vsub.f32 %v612, %v907
  %v1346 = vsub.f32 %v613, %v911
  %v1347 = vsub.f32 %v614, %v915
  %v1348 = vsub.f32 %v612, %v922
  %v1349 = vsub.f32 %v613, %v926
  %v1350 = vsub.f32 %v614, %v930
  %v1351 = vsub.f32 %v612, %v937
  %v1352 = vsub.f32 %v613, %v941
  %v1353 = vsub.f32 %v614, %v945
  %v1354 = vsub.f32 %v612, %v952
  %v1355 = vsub.f32 %v613, %v956
  %v1356 = vsub.f32 %v614, %v960
  %v1357 = vsub.f32 %v612, %v967
  %v1358 = vsub.f32 %v613, %v971
  %v1359 = vsub.f32 %v614, %v975
  %v1360 = vsub.f32 %v612, %v982
  %v1361 = vsub.f32 %v613, %v986
  %v1362 = vsub.f32 %v614, %v990
  %v1363 = vsub.f32 %v612, %v997
  %v1364 = vsub.f32 %v613, %v1001
  %v1365 = vsub.f32 %v614, %v1005
  %v1366 = vsub.f32 %v612, %v1012
  %v1367 = vsub.f32 %v613, %v1016
  %v1368 = vsub.f32 %v614, %v1020
  %v1369 = vsub.f32 %v612, %v1027
  %v1370 = vsub.f32 %v613, %v1031
  %v1371 = vsub.f32 %v614, %v1035
  %v1372 = vsub.f32 %v612, %v1042
  %v1373 = vsub.f32 %v613, %v1046
  %v1374 = vsub.f32 %v614, %v1050
  %v1375 = vsel %vm332, %v1327, inf
  %v1376 = vsel %vm332, %v1328, inf
  %v1377 = vmin.f32 %v1375, %v1376
  %v1378 = vsel %vm332, %v1329, inf
  %v1379 = vmin.f32 %v1377, %v1378
  %v1380 = vrot.slane %v1379, 4
  %v1381 = vmin.f32 %v1379, %v1380
  %v1382 = vrot.slane %v1381, 2
  %v1383 = vmin.f32 %v1381, %v1382
  %v1384 = vrot.slane %v1383, 1
  %v1385 = vmin.f32 %v1383, %v1384
  %v1386 = vsel %vm332, %v1330, inf
  %v1387 = vsel %vm332, %v1331, inf
  %v1388 = vmin.f32 %v1386, %v1387
  %v1389 = vsel %vm332, %v1332, inf
  %v1390 = vmin.f32 %v1388, %v1389
  %v1391 = vrot.slane %v1390, 4
  %v1392 = vmin.f32 %v1390, %v1391
  %v1393 = vrot.slane %v1392, 2
  %v1394 = vmin.f32 %v1392, %v1393
  %v1395 = vrot.slane %v1394, 1
  %v1396 = vmin.f32 %v1394, %v1395
  %v1397 = vsel %vm332, %v1333, inf
  %v1398 = vsel %vm332, %v1334, inf
  %v1399 = vmin.f32 %v1397, %v1398
  %v1400 = vsel %vm332, %v1335, inf
  %v1401 = vmin.f32 %v1399, %v1400
  %v1402 = vrot.slane %v1401, 4
  %v1403 = vmin.f32 %v1401, %v1402
  %v1404 = vrot.slane %v1403, 2
  %v1405 = vmin.f32 %v1403, %v1404
  %v1406 = vrot.slane %v1405, 1
  %v1407 = vmin.f32 %v1405, %v1406
  %v1408 = vsel %vm332, %v1336, inf
  %v1409 = vsel %vm332, %v1337, inf
  %v1410 = vmin.f32 %v1408, %v1409
  %v1411 = vsel %vm332, %v1338, inf
  %v1412 = vmin.f32 %v1410, %v1411
  %v1413 = vrot.slane %v1412, 4
  %v1414 = vmin.f32 %v1412, %v1413
  %v1415 = vrot.slane %v1414, 2
  %v1416 = vmin.f32 %v1414, %v1415
  %v1417 = vrot.slane %v1416, 1
  %v1418 = vmin.f32 %v1416, %v1417
  %v1419 = vsel %vm332, %v1339, inf
  %v1420 = vsel %vm332, %v1340, inf
  %v1421 = vmin.f32 %v1419, %v1420
  %v1422 = vsel %vm332, %v1341, inf
  %v1423 = vmin.f32 %v1421, %v1422
  %v1424 = vrot.slane %v1423, 4
  %v1425 = vmin.f32 %v1423, %v1424
  %v1426 = vrot.slane %v1425, 2
  %v1427 = vmin.f32 %v1425, %v1426
  %v1428 = vrot.slane %v1427, 1
  %v1429 = vmin.f32 %v1427, %v1428
  %v1430 = vsel %vm332, %v1342, inf
  %v1431 = vsel %vm332, %v1343, inf
  %v1432 = vmin.f32 %v1430, %v1431
  %v1433 = vsel %vm332, %v1344, inf
  %v1434 = vmin.f32 %v1432, %v1433
  %v1435 = vrot.slane %v1434, 4
  %v1436 = vmin.f32 %v1434, %v1435
  %v1437 = vrot.slane %v1436, 2
  %v1438 = vmin.f32 %v1436, %v1437
  %v1439 = vrot.slane %v1438, 1
  %v1440 = vmin.f32 %v1438, %v1439
  %v1441 = vsel %vm332, %v1345, inf
  %v1442 = vsel %vm332, %v1346, inf
  %v1443 = vmin.f32 %v1441, %v1442
  %v1444 = vsel %vm332, %v1347, inf
  %v1445 = vmin.f32 %v1443, %v1444
  %v1446 = vrot.slane %v1445, 4
  %v1447 = vmin.f32 %v1445, %v1446
  %v1448 = vrot.slane %v1447, 2
  %v1449 = vmin.f32 %v1447, %v1448
  %v1450 = vrot.slane %v1449, 1
  %v1451 = vmin.f32 %v1449, %v1450
  %v1452 = vsel %vm332, %v1348, inf
  %v1453 = vsel %vm332, %v1349, inf
  %v1454 = vmin.f32 %v1452, %v1453
  %v1455 = vsel %vm332, %v1350, inf
  %v1456 = vmin.f32 %v1454, %v1455
  %v1457 = vrot.slane %v1456, 4
  %v1458 = vmin.f32 %v1456, %v1457
  %v1459 = vrot.slane %v1458, 2
  %v1460 = vmin.f32 %v1458, %v1459
  %v1461 = vrot.slane %v1460, 1
  %v1462 = vmin.f32 %v1460, %v1461
  %v1463 = vsel %vm332, %v1351, inf
  %v1464 = vsel %vm332, %v1352, inf
  %v1465 = vmin.f32 %v1463, %v1464
  %v1466 = vsel %vm332, %v1353, inf
  %v1467 = vmin.f32 %v1465, %v1466
  %v1468 = vrot.slane %v1467, 4
  %v1469 = vmin.f32 %v1467, %v1468
  %v1470 = vrot.slane %v1469, 2
  %v1471 = vmin.f32 %v1469, %v1470
  %v1472 = vrot.slane %v1471, 1
  %v1473 = vmin.f32 %v1471, %v1472
  %v1474 = vsel %vm332, %v1354, inf
  %v1475 = vsel %vm332, %v1355, inf
  %v1476 = vmin.f32 %v1474, %v1475
  %v1477 = vsel %vm332, %v1356, inf
  %v1478 = vmin.f32 %v1476, %v1477
  %v1479 = vrot.slane %v1478, 4
  %v1480 = vmin.f32 %v1478, %v1479
  %v1481 = vrot.slane %v1480, 2
  %v1482 = vmin.f32 %v1480, %v1481
  %v1483 = vrot.slane %v1482, 1
  %v1484 = vmin.f32 %v1482, %v1483
  %v1485 = vsel %vm332, %v1357, inf
  %v1486 = vsel %vm332, %v1358, inf
  %v1487 = vmin.f32 %v1485, %v1486
  %v1488 = vsel %vm332, %v1359, inf
  %v1489 = vmin.f32 %v1487, %v1488
  %v1490 = vrot.slane %v1489, 4
  %v1491 = vmin.f32 %v1489, %v1490
  %v1492 = vrot.slane %v1491, 2
  %v1493 = vmin.f32 %v1491, %v1492
  %v1494 = vrot.slane %v1493, 1
  %v1495 = vmin.f32 %v1493, %v1494
  %v1496 = vsel %vm332, %v1360, inf
  %v1497 = vsel %vm332, %v1361, inf
  %v1498 = vmin.f32 %v1496, %v1497
  %v1499 = vsel %vm332, %v1362, inf
  %v1500 = vmin.f32 %v1498, %v1499
  %v1501 = vrot.slane %v1500, 4
  %v1502 = vmin.f32 %v1500, %v1501
  %v1503 = vrot.slane %v1502, 2
  %v1504 = vmin.f32 %v1502, %v1503
  %v1505 = vrot.slane %v1504, 1
  %v1506 = vmin.f32 %v1504, %v1505
  %v1507 = vsel %vm332, %v1363, inf
  %v1508 = vsel %vm332, %v1364, inf
  %v1509 = vmin.f32 %v1507, %v1508
  %v1510 = vsel %vm332, %v1365, inf
  %v1511 = vmin.f32 %v1509, %v1510
  %v1512 = vrot.slane %v1511, 4
  %v1513 = vmin.f32 %v1511, %v1512
  %v1514 = vrot.slane %v1513, 2
  %v1515 = vmin.f32 %v1513, %v1514
  %v1516 = vrot.slane %v1515, 1
  %v1517 = vmin.f32 %v1515, %v1516
  %v1518 = vsel %vm332, %v1366, inf
  %v1519 = vsel %vm332, %v1367, inf
  %v1520 = vmin.f32 %v1518, %v1519
  %v1521 = vsel %vm332, %v1368, inf
  %v1522 = vmin.f32 %v1520, %v1521
  %v1523 = vrot.slane %v1522, 4
  %v1524 = vmin.f32 %v1522, %v1523
  %v1525 = vrot.slane %v1524, 2
  %v1526 = vmin.f32 %v1524, %v1525
  %v1527 = vrot.slane %v1526, 1
  %v1528 = vmin.f32 %v1526, %v1527
  %v1529 = vsel %vm332, %v1369, inf
  %v1530 = vsel %vm332, %v1370, inf
  %v1531 = vmin.f32 %v1529, %v1530
  %v1532 = vsel %vm332, %v1371, inf
  %v1533 = vmin.f32 %v1531, %v1532
  %v1534 = vrot.slane %v1533, 4
  %v1535 = vmin.f32 %v1533, %v1534
  %v1536 = vrot.slane %v1535, 2
  %v1537 = vmin.f32 %v1535, %v1536
  %v1538 = vrot.slane %v1537, 1
  %v1539 = vmin.f32 %v1537, %v1538
  %v1540 = vsel %vm332, %v1372, inf
  %v1541 = vsel %vm332, %v1373, inf
  %v1542 = vmin.f32 %v1540, %v1541
  %v1543 = vsel %vm332, %v1374, inf
  %v1544 = vmin.f32 %v1542, %v1543
  %v1545 = vrot.slane %v1544, 4
  %v1546 = vmin.f32 %v1544, %v1545
  %v1547 = vrot.slane %v1546, 2
  %v1548 = vmin.f32 %v1546, %v1547
  %v1549 = vrot.slane %v1548, 1
  %v1550 = vmin.f32 %v1548, %v1549
  %v1551 = vmul.f32 %v1385, %v1277
  %v1552 = vmul.f32 %v1396, %v1281
  %v1553 = vmul.f32 %v1407, %v1282
  %v1554 = vmul.f32 %v1418, %v1283
  %v1555 = vmul.f32 %v1429, %v1284
  %v1556 = vmul.f32 %v1440, %v1285
  %v1557 = vmul.f32 %v1451, %v1286
  %v1558 = vmul.f32 %v1462, %v1287
  %v1559 = vmul.f32 %v1473, %v1280
  %v1560 = vmul.f32 %v1484, %v1288
  %v1561 = vmul.f32 %v1495, %v1289
  %v1562 = vmul.f32 %v1506, %v1290
  %v1563 = vmul.f32 %v1517, %v1291
  %v1564 = vmul.f32 %v1528, %v1292
  %v1565 = vmul.f32 %v1539, %v1293
  %v1566 = vmul.f32 %v1550, %v1294
  %v1567 = vld [vmem:[%s8 + $0x78] sm:$0xff]
  %v1568 = vld [vmem:[%s8 + $0x80] sm:$0xff]
  %v1569 = vld [vmem:[%s8 + $0x88] sm:$0xff]
  %v1570 = vld [vmem:[%s8 + $0x90] sm:$0xff]
  %v1571 = vld [vmem:[%s8 + $0x218] sm:$0x1]
  %v1572 = vlaneseq
  %v1573 = vshrl.u32 %v1572, 7
  %v1574 = vsub.s32 0, %v1573
  %v1575 = vrot.slane %v1571, %v1574
  %v1577 = vsel %vm332, %v126, 0
  %v1580 = vsel %vm332, %v127, 0
  %1582 = vmatprep.subr.mxu0 0.0
  %1583 = vmatpush1.msra.mxu0 %v1567
  %1584 = vmatprep.subr.mxu0 0.0
  %1585 = vmatpush1.msra.mxu0 %v1568
  %1586 = vmatprep.subr.mxu0 0.0
  %1587 = vmatpush1.msra.mxu0 %v1569
  %1588 = vmatprep.subr.mxu0 0.0
  %1589 = vmatpush1.msra.mxu0 %v1570
  %1590 = vmatprep.subr.mxu0 0.0
  %1591 = vmatpush1.msra.mxu0 0.0
  %1592 = vmatprep.subr.mxu0 0.0
  %1593 = vmatpush1.msra.mxu0 0.0
  %1594 = vmatprep.subr.mxu0 0.0
  %1595 = vmatpush1.msra.mxu0 0.0
  %1596 = vmatprep.subr.mxu0 0.0
  %1597 = vmatpush1.msra.mxu0 0.0
  %1598 = vmatprep.subr.mxu0 0.0
  %1599 = vmatpush1.msra.mxu0 0.0
  %1600 = vmatprep.subr.mxu0 0.0
  %1601 = vmatpush1.msra.mxu0 0.0
  %1602 = vmatprep.subr.mxu0 0.0
  %1603 = vmatpush1.msra.mxu0 0.0
  %1604 = vmatprep.subr.mxu0 0.0
  %1605 = vmatpush1.msra.mxu0 0.0
  %1606 = vmatprep.subr.mxu0 0.0
  %1607 = vmatpush1.msra.mxu0 0.0
  %1608 = vmatprep.subr.mxu0 0.0
  %1609 = vmatpush1.msra.mxu0 0.0
  %1610 = vmatprep.subr.mxu0 0.0
  %1611 = vmatpush1.msra.mxu0 0.0
  %1612 = vmatprep.subr.mxu0 0.0
  %1613 = vmatpush1.msra.mxu0 0.0
  %1614 = vmatprep.subr.mxu0 0.0
  %1615 = vmatpush1.msra.mxu0 0.0
  %1616 = vmatprep.subr.mxu0 0.0
  %1617 = vmatpush1.msra.mxu0 0.0
  %1618 = vmatprep.subr.mxu0 0.0
  %1619 = vmatpush1.msra.mxu0 0.0
  %1620 = vmatprep.subr.mxu0 0.0
  %1621 = vmatpush1.msra.mxu0 0.0
  %1622 = vmatprep.subr.mxu0 0.0
  %1623 = vmatpush1.msra.mxu0 0.0
  %1624 = vmatprep.subr.mxu0 0.0
  %1625 = vmatpush1.msra.mxu0 0.0
  %1626 = vmatprep.subr.mxu0 0.0
  %1627 = vmatpush1.msra.mxu0 0.0
  %1628 = vmatprep.subr.mxu0 0.0
  %1629 = vmatpush1.msra.mxu0 0.0
  %1630 = vmatprep.subr.mxu0 0.0
  %1631 = vmatpush1.msra.mxu0 0.0
  %1632 = vmatprep.subr.mxu0 0.0
  %1633 = vmatpush1.msra.mxu0 0.0
  %1634 = vmatprep.subr.mxu0 0.0
  %1635 = vmatpush1.msra.mxu0 0.0
  %1636 = vmatprep.subr.mxu0 0.0
  %1637 = vmatpush1.msra.mxu0 0.0
  %1638 = vmatprep.subr.mxu0 0.0
  %1639 = vmatpush1.msra.mxu0 0.0
  %1640 = vmatprep.subr.mxu0 0.0
  %1641 = vmatpush1.msra.mxu0 0.0
  %1642 = vmatprep.subr.mxu0 0.0
  %1643 = vmatpush1.msra.mxu0 0.0
  %1644 = vmatprep.subr.mxu0 0.0
  %1645 = vmatpush1.msra.mxu0 0.0
  %1646 = vmatprep.mubr.f32.mxu0 0.0
  %1647 = vmatmul.mubr.f32.gmra.mrb[0].mxu0 %v1577
  %v1648 = vpop.f32.mrb[0].mxu0
  %v1649 = vadd.f32 %v1575, %v1648
  %v1650 = vpop.f32.mrb[0].mxu0
  %1651 = vmatprep.mubr.f32.mxu0 0.0
  %1652 = vmatmul.mubr.f32.gmra.mrb[0].mxu0 %v1580
  %v1653 = vpop.f32.mrb[0].mxu0
  %v1654 = vadd.f32 %v1575, %v1653
  %v1655 = vpop.f32.mrb[0].mxu0
  %1656 = vdwg.mxu0
  %v1657 = vld [vmem:[%s8 + $0x98] sm:$0xff]
  %v1658 = vld [vmem:[%s8 + $0xa0] sm:$0xff]
  %v1659 = vld [vmem:[%s8 + $0xa8] sm:$0xff]
  %v1660 = vld [vmem:[%s8 + $0xb0] sm:$0xff]
  %v1662 = vsel %vm332, %v707, 0
  %v1665 = vsel %vm332, %v708, 0
  %1667 = vmatprep.subr.mxu0 0.0
  %1668 = vmatpush1.msra.mxu0 %v1657
  %1669 = vmatprep.subr.mxu0 0.0
  %1670 = vmatpush1.msra.mxu0 %v1658
  %1671 = vmatprep.subr.mxu0 0.0
  %1672 = vmatpush1.msra.mxu0 %v1659
  %1673 = vmatprep.subr.mxu0 0.0
  %1674 = vmatpush1.msra.mxu0 %v1660
  %1675 = vmatprep.subr.mxu0 0.0
  %1676 = vmatpush1.msra.mxu0 0.0
  %1677 = vmatprep.subr.mxu0 0.0
  %1678 = vmatpush1.msra.mxu0 0.0
  %1679 = vmatprep.subr.mxu0 0.0
  %1680 = vmatpush1.msra.mxu0 0.0
  %1681 = vmatprep.subr.mxu0 0.0
  %1682 = vmatpush1.msra.mxu0 0.0
  %1683 = vmatprep.subr.mxu0 0.0
  %1684 = vmatpush1.msra.mxu0 0.0
  %1685 = vmatprep.subr.mxu0 0.0
  %1686 = vmatpush1.msra.mxu0 0.0
  %1687 = vmatprep.subr.mxu0 0.0
  %1688 = vmatpush1.msra.mxu0 0.0
  %1689 = vmatprep.subr.mxu0 0.0
  %1690 = vmatpush1.msra.mxu0 0.0
  %1691 = vmatprep.subr.mxu0 0.0
  %1692 = vmatpush1.msra.mxu0 0.0
  %1693 = vmatprep.subr.mxu0 0.0
  %1694 = vmatpush1.msra.mxu0 0.0
  %1695 = vmatprep.subr.mxu0 0.0
  %1696 = vmatpush1.msra.mxu0 0.0
  %1697 = vmatprep.subr.mxu0 0.0
  %1698 = vmatpush1.msra.mxu0 0.0
  %1699 = vmatprep.subr.mxu0 0.0
  %1700 = vmatpush1.msra.mxu0 0.0
  %1701 = vmatprep.subr.mxu0 0.0
  %1702 = vmatpush1.msra.mxu0 0.0
  %1703 = vmatprep.subr.mxu0 0.0
  %1704 = vmatpush1.msra.mxu0 0.0
  %1705 = vmatprep.subr.mxu0 0.0
  %1706 = vmatpush1.msra.mxu0 0.0
  %1707 = vmatprep.subr.mxu0 0.0
  %1708 = vmatpush1.msra.mxu0 0.0
  %1709 = vmatprep.subr.mxu0 0.0
  %1710 = vmatpush1.msra.mxu0 0.0
  %1711 = vmatprep.subr.mxu0 0.0
  %1712 = vmatpush1.msra.mxu0 0.0
  %1713 = vmatprep.subr.mxu0 0.0
  %1714 = vmatpush1.msra.mxu0 0.0
  %1715 = vmatprep.subr.mxu0 0.0
  %1716 = vmatpush1.msra.mxu0 0.0
  %1717 = vmatprep.subr.mxu0 0.0
  %1718 = vmatpush1.msra.mxu0 0.0
  %1719 = vmatprep.subr.mxu0 0.0
  %1720 = vmatpush1.msra.mxu0 0.0
  %1721 = vmatprep.subr.mxu0 0.0
  %1722 = vmatpush1.msra.mxu0 0.0
  %1723 = vmatprep.subr.mxu0 0.0
  %1724 = vmatpush1.msra.mxu0 0.0
  %1725 = vmatprep.subr.mxu0 0.0
  %1726 = vmatpush1.msra.mxu0 0.0
  %1727 = vmatprep.subr.mxu0 0.0
  %1728 = vmatpush1.msra.mxu0 0.0
  %1729 = vmatprep.subr.mxu0 0.0
  %1730 = vmatpush1.msra.mxu0 0.0
  %1731 = vmatprep.mubr.f32.mxu0 0.0
  %1732 = vmatmul.mubr.f32.gmra.mrb[0].mxu0 %v1662
  %v1733 = vpop.f32.mrb[0].mxu0
  %v1734 = vadd.f32 0.0, %v1733
  %v1735 = vpop.f32.mrb[0].mxu0
  %1736 = vmatprep.mubr.f32.mxu0 0.0
  %1737 = vmatmul.mubr.f32.gmra.mrb[0].mxu0 %v1665
  %v1738 = vpop.f32.mrb[0].mxu0
  %v1739 = vadd.f32 0.0, %v1738
  %v1740 = vpop.f32.mrb[0].mxu0
  %1741 = vdwg.mxu0
  %v1742 = vadd.f32 %v1649, %v1734
  %v1743 = vadd.f32 %v1654, %v1739
  %v1744 = vld [vmem:[%s8 + $0xb8] sm:$0xff]
  %v1745 = vld [vmem:[%s8 + $0xc0] sm:$0xff]
  %v1746 = vld [vmem:[%s8 + $0xc8] sm:$0xff]
  %v1747 = vld [vmem:[%s8 + $0xd0] sm:$0xff]
  %v1764 = vrot.slane %v1312, 7
  %vm1765 = vcmask 1041409
  %v1766 = vsel %vm1765, %v1764, %v1311
  %v1767 = vrot.slane %v1313, 6
  %vm1768 = vcmask 1042434
  %v1769 = vsel %vm1768, %v1767, %v1766
  %v1770 = vrot.slane %v1314, 5
  %vm1771 = vcmask 1043459
  %v1772 = vsel %vm1771, %v1770, %v1769
  %v1773 = vrot.slane %v1315, 4
  %vm1774 = vcmask 1044484
  %v1775 = vsel %vm1774, %v1773, %v1772
  %v1776 = vrot.slane %v1316, 3
  %vm1777 = vcmask 1045509
  %v1778 = vsel %vm1777, %v1776, %v1775
  %v1779 = vrot.slane %v1317, 2
  %vm1780 = vcmask 1046534
  %v1781 = vsel %vm1780, %v1779, %v1778
  %v1782 = vrot.slane %v1318, 1
  %vm1783 = vcmask 1047559
  %v1784 = vsel %vm1783, %v1782, %v1781
  %v1785 = vrot.slane %v1320, 7
  %v1786 = vsel %vm1765, %v1785, %v1319
  %v1787 = vrot.slane %v1321, 6
  %v1788 = vsel %vm1768, %v1787, %v1786
  %v1789 = vrot.slane %v1322, 5
  %v1790 = vsel %vm1771, %v1789, %v1788
  %v1791 = vrot.slane %v1323, 4
  %v1792 = vsel %vm1774, %v1791, %v1790
  %v1793 = vrot.slane %v1324, 3
  %v1794 = vsel %vm1777, %v1793, %v1792
  %v1795 = vrot.slane %v1325, 2
  %v1796 = vsel %vm1780, %v1795, %v1794
  %v1797 = vrot.slane %v1326, 1
  %v1798 = vsel %vm1783, %v1797, %v1796
  %v1799 = vsel %vm332, %v1784, 0
  %v1801 = vsel %vm332, %v1798, 0
  %1803 = vmatprep.subr.mxu0 0.0
  %1804 = vmatpush1.msra.mxu0 %v1744
  %1805 = vmatprep.subr.mxu0 0.0
  %1806 = vmatpush1.msra.mxu0 %v1745
  %1807 = vmatprep.subr.mxu0 0.0
  %1808 = vmatpush1.msra.mxu0 %v1746
  %1809 = vmatprep.subr.mxu0 0.0
  %1810 = vmatpush1.msra.mxu0 %v1747
  %1811 = vmatprep.subr.mxu0 0.0
  %1812 = vmatpush1.msra.mxu0 0.0
  %1813 = vmatprep.subr.mxu0 0.0
  %1814 = vmatpush1.msra.mxu0 0.0
  %1815 = vmatprep.subr.mxu0 0.0
  %1816 = vmatpush1.msra.mxu0 0.0
  %1817 = vmatprep.subr.mxu0 0.0
  %1818 = vmatpush1.msra.mxu0 0.0
  %1819 = vmatprep.subr.mxu0 0.0
  %1820 = vmatpush1.msra.mxu0 0.0
  %1821 = vmatprep.subr.mxu0 0.0
  %1822 = vmatpush1.msra.mxu0 0.0
  %1823 = vmatprep.subr.mxu0 0.0
  %1824 = vmatpush1.msra.mxu0 0.0
  %1825 = vmatprep.subr.mxu0 0.0
  %1826 = vmatpush1.msra.mxu0 0.0
  %1827 = vmatprep.subr.mxu0 0.0
  %1828 = vmatpush1.msra.mxu0 0.0
  %1829 = vmatprep.subr.mxu0 0.0
  %1830 = vmatpush1.msra.mxu0 0.0
  %1831 = vmatprep.subr.mxu0 0.0
  %1832 = vmatpush1.msra.mxu0 0.0
  %1833 = vmatprep.subr.mxu0 0.0
  %1834 = vmatpush1.msra.mxu0 0.0
  %1835 = vmatprep.subr.mxu0 0.0
  %1836 = vmatpush1.msra.mxu0 0.0
  %1837 = vmatprep.subr.mxu0 0.0
  %1838 = vmatpush1.msra.mxu0 0.0
  %1839 = vmatprep.subr.mxu0 0.0
  %1840 = vmatpush1.msra.mxu0 0.0
  %1841 = vmatprep.subr.mxu0 0.0
  %1842 = vmatpush1.msra.mxu0 0.0
  %1843 = vmatprep.subr.mxu0 0.0
  %1844 = vmatpush1.msra.mxu0 0.0
  %1845 = vmatprep.subr.mxu0 0.0
  %1846 = vmatpush1.msra.mxu0 0.0
  %1847 = vmatprep.subr.mxu0 0.0
  %1848 = vmatpush1.msra.mxu0 0.0
  %1849 = vmatprep.subr.mxu0 0.0
  %1850 = vmatpush1.msra.mxu0 0.0
  %1851 = vmatprep.subr.mxu0 0.0
  %1852 = vmatpush1.msra.mxu0 0.0
  %1853 = vmatprep.subr.mxu0 0.0
  %1854 = vmatpush1.msra.mxu0 0.0
  %1855 = vmatprep.subr.mxu0 0.0
  %1856 = vmatpush1.msra.mxu0 0.0
  %1857 = vmatprep.subr.mxu0 0.0
  %1858 = vmatpush1.msra.mxu0 0.0
  %1859 = vmatprep.subr.mxu0 0.0
  %1860 = vmatpush1.msra.mxu0 0.0
  %1861 = vmatprep.subr.mxu0 0.0
  %1862 = vmatpush1.msra.mxu0 0.0
  %1863 = vmatprep.subr.mxu0 0.0
  %1864 = vmatpush1.msra.mxu0 0.0
  %1865 = vmatprep.subr.mxu0 0.0
  %1866 = vmatpush1.msra.mxu0 0.0
  %1867 = vmatprep.mubr.f32.mxu0 0.0
  %1868 = vmatmul.mubr.f32.gmra.mrb[0].mxu0 %v1799
  %v1869 = vpop.f32.mrb[0].mxu0
  %v1870 = vadd.f32 0.0, %v1869
  %v1871 = vpop.f32.mrb[0].mxu0
  %1872 = vmatprep.mubr.f32.mxu0 0.0
  %1873 = vmatmul.mubr.f32.gmra.mrb[0].mxu0 %v1801
  %v1874 = vpop.f32.mrb[0].mxu0
  %v1875 = vadd.f32 0.0, %v1874
  %v1876 = vpop.f32.mrb[0].mxu0
  %1877 = vdwg.mxu0
  %v1878 = vadd.f32 %v1742, %v1870
  %v1879 = vadd.f32 %v1743, %v1875
  %v1880 = vld [vmem:[%s8 + $0xd8] sm:$0xff]
  %v1881 = vld [vmem:[%s8 + $0xe0] sm:$0xff]
  %v1882 = vld [vmem:[%s8 + $0xe8] sm:$0xff]
  %v1883 = vld [vmem:[%s8 + $0xf0] sm:$0xff]
  %v1900 = vrot.slane %v1552, 7
  %v1901 = vsel %vm1765, %v1900, %v1551
  %v1902 = vrot.slane %v1553, 6
  %v1903 = vsel %vm1768, %v1902, %v1901
  %v1904 = vrot.slane %v1554, 5
  %v1905 = vsel %vm1771, %v1904, %v1903
  %v1906 = vrot.slane %v1555, 4
  %v1907 = vsel %vm1774, %v1906, %v1905
  %v1908 = vrot.slane %v1556, 3
  %v1909 = vsel %vm1777, %v1908, %v1907
  %v1910 = vrot.slane %v1557, 2
  %v1911 = vsel %vm1780, %v1910, %v1909
  %v1912 = vrot.slane %v1558, 1
  %v1913 = vsel %vm1783, %v1912, %v1911
  %v1914 = vrot.slane %v1560, 7
  %v1915 = vsel %vm1765, %v1914, %v1559
  %v1916 = vrot.slane %v1561, 6
  %v1917 = vsel %vm1768, %v1916, %v1915
  %v1918 = vrot.slane %v1562, 5
  %v1919 = vsel %vm1771, %v1918, %v1917
  %v1920 = vrot.slane %v1563, 4
  %v1921 = vsel %vm1774, %v1920, %v1919
  %v1922 = vrot.slane %v1564, 3
  %v1923 = vsel %vm1777, %v1922, %v1921
  %v1924 = vrot.slane %v1565, 2
  %v1925 = vsel %vm1780, %v1924, %v1923
  %v1926 = vrot.slane %v1566, 1
  %v1927 = vsel %vm1783, %v1926, %v1925
  %v1928 = vsel %vm332, %v1913, 0
  %v1930 = vsel %vm332, %v1927, 0
  %1932 = vmatprep.subr.mxu0 0.0
  %1933 = vmatpush1.msra.mxu0 %v1880
  %1934 = vmatprep.subr.mxu0 0.0
  %1935 = vmatpush1.msra.mxu0 %v1881
  %1936 = vmatprep.subr.mxu0 0.0
  %1937 = vmatpush1.msra.mxu0 %v1882
  %1938 = vmatprep.subr.mxu0 0.0
  %1939 = vmatpush1.msra.mxu0 %v1883
  %1940 = vmatprep.subr.mxu0 0.0
  %1941 = vmatpush1.msra.mxu0 0.0
  %1942 = vmatprep.subr.mxu0 0.0
  %1943 = vmatpush1.msra.mxu0 0.0
  %1944 = vmatprep.subr.mxu0 0.0
  %1945 = vmatpush1.msra.mxu0 0.0
  %1946 = vmatprep.subr.mxu0 0.0
  %1947 = vmatpush1.msra.mxu0 0.0
  %1948 = vmatprep.subr.mxu0 0.0
  %1949 = vmatpush1.msra.mxu0 0.0
  %1950 = vmatprep.subr.mxu0 0.0
  %1951 = vmatpush1.msra.mxu0 0.0
  %1952 = vmatprep.subr.mxu0 0.0
  %1953 = vmatpush1.msra.mxu0 0.0
  %1954 = vmatprep.subr.mxu0 0.0
  %1955 = vmatpush1.msra.mxu0 0.0
  %1956 = vmatprep.subr.mxu0 0.0
  %1957 = vmatpush1.msra.mxu0 0.0
  %1958 = vmatprep.subr.mxu0 0.0
  %1959 = vmatpush1.msra.mxu0 0.0
  %1960 = vmatprep.subr.mxu0 0.0
  %1961 = vmatpush1.msra.mxu0 0.0
  %1962 = vmatprep.subr.mxu0 0.0
  %1963 = vmatpush1.msra.mxu0 0.0
  %1964 = vmatprep.subr.mxu0 0.0
  %1965 = vmatpush1.msra.mxu0 0.0
  %1966 = vmatprep.subr.mxu0 0.0
  %1967 = vmatpush1.msra.mxu0 0.0
  %1968 = vmatprep.subr.mxu0 0.0
  %1969 = vmatpush1.msra.mxu0 0.0
  %1970 = vmatprep.subr.mxu0 0.0
  %1971 = vmatpush1.msra.mxu0 0.0
  %1972 = vmatprep.subr.mxu0 0.0
  %1973 = vmatpush1.msra.mxu0 0.0
  %1974 = vmatprep.subr.mxu0 0.0
  %1975 = vmatpush1.msra.mxu0 0.0
  %1976 = vmatprep.subr.mxu0 0.0
  %1977 = vmatpush1.msra.mxu0 0.0
  %1978 = vmatprep.subr.mxu0 0.0
  %1979 = vmatpush1.msra.mxu0 0.0
  %1980 = vmatprep.subr.mxu0 0.0
  %1981 = vmatpush1.msra.mxu0 0.0
  %1982 = vmatprep.subr.mxu0 0.0
  %1983 = vmatpush1.msra.mxu0 0.0
  %1984 = vmatprep.subr.mxu0 0.0
  %1985 = vmatpush1.msra.mxu0 0.0
  %1986 = vmatprep.subr.mxu0 0.0
  %1987 = vmatpush1.msra.mxu0 0.0
  %1988 = vmatprep.subr.mxu0 0.0
  %1989 = vmatpush1.msra.mxu0 0.0
  %1990 = vmatprep.subr.mxu0 0.0
  %1991 = vmatpush1.msra.mxu0 0.0
  %1992 = vmatprep.subr.mxu0 0.0
  %1993 = vmatpush1.msra.mxu0 0.0
  %1994 = vmatprep.subr.mxu0 0.0
  %1995 = vmatpush1.msra.mxu0 0.0
  %1996 = vmatprep.mubr.f32.mxu0 0.0
  %1997 = vmatmul.mubr.f32.gmra.mrb[0].mxu0 %v1928
  %v1998 = vpop.f32.mrb[0].mxu0
  %v1999 = vadd.f32 0.0, %v1998
  %v2000 = vpop.f32.mrb[0].mxu0
  %2001 = vmatprep.mubr.f32.mxu0 0.0
  %2002 = vmatmul.mubr.f32.gmra.mrb[0].mxu0 %v1930
  %v2003 = vpop.f32.mrb[0].mxu0
  %v2004 = vadd.f32 0.0, %v2003
  %v2005 = vpop.f32.mrb[0].mxu0
  %2006 = vdwg.mxu0
  %v2007 = vadd.f32 %v1878, %v1999
  %v2008 = vadd.f32 %v1879, %v2004
  %v2009 = vld [vmem:[%s8 + $0xf8] sm:$0xff]
  %v2010 = vld [vmem:[%s8 + $0x100] sm:$0xff]
  %v2011 = vld [vmem:[%s8 + $0x108] sm:$0xff]
  %v2012 = vld [vmem:[%s8 + $0x110] sm:$0xff]
  %v2014 = vsel %vm332, %v803, 0
  %v2017 = vsel %vm332, %v810, 0
  %2019 = vmatprep.subr.mxu0 0.0
  %2020 = vmatpush1.msra.mxu0 %v2009
  %2021 = vmatprep.subr.mxu0 0.0
  %2022 = vmatpush1.msra.mxu0 %v2010
  %2023 = vmatprep.subr.mxu0 0.0
  %2024 = vmatpush1.msra.mxu0 %v2011
  %2025 = vmatprep.subr.mxu0 0.0
  %2026 = vmatpush1.msra.mxu0 %v2012
  %2027 = vmatprep.subr.mxu0 0.0
  %2028 = vmatpush1.msra.mxu0 0.0
  %2029 = vmatprep.subr.mxu0 0.0
  %2030 = vmatpush1.msra.mxu0 0.0
  %2031 = vmatprep.subr.mxu0 0.0
  %2032 = vmatpush1.msra.mxu0 0.0
  %2033 = vmatprep.subr.mxu0 0.0
  %2034 = vmatpush1.msra.mxu0 0.0
  %2035 = vmatprep.subr.mxu0 0.0
  %2036 = vmatpush1.msra.mxu0 0.0
  %2037 = vmatprep.subr.mxu0 0.0
  %2038 = vmatpush1.msra.mxu0 0.0
  %2039 = vmatprep.subr.mxu0 0.0
  %2040 = vmatpush1.msra.mxu0 0.0
  %2041 = vmatprep.subr.mxu0 0.0
  %2042 = vmatpush1.msra.mxu0 0.0
  %2043 = vmatprep.subr.mxu0 0.0
  %2044 = vmatpush1.msra.mxu0 0.0
  %2045 = vmatprep.subr.mxu0 0.0
  %2046 = vmatpush1.msra.mxu0 0.0
  %2047 = vmatprep.subr.mxu0 0.0
  %2048 = vmatpush1.msra.mxu0 0.0
  %2049 = vmatprep.subr.mxu0 0.0
  %2050 = vmatpush1.msra.mxu0 0.0
  %2051 = vmatprep.subr.mxu0 0.0
  %2052 = vmatpush1.msra.mxu0 0.0
  %2053 = vmatprep.subr.mxu0 0.0
  %2054 = vmatpush1.msra.mxu0 0.0
  %2055 = vmatprep.subr.mxu0 0.0
  %2056 = vmatpush1.msra.mxu0 0.0
  %2057 = vmatprep.subr.mxu0 0.0
  %2058 = vmatpush1.msra.mxu0 0.0
  %2059 = vmatprep.subr.mxu0 0.0
  %2060 = vmatpush1.msra.mxu0 0.0
  %2061 = vmatprep.subr.mxu0 0.0
  %2062 = vmatpush1.msra.mxu0 0.0
  %2063 = vmatprep.subr.mxu0 0.0
  %2064 = vmatpush1.msra.mxu0 0.0
  %2065 = vmatprep.subr.mxu0 0.0
  %2066 = vmatpush1.msra.mxu0 0.0
  %2067 = vmatprep.subr.mxu0 0.0
  %2068 = vmatpush1.msra.mxu0 0.0
  %2069 = vmatprep.subr.mxu0 0.0
  %2070 = vmatpush1.msra.mxu0 0.0
  %2071 = vmatprep.subr.mxu0 0.0
  %2072 = vmatpush1.msra.mxu0 0.0
  %2073 = vmatprep.subr.mxu0 0.0
  %2074 = vmatpush1.msra.mxu0 0.0
  %2075 = vmatprep.subr.mxu0 0.0
  %2076 = vmatpush1.msra.mxu0 0.0
  %2077 = vmatprep.subr.mxu0 0.0
  %2078 = vmatpush1.msra.mxu0 0.0
  %2079 = vmatprep.subr.mxu0 0.0
  %2080 = vmatpush1.msra.mxu0 0.0
  %2081 = vmatprep.subr.mxu0 0.0
  %2082 = vmatpush1.msra.mxu0 0.0
  %2083 = vmatprep.mubr.f32.mxu0 0.0
  %2084 = vmatmul.mubr.f32.gmra.mrb[0].mxu0 %v2014
  %v2085 = vpop.f32.mrb[0].mxu0
  %v2086 = vadd.f32 0.0, %v2085
  %v2087 = vpop.f32.mrb[0].mxu0
  %2088 = vmatprep.mubr.f32.mxu0 0.0
  %2089 = vmatmul.mubr.f32.gmra.mrb[0].mxu0 %v2017
  %v2090 = vpop.f32.mrb[0].mxu0
  %v2091 = vadd.f32 0.0, %v2090
  %v2092 = vpop.f32.mrb[0].mxu0
  %2093 = vdwg.mxu0
  %v2094 = vadd.f32 %v2007, %v2086
  %v2095 = vadd.f32 %v2008, %v2091
  %2096 = vset.pattern.permute.xlu0 1
  %2097 = vperm.xlu0 %2096, %v131
  %v2098 = vpop.permute.xlu0 %2097
  %2100 = vset.pattern.permute.xlu0 1
  %2101 = vperm.xlu0 %2100, %v132
  %v2102 = vpop.permute.xlu0 %2101
  %v2104 = vmul.f32 %v707, %v2098
  %v2105 = vmul.f32 %v708, %v2102
  %v2106 = vld [vmem:[%s8 + $0x118] sm:$0xff]
  %v2107 = vld [vmem:[%s8 + $0x120] sm:$0xff]
  %v2108 = vld [vmem:[%s8 + $0x128] sm:$0xff]
  %v2109 = vld [vmem:[%s8 + $0x130] sm:$0xff]
  %v2111 = vsel %vm332, %v2104, 0
  %v2114 = vsel %vm332, %v2105, 0
  %2116 = vmatprep.subr.mxu0 0.0
  %2117 = vmatpush1.msra.mxu0 %v2106
  %2118 = vmatprep.subr.mxu0 0.0
  %2119 = vmatpush1.msra.mxu0 %v2107
  %2120 = vmatprep.subr.mxu0 0.0
  %2121 = vmatpush1.msra.mxu0 %v2108
  %2122 = vmatprep.subr.mxu0 0.0
  %2123 = vmatpush1.msra.mxu0 %v2109
  %2124 = vmatprep.subr.mxu0 0.0
  %2125 = vmatpush1.msra.mxu0 0.0
  %2126 = vmatprep.subr.mxu0 0.0
  %2127 = vmatpush1.msra.mxu0 0.0
  %2128 = vmatprep.subr.mxu0 0.0
  %2129 = vmatpush1.msra.mxu0 0.0
  %2130 = vmatprep.subr.mxu0 0.0
  %2131 = vmatpush1.msra.mxu0 0.0
  %2132 = vmatprep.subr.mxu0 0.0
  %2133 = vmatpush1.msra.mxu0 0.0
  %2134 = vmatprep.subr.mxu0 0.0
  %2135 = vmatpush1.msra.mxu0 0.0
  %2136 = vmatprep.subr.mxu0 0.0
  %2137 = vmatpush1.msra.mxu0 0.0
  %2138 = vmatprep.subr.mxu0 0.0
  %2139 = vmatpush1.msra.mxu0 0.0
  %2140 = vmatprep.subr.mxu0 0.0
  %2141 = vmatpush1.msra.mxu0 0.0
  %2142 = vmatprep.subr.mxu0 0.0
  %2143 = vmatpush1.msra.mxu0 0.0
  %2144 = vmatprep.subr.mxu0 0.0
  %2145 = vmatpush1.msra.mxu0 0.0
  %2146 = vmatprep.subr.mxu0 0.0
  %2147 = vmatpush1.msra.mxu0 0.0
  %2148 = vmatprep.subr.mxu0 0.0
  %2149 = vmatpush1.msra.mxu0 0.0
  %2150 = vmatprep.subr.mxu0 0.0
  %2151 = vmatpush1.msra.mxu0 0.0
  %2152 = vmatprep.subr.mxu0 0.0
  %2153 = vmatpush1.msra.mxu0 0.0
  %2154 = vmatprep.subr.mxu0 0.0
  %2155 = vmatpush1.msra.mxu0 0.0
  %2156 = vmatprep.subr.mxu0 0.0
  %2157 = vmatpush1.msra.mxu0 0.0
  %2158 = vmatprep.subr.mxu0 0.0
  %2159 = vmatpush1.msra.mxu0 0.0
  %2160 = vmatprep.subr.mxu0 0.0
  %2161 = vmatpush1.msra.mxu0 0.0
  %2162 = vmatprep.subr.mxu0 0.0
  %2163 = vmatpush1.msra.mxu0 0.0
  %2164 = vmatprep.subr.mxu0 0.0
  %2165 = vmatpush1.msra.mxu0 0.0
  %2166 = vmatprep.subr.mxu0 0.0
  %2167 = vmatpush1.msra.mxu0 0.0
  %2168 = vmatprep.subr.mxu0 0.0
  %2169 = vmatpush1.msra.mxu0 0.0
  %2170 = vmatprep.subr.mxu0 0.0
  %2171 = vmatpush1.msra.mxu0 0.0
  %2172 = vmatprep.subr.mxu0 0.0
  %2173 = vmatpush1.msra.mxu0 0.0
  %2174 = vmatprep.subr.mxu0 0.0
  %2175 = vmatpush1.msra.mxu0 0.0
  %2176 = vmatprep.subr.mxu0 0.0
  %2177 = vmatpush1.msra.mxu0 0.0
  %2178 = vmatprep.subr.mxu0 0.0
  %2179 = vmatpush1.msra.mxu0 0.0
  %2180 = vmatprep.mubr.f32.mxu0 0.0
  %2181 = vmatmul.mubr.f32.gmra.mrb[0].mxu0 %v2111
  %v2182 = vpop.f32.mrb[0].mxu0
  %v2183 = vadd.f32 0.0, %v2182
  %v2184 = vpop.f32.mrb[0].mxu0
  %2185 = vmatprep.mubr.f32.mxu0 0.0
  %2186 = vmatmul.mubr.f32.gmra.mrb[0].mxu0 %v2114
  %v2187 = vpop.f32.mrb[0].mxu0
  %v2188 = vadd.f32 0.0, %v2187
  %v2189 = vpop.f32.mrb[0].mxu0
  %2190 = vdwg.mxu0
  %v2191 = vadd.f32 %v2094, %v2183
  %v2192 = vadd.f32 %v2095, %v2188
  %v2193 = vrot.slane %v2098, 1
  %v2194 = vrot.slane %v2098, 2
  %v2195 = vrot.slane %v2098, 3
  %v2196 = vrot.slane %v2098, 4
  %v2197 = vrot.slane %v2098, 5
  %v2198 = vrot.slane %v2098, 6
  %v2199 = vrot.slane %v2098, 7
  %v2200 = vrot.slane %v2102, 1
  %v2201 = vrot.slane %v2102, 2
  %v2202 = vrot.slane %v2102, 3
  %v2203 = vrot.slane %v2102, 4
  %v2204 = vrot.slane %v2102, 5
  %v2205 = vrot.slane %v2102, 6
  %v2206 = vrot.slane %v2102, 7
  %v2221 = vmul.f32 %v1311, %v2098
  %v2222 = vmul.f32 %v1312, %v2193
  %v2223 = vmul.f32 %v1313, %v2194
  %v2224 = vmul.f32 %v1314, %v2195
  %v2225 = vmul.f32 %v1315, %v2196
  %v2226 = vmul.f32 %v1316, %v2197
  %v2227 = vmul.f32 %v1317, %v2198
  %v2228 = vmul.f32 %v1318, %v2199
  %v2229 = vmul.f32 %v1319, %v2102
  %v2230 = vmul.f32 %v1320, %v2200
  %v2231 = vmul.f32 %v1321, %v2201
  %v2232 = vmul.f32 %v1322, %v2202
  %v2233 = vmul.f32 %v1323, %v2203
  %v2234 = vmul.f32 %v1324, %v2204
  %v2235 = vmul.f32 %v1325, %v2205
  %v2236 = vmul.f32 %v1326, %v2206
  %v2237 = vld [vmem:[%s8 + $0x138] sm:$0xff]
  %v2238 = vld [vmem:[%s8 + $0x140] sm:$0xff]
  %v2239 = vld [vmem:[%s8 + $0x148] sm:$0xff]
  %v2240 = vld [vmem:[%s8 + $0x150] sm:$0xff]
  %v2257 = vrot.slane %v2222, 7
  %v2258 = vsel %vm1765, %v2257, %v2221
  %v2259 = vrot.slane %v2223, 6
  %v2260 = vsel %vm1768, %v2259, %v2258
  %v2261 = vrot.slane %v2224, 5
  %v2262 = vsel %vm1771, %v2261, %v2260
  %v2263 = vrot.slane %v2225, 4
  %v2264 = vsel %vm1774, %v2263, %v2262
  %v2265 = vrot.slane %v2226, 3
  %v2266 = vsel %vm1777, %v2265, %v2264
  %v2267 = vrot.slane %v2227, 2
  %v2268 = vsel %vm1780, %v2267, %v2266
  %v2269 = vrot.slane %v2228, 1
  %v2270 = vsel %vm1783, %v2269, %v2268
  %v2271 = vrot.slane %v2230, 7
  %v2272 = vsel %vm1765, %v2271, %v2229
  %v2273 = vrot.slane %v2231, 6
  %v2274 = vsel %vm1768, %v2273, %v2272
  %v2275 = vrot.slane %v2232, 5
  %v2276 = vsel %vm1771, %v2275, %v2274
  %v2277 = vrot.slane %v2233, 4
  %v2278 = vsel %vm1774, %v2277, %v2276
  %v2279 = vrot.slane %v2234, 3
  %v2280 = vsel %vm1777, %v2279, %v2278
  %v2281 = vrot.slane %v2235, 2
  %v2282 = vsel %vm1780, %v2281, %v2280
  %v2283 = vrot.slane %v2236, 1
  %v2284 = vsel %vm1783, %v2283, %v2282
  %v2285 = vsel %vm332, %v2270, 0
  %v2287 = vsel %vm332, %v2284, 0
  %2289 = vmatprep.subr.mxu0 0.0
  %2290 = vmatpush1.msra.mxu0 %v2237
  %2291 = vmatprep.subr.mxu0 0.0
  %2292 = vmatpush1.msra.mxu0 %v2238
  %2293 = vmatprep.subr.mxu0 0.0
  %2294 = vmatpush1.msra.mxu0 %v2239
  %2295 = vmatprep.subr.mxu0 0.0
  %2296 = vmatpush1.msra.mxu0 %v2240
  %2297 = vmatprep.subr.mxu0 0.0
  %2298 = vmatpush1.msra.mxu0 0.0
  %2299 = vmatprep.subr.mxu0 0.0
  %2300 = vmatpush1.msra.mxu0 0.0
  %2301 = vmatprep.subr.mxu0 0.0
  %2302 = vmatpush1.msra.mxu0 0.0
  %2303 = vmatprep.subr.mxu0 0.0
  %2304 = vmatpush1.msra.mxu0 0.0
  %2305 = vmatprep.subr.mxu0 0.0
  %2306 = vmatpush1.msra.mxu0 0.0
  %2307 = vmatprep.subr.mxu0 0.0
  %2308 = vmatpush1.msra.mxu0 0.0
  %2309 = vmatprep.subr.mxu0 0.0
  %2310 = vmatpush1.msra.mxu0 0.0
  %2311 = vmatprep.subr.mxu0 0.0
  %2312 = vmatpush1.msra.mxu0 0.0
  %2313 = vmatprep.subr.mxu0 0.0
  %2314 = vmatpush1.msra.mxu0 0.0
  %2315 = vmatprep.subr.mxu0 0.0
  %2316 = vmatpush1.msra.mxu0 0.0
  %2317 = vmatprep.subr.mxu0 0.0
  %2318 = vmatpush1.msra.mxu0 0.0
  %2319 = vmatprep.subr.mxu0 0.0
  %2320 = vmatpush1.msra.mxu0 0.0
  %2321 = vmatprep.subr.mxu0 0.0
  %2322 = vmatpush1.msra.mxu0 0.0
  %2323 = vmatprep.subr.mxu0 0.0
  %2324 = vmatpush1.msra.mxu0 0.0
  %2325 = vmatprep.subr.mxu0 0.0
  %2326 = vmatpush1.msra.mxu0 0.0
  %2327 = vmatprep.subr.mxu0 0.0
  %2328 = vmatpush1.msra.mxu0 0.0
  %2329 = vmatprep.subr.mxu0 0.0
  %2330 = vmatpush1.msra.mxu0 0.0
  %2331 = vmatprep.subr.mxu0 0.0
  %2332 = vmatpush1.msra.mxu0 0.0
  %2333 = vmatprep.subr.mxu0 0.0
  %2334 = vmatpush1.msra.mxu0 0.0
  %2335 = vmatprep.subr.mxu0 0.0
  %2336 = vmatpush1.msra.mxu0 0.0
  %2337 = vmatprep.subr.mxu0 0.0
  %2338 = vmatpush1.msra.mxu0 0.0
  %2339 = vmatprep.subr.mxu0 0.0
  %2340 = vmatpush1.msra.mxu0 0.0
  %2341 = vmatprep.subr.mxu0 0.0
  %2342 = vmatpush1.msra.mxu0 0.0
  %2343 = vmatprep.subr.mxu0 0.0
  %2344 = vmatpush1.msra.mxu0 0.0
  %2345 = vmatprep.subr.mxu0 0.0
  %2346 = vmatpush1.msra.mxu0 0.0
  %2347 = vmatprep.subr.mxu0 0.0
  %2348 = vmatpush1.msra.mxu0 0.0
  %2349 = vmatprep.subr.mxu0 0.0
  %2350 = vmatpush1.msra.mxu0 0.0
  %2351 = vmatprep.subr.mxu0 0.0
  %2352 = vmatpush1.msra.mxu0 0.0
  %2353 = vmatprep.mubr.f32.mxu0 0.0
  %2354 = vmatmul.mubr.f32.gmra.mrb[0].mxu0 %v2285
  %v2355 = vpop.f32.mrb[0].mxu0
  %v2356 = vadd.f32 0.0, %v2355
  %v2357 = vpop.f32.mrb[0].mxu0
  %2358 = vmatprep.mubr.f32.mxu0 0.0
  %2359 = vmatmul.mubr.f32.gmra.mrb[0].mxu0 %v2287
  %v2360 = vpop.f32.mrb[0].mxu0
  %v2361 = vadd.f32 0.0, %v2360
  %v2362 = vpop.f32.mrb[0].mxu0
  %2363 = vdwg.mxu0
  %v2364 = vadd.f32 %v2191, %v2356
  %v2365 = vadd.f32 %v2192, %v2361
  %v2366 = vmul.f32 %v1551, %v2098
  %v2367 = vmul.f32 %v1552, %v2193
  %v2368 = vmul.f32 %v1553, %v2194
  %v2369 = vmul.f32 %v1554, %v2195
  %v2370 = vmul.f32 %v1555, %v2196
  %v2371 = vmul.f32 %v1556, %v2197
  %v2372 = vmul.f32 %v1557, %v2198
  %v2373 = vmul.f32 %v1558, %v2199
  %v2374 = vmul.f32 %v1559, %v2102
  %v2375 = vmul.f32 %v1560, %v2200
  %v2376 = vmul.f32 %v1561, %v2201
  %v2377 = vmul.f32 %v1562, %v2202
  %v2378 = vmul.f32 %v1563, %v2203
  %v2379 = vmul.f32 %v1564, %v2204
  %v2380 = vmul.f32 %v1565, %v2205
  %v2381 = vmul.f32 %v1566, %v2206
  %v2382 = vld [vmem:[%s8 + $0x158] sm:$0xff]
  %v2383 = vld [vmem:[%s8 + $0x160] sm:$0xff]
  %v2384 = vld [vmem:[%s8 + $0x168] sm:$0xff]
  %v2385 = vld [vmem:[%s8 + $0x170] sm:$0xff]
  %v2402 = vrot.slane %v2367, 7
  %v2403 = vsel %vm1765, %v2402, %v2366
  %v2404 = vrot.slane %v2368, 6
  %v2405 = vsel %vm1768, %v2404, %v2403
  %v2406 = vrot.slane %v2369, 5
  %v2407 = vsel %vm1771, %v2406, %v2405
  %v2408 = vrot.slane %v2370, 4
  %v2409 = vsel %vm1774, %v2408, %v2407
  %v2410 = vrot.slane %v2371, 3
  %v2411 = vsel %vm1777, %v2410, %v2409
  %v2412 = vrot.slane %v2372, 2
  %v2413 = vsel %vm1780, %v2412, %v2411
  %v2414 = vrot.slane %v2373, 1
  %v2415 = vsel %vm1783, %v2414, %v2413
  %v2416 = vrot.slane %v2375, 7
  %v2417 = vsel %vm1765, %v2416, %v2374
  %v2418 = vrot.slane %v2376, 6
  %v2419 = vsel %vm1768, %v2418, %v2417
  %v2420 = vrot.slane %v2377, 5
  %v2421 = vsel %vm1771, %v2420, %v2419
  %v2422 = vrot.slane %v2378, 4
  %v2423 = vsel %vm1774, %v2422, %v2421
  %v2424 = vrot.slane %v2379, 3
  %v2425 = vsel %vm1777, %v2424, %v2423
  %v2426 = vrot.slane %v2380, 2
  %v2427 = vsel %vm1780, %v2426, %v2425
  %v2428 = vrot.slane %v2381, 1
  %v2429 = vsel %vm1783, %v2428, %v2427
  %v2430 = vsel %vm332, %v2415, 0
  %v2432 = vsel %vm332, %v2429, 0
  %2434 = vmatprep.subr.mxu0 0.0
  %2435 = vmatpush1.msra.mxu0 %v2382
  %2436 = vmatprep.subr.mxu0 0.0
  %2437 = vmatpush1.msra.mxu0 %v2383
  %2438 = vmatprep.subr.mxu0 0.0
  %2439 = vmatpush1.msra.mxu0 %v2384
  %2440 = vmatprep.subr.mxu0 0.0
  %2441 = vmatpush1.msra.mxu0 %v2385
  %2442 = vmatprep.subr.mxu0 0.0
  %2443 = vmatpush1.msra.mxu0 0.0
  %2444 = vmatprep.subr.mxu0 0.0
  %2445 = vmatpush1.msra.mxu0 0.0
  %2446 = vmatprep.subr.mxu0 0.0
  %2447 = vmatpush1.msra.mxu0 0.0
  %2448 = vmatprep.subr.mxu0 0.0
  %2449 = vmatpush1.msra.mxu0 0.0
  %2450 = vmatprep.subr.mxu0 0.0
  %2451 = vmatpush1.msra.mxu0 0.0
  %2452 = vmatprep.subr.mxu0 0.0
  %2453 = vmatpush1.msra.mxu0 0.0
  %2454 = vmatprep.subr.mxu0 0.0
  %2455 = vmatpush1.msra.mxu0 0.0
  %2456 = vmatprep.subr.mxu0 0.0
  %2457 = vmatpush1.msra.mxu0 0.0
  %2458 = vmatprep.subr.mxu0 0.0
  %2459 = vmatpush1.msra.mxu0 0.0
  %2460 = vmatprep.subr.mxu0 0.0
  %2461 = vmatpush1.msra.mxu0 0.0
  %2462 = vmatprep.subr.mxu0 0.0
  %2463 = vmatpush1.msra.mxu0 0.0
  %2464 = vmatprep.subr.mxu0 0.0
  %2465 = vmatpush1.msra.mxu0 0.0
  %2466 = vmatprep.subr.mxu0 0.0
  %2467 = vmatpush1.msra.mxu0 0.0
  %2468 = vmatprep.subr.mxu0 0.0
  %2469 = vmatpush1.msra.mxu0 0.0
  %2470 = vmatprep.subr.mxu0 0.0
  %2471 = vmatpush1.msra.mxu0 0.0
  %2472 = vmatprep.subr.mxu0 0.0
  %2473 = vmatpush1.msra.mxu0 0.0
  %2474 = vmatprep.subr.mxu0 0.0
  %2475 = vmatpush1.msra.mxu0 0.0
  %2476 = vmatprep.subr.mxu0 0.0
  %2477 = vmatpush1.msra.mxu0 0.0
  %2478 = vmatprep.subr.mxu0 0.0
  %2479 = vmatpush1.msra.mxu0 0.0
  %2480 = vmatprep.subr.mxu0 0.0
  %2481 = vmatpush1.msra.mxu0 0.0
  %2482 = vmatprep.subr.mxu0 0.0
  %2483 = vmatpush1.msra.mxu0 0.0
  %2484 = vmatprep.subr.mxu0 0.0
  %2485 = vmatpush1.msra.mxu0 0.0
  %2486 = vmatprep.subr.mxu0 0.0
  %2487 = vmatpush1.msra.mxu0 0.0
  %2488 = vmatprep.subr.mxu0 0.0
  %2489 = vmatpush1.msra.mxu0 0.0
  %2490 = vmatprep.subr.mxu0 0.0
  %2491 = vmatpush1.msra.mxu0 0.0
  %2492 = vmatprep.subr.mxu0 0.0
  %2493 = vmatpush1.msra.mxu0 0.0
  %2494 = vmatprep.subr.mxu0 0.0
  %2495 = vmatpush1.msra.mxu0 0.0
  %2496 = vmatprep.subr.mxu0 0.0
  %2497 = vmatpush1.msra.mxu0 0.0
  %2498 = vmatprep.mubr.f32.mxu0 0.0
  %2499 = vmatmul.mubr.f32.gmra.mrb[0].mxu0 %v2430
  %v2500 = vpop.f32.mrb[0].mxu0
  %v2501 = vadd.f32 0.0, %v2500
  %v2502 = vpop.f32.mrb[0].mxu0
  %2503 = vmatprep.mubr.f32.mxu0 0.0
  %2504 = vmatmul.mubr.f32.gmra.mrb[0].mxu0 %v2432
  %v2505 = vpop.f32.mrb[0].mxu0
  %v2506 = vadd.f32 0.0, %v2505
  %v2507 = vpop.f32.mrb[0].mxu0
  %2508 = vdwg.mxu0
  %v2509 = vadd.f32 %v2364, %v2501
  %v2510 = vadd.f32 %v2365, %v2506
  %v2511 = vmul.f32 %v803, %v2098
  %v2512 = vmul.f32 %v810, %v2102
  %v2513 = vld [vmem:[%s8 + $0x178] sm:$0xff]
  %v2514 = vld [vmem:[%s8 + $0x180] sm:$0xff]
  %v2515 = vld [vmem:[%s8 + $0x188] sm:$0xff]
  %v2516 = vld [vmem:[%s8 + $0x190] sm:$0xff]
  %v2518 = vsel %vm332, %v2511, 0
  %v2521 = vsel %vm332, %v2512, 0
  %2523 = vmatprep.subr.mxu0 0.0
  %2524 = vmatpush1.msra.mxu0 %v2513
  %2525 = vmatprep.subr.mxu0 0.0
  %2526 = vmatpush1.msra.mxu0 %v2514
  %2527 = vmatprep.subr.mxu0 0.0
  %2528 = vmatpush1.msra.mxu0 %v2515
  %2529 = vmatprep.subr.mxu0 0.0
  %2530 = vmatpush1.msra.mxu0 %v2516
  %2531 = vmatprep.subr.mxu0 0.0
  %2532 = vmatpush1.msra.mxu0 0.0
  %2533 = vmatprep.subr.mxu0 0.0
  %2534 = vmatpush1.msra.mxu0 0.0
  %2535 = vmatprep.subr.mxu0 0.0
  %2536 = vmatpush1.msra.mxu0 0.0
  %2537 = vmatprep.subr.mxu0 0.0
  %2538 = vmatpush1.msra.mxu0 0.0
  %2539 = vmatprep.subr.mxu0 0.0
  %2540 = vmatpush1.msra.mxu0 0.0
  %2541 = vmatprep.subr.mxu0 0.0
  %2542 = vmatpush1.msra.mxu0 0.0
  %2543 = vmatprep.subr.mxu0 0.0
  %2544 = vmatpush1.msra.mxu0 0.0
  %2545 = vmatprep.subr.mxu0 0.0
  %2546 = vmatpush1.msra.mxu0 0.0
  %2547 = vmatprep.subr.mxu0 0.0
  %2548 = vmatpush1.msra.mxu0 0.0
  %2549 = vmatprep.subr.mxu0 0.0
  %2550 = vmatpush1.msra.mxu0 0.0
  %2551 = vmatprep.subr.mxu0 0.0
  %2552 = vmatpush1.msra.mxu0 0.0
  %2553 = vmatprep.subr.mxu0 0.0
  %2554 = vmatpush1.msra.mxu0 0.0
  %2555 = vmatprep.subr.mxu0 0.0
  %2556 = vmatpush1.msra.mxu0 0.0
  %2557 = vmatprep.subr.mxu0 0.0
  %2558 = vmatpush1.msra.mxu0 0.0
  %2559 = vmatprep.subr.mxu0 0.0
  %2560 = vmatpush1.msra.mxu0 0.0
  %2561 = vmatprep.subr.mxu0 0.0
  %2562 = vmatpush1.msra.mxu0 0.0
  %2563 = vmatprep.subr.mxu0 0.0
  %2564 = vmatpush1.msra.mxu0 0.0
  %2565 = vmatprep.subr.mxu0 0.0
  %2566 = vmatpush1.msra.mxu0 0.0
  %2567 = vmatprep.subr.mxu0 0.0
  %2568 = vmatpush1.msra.mxu0 0.0
  %2569 = vmatprep.subr.mxu0 0.0
  %2570 = vmatpush1.msra.mxu0 0.0
  %2571 = vmatprep.subr.mxu0 0.0
  %2572 = vmatpush1.msra.mxu0 0.0
  %2573 = vmatprep.subr.mxu0 0.0
  %2574 = vmatpush1.msra.mxu0 0.0
  %2575 = vmatprep.subr.mxu0 0.0
  %2576 = vmatpush1.msra.mxu0 0.0
  %2577 = vmatprep.subr.mxu0 0.0
  %2578 = vmatpush1.msra.mxu0 0.0
  %2579 = vmatprep.subr.mxu0 0.0
  %2580 = vmatpush1.msra.mxu0 0.0
  %2581 = vmatprep.subr.mxu0 0.0
  %2582 = vmatpush1.msra.mxu0 0.0
  %2583 = vmatprep.subr.mxu0 0.0
  %2584 = vmatpush1.msra.mxu0 0.0
  %2585 = vmatprep.subr.mxu0 0.0
  %2586 = vmatpush1.msra.mxu0 0.0
  %2587 = vmatprep.mubr.f32.mxu0 0.0
  %2588 = vmatmul.mubr.f32.gmra.mrb[0].mxu0 %v2518
  %v2589 = vpop.f32.mrb[0].mxu0
  %v2590 = vadd.f32 0.0, %v2589
  %v2591 = vpop.f32.mrb[0].mxu0
  %2592 = vmatprep.mubr.f32.mxu0 0.0
  %2593 = vmatmul.mubr.f32.gmra.mrb[0].mxu0 %v2521
  %v2594 = vpop.f32.mrb[0].mxu0
  %v2595 = vadd.f32 0.0, %v2594
  %v2596 = vpop.f32.mrb[0].mxu0
  %2597 = vdwg.mxu0
  %v2598 = vadd.f32 %v2509, %v2590
  %v2599 = vadd.f32 %v2510, %v2595
  %2600 = vset.pattern.permute.xlu0 2
  %2601 = vperm.xlu0 %2600, %v131
  %v2602 = vpop.permute.xlu0 %2601
  %2604 = vset.pattern.permute.xlu0 2
  %2605 = vperm.xlu0 %2604, %v132
  %v2606 = vpop.permute.xlu0 %2605
  %v2608 = vmul.f32 %v707, %v2602
  %v2609 = vmul.f32 %v708, %v2606
  %v2610 = vld [vmem:[%s8 + $0x198] sm:$0xff]
  %v2611 = vld [vmem:[%s8 + $0x1a0] sm:$0xff]
  %v2612 = vld [vmem:[%s8 + $0x1a8] sm:$0xff]
  %v2613 = vld [vmem:[%s8 + $0x1b0] sm:$0xff]
  %v2615 = vsel %vm332, %v2608, 0
  %v2618 = vsel %vm332, %v2609, 0
  %2620 = vmatprep.subr.mxu0 0.0
  %2621 = vmatpush1.msra.mxu0 %v2610
  %2622 = vmatprep.subr.mxu0 0.0
  %2623 = vmatpush1.msra.mxu0 %v2611
  %2624 = vmatprep.subr.mxu0 0.0
  %2625 = vmatpush1.msra.mxu0 %v2612
  %2626 = vmatprep.subr.mxu0 0.0
  %2627 = vmatpush1.msra.mxu0 %v2613
  %2628 = vmatprep.subr.mxu0 0.0
  %2629 = vmatpush1.msra.mxu0 0.0
  %2630 = vmatprep.subr.mxu0 0.0
  %2631 = vmatpush1.msra.mxu0 0.0
  %2632 = vmatprep.subr.mxu0 0.0
  %2633 = vmatpush1.msra.mxu0 0.0
  %2634 = vmatprep.subr.mxu0 0.0
  %2635 = vmatpush1.msra.mxu0 0.0
  %2636 = vmatprep.subr.mxu0 0.0
  %2637 = vmatpush1.msra.mxu0 0.0
  %2638 = vmatprep.subr.mxu0 0.0
  %2639 = vmatpush1.msra.mxu0 0.0
  %2640 = vmatprep.subr.mxu0 0.0
  %2641 = vmatpush1.msra.mxu0 0.0
  %2642 = vmatprep.subr.mxu0 0.0
  %2643 = vmatpush1.msra.mxu0 0.0
  %2644 = vmatprep.subr.mxu0 0.0
  %2645 = vmatpush1.msra.mxu0 0.0
  %2646 = vmatprep.subr.mxu0 0.0
  %2647 = vmatpush1.msra.mxu0 0.0
  %2648 = vmatprep.subr.mxu0 0.0
  %2649 = vmatpush1.msra.mxu0 0.0
  %2650 = vmatprep.subr.mxu0 0.0
  %2651 = vmatpush1.msra.mxu0 0.0
  %2652 = vmatprep.subr.mxu0 0.0
  %2653 = vmatpush1.msra.mxu0 0.0
  %2654 = vmatprep.subr.mxu0 0.0
  %2655 = vmatpush1.msra.mxu0 0.0
  %2656 = vmatprep.subr.mxu0 0.0
  %2657 = vmatpush1.msra.mxu0 0.0
  %2658 = vmatprep.subr.mxu0 0.0
  %2659 = vmatpush1.msra.mxu0 0.0
  %2660 = vmatprep.subr.mxu0 0.0
  %2661 = vmatpush1.msra.mxu0 0.0
  %2662 = vmatprep.subr.mxu0 0.0
  %2663 = vmatpush1.msra.mxu0 0.0
  %2664 = vmatprep.subr.mxu0 0.0
  %2665 = vmatpush1.msra.mxu0 0.0
  %2666 = vmatprep.subr.mxu0 0.0
  %2667 = vmatpush1.msra.mxu0 0.0
  %2668 = vmatprep.subr.mxu0 0.0
  %2669 = vmatpush1.msra.mxu0 0.0
  %2670 = vmatprep.subr.mxu0 0.0
  %2671 = vmatpush1.msra.mxu0 0.0
  %2672 = vmatprep.subr.mxu0 0.0
  %2673 = vmatpush1.msra.mxu0 0.0
  %2674 = vmatprep.subr.mxu0 0.0
  %2675 = vmatpush1.msra.mxu0 0.0
  %2676 = vmatprep.subr.mxu0 0.0
  %2677 = vmatpush1.msra.mxu0 0.0
  %2678 = vmatprep.subr.mxu0 0.0
  %2679 = vmatpush1.msra.mxu0 0.0
  %2680 = vmatprep.subr.mxu0 0.0
  %2681 = vmatpush1.msra.mxu0 0.0
  %2682 = vmatprep.subr.mxu0 0.0
  %2683 = vmatpush1.msra.mxu0 0.0
  %2684 = vmatprep.mubr.f32.mxu0 0.0
  %2685 = vmatmul.mubr.f32.gmra.mrb[0].mxu0 %v2615
  %v2686 = vpop.f32.mrb[0].mxu0
  %v2687 = vadd.f32 0.0, %v2686
  %v2688 = vpop.f32.mrb[0].mxu0
  %2689 = vmatprep.mubr.f32.mxu0 0.0
  %2690 = vmatmul.mubr.f32.gmra.mrb[0].mxu0 %v2618
  %v2691 = vpop.f32.mrb[0].mxu0
  %v2692 = vadd.f32 0.0, %v2691
  %v2693 = vpop.f32.mrb[0].mxu0
  %2694 = vdwg.mxu0
  %v2695 = vadd.f32 %v2598, %v2687
  %v2696 = vadd.f32 %v2599, %v2692
  %v2697 = vrot.slane %v2602, 1
  %v2698 = vrot.slane %v2602, 2
  %v2699 = vrot.slane %v2602, 3
  %v2700 = vrot.slane %v2602, 4
  %v2701 = vrot.slane %v2602, 5
  %v2702 = vrot.slane %v2602, 6
  %v2703 = vrot.slane %v2602, 7
  %v2704 = vrot.slane %v2606, 1
  %v2705 = vrot.slane %v2606, 2
  %v2706 = vrot.slane %v2606, 3
  %v2707 = vrot.slane %v2606, 4
  %v2708 = vrot.slane %v2606, 5
  %v2709 = vrot.slane %v2606, 6
  %v2710 = vrot.slane %v2606, 7
  %v2725 = vmul.f32 %v1311, %v2602
  %v2726 = vmul.f32 %v1312, %v2697
  %v2727 = vmul.f32 %v1313, %v2698
  %v2728 = vmul.f32 %v1314, %v2699
  %v2729 = vmul.f32 %v1315, %v2700
  %v2730 = vmul.f32 %v1316, %v2701
  %v2731 = vmul.f32 %v1317, %v2702
  %v2732 = vmul.f32 %v1318, %v2703
  %v2733 = vmul.f32 %v1319, %v2606
  %v2734 = vmul.f32 %v1320, %v2704
  %v2735 = vmul.f32 %v1321, %v2705
  %v2736 = vmul.f32 %v1322, %v2706
  %v2737 = vmul.f32 %v1323, %v2707
  %v2738 = vmul.f32 %v1324, %v2708
  %v2739 = vmul.f32 %v1325, %v2709
  %v2740 = vmul.f32 %v1326, %v2710
  %v2741 = vld [vmem:[%s8 + $0x1b8] sm:$0xff]
  %v2742 = vld [vmem:[%s8 + $0x1c0] sm:$0xff]
  %v2743 = vld [vmem:[%s8 + $0x1c8] sm:$0xff]
  %v2744 = vld [vmem:[%s8 + $0x1d0] sm:$0xff]
  %v2761 = vrot.slane %v2726, 7
  %v2762 = vsel %vm1765, %v2761, %v2725
  %v2763 = vrot.slane %v2727, 6
  %v2764 = vsel %vm1768, %v2763, %v2762
  %v2765 = vrot.slane %v2728, 5
  %v2766 = vsel %vm1771, %v2765, %v2764
  %v2767 = vrot.slane %v2729, 4
  %v2768 = vsel %vm1774, %v2767, %v2766
  %v2769 = vrot.slane %v2730, 3
  %v2770 = vsel %vm1777, %v2769, %v2768
  %v2771 = vrot.slane %v2731, 2
  %v2772 = vsel %vm1780, %v2771, %v2770
  %v2773 = vrot.slane %v2732, 1
  %v2774 = vsel %vm1783, %v2773, %v2772
  %v2775 = vrot.slane %v2734, 7
  %v2776 = vsel %vm1765, %v2775, %v2733
  %v2777 = vrot.slane %v2735, 6
  %v2778 = vsel %vm1768, %v2777, %v2776
  %v2779 = vrot.slane %v2736, 5
  %v2780 = vsel %vm1771, %v2779, %v2778
  %v2781 = vrot.slane %v2737, 4
  %v2782 = vsel %vm1774, %v2781, %v2780
  %v2783 = vrot.slane %v2738, 3
  %v2784 = vsel %vm1777, %v2783, %v2782
  %v2785 = vrot.slane %v2739, 2
  %v2786 = vsel %vm1780, %v2785, %v2784
  %v2787 = vrot.slane %v2740, 1
  %v2788 = vsel %vm1783, %v2787, %v2786
  %v2789 = vsel %vm332, %v2774, 0
  %v2791 = vsel %vm332, %v2788, 0
  %2793 = vmatprep.subr.mxu0 0.0
  %2794 = vmatpush1.msra.mxu0 %v2741
  %2795 = vmatprep.subr.mxu0 0.0
  %2796 = vmatpush1.msra.mxu0 %v2742
  %2797 = vmatprep.subr.mxu0 0.0
  %2798 = vmatpush1.msra.mxu0 %v2743
  %2799 = vmatprep.subr.mxu0 0.0
  %2800 = vmatpush1.msra.mxu0 %v2744
  %2801 = vmatprep.subr.mxu0 0.0
  %2802 = vmatpush1.msra.mxu0 0.0
  %2803 = vmatprep.subr.mxu0 0.0
  %2804 = vmatpush1.msra.mxu0 0.0
  %2805 = vmatprep.subr.mxu0 0.0
  %2806 = vmatpush1.msra.mxu0 0.0
  %2807 = vmatprep.subr.mxu0 0.0
  %2808 = vmatpush1.msra.mxu0 0.0
  %2809 = vmatprep.subr.mxu0 0.0
  %2810 = vmatpush1.msra.mxu0 0.0
  %2811 = vmatprep.subr.mxu0 0.0
  %2812 = vmatpush1.msra.mxu0 0.0
  %2813 = vmatprep.subr.mxu0 0.0
  %2814 = vmatpush1.msra.mxu0 0.0
  %2815 = vmatprep.subr.mxu0 0.0
  %2816 = vmatpush1.msra.mxu0 0.0
  %2817 = vmatprep.subr.mxu0 0.0
  %2818 = vmatpush1.msra.mxu0 0.0
  %2819 = vmatprep.subr.mxu0 0.0
  %2820 = vmatpush1.msra.mxu0 0.0
  %2821 = vmatprep.subr.mxu0 0.0
  %2822 = vmatpush1.msra.mxu0 0.0
  %2823 = vmatprep.subr.mxu0 0.0
  %2824 = vmatpush1.msra.mxu0 0.0
  %2825 = vmatprep.subr.mxu0 0.0
  %2826 = vmatpush1.msra.mxu0 0.0
  %2827 = vmatprep.subr.mxu0 0.0
  %2828 = vmatpush1.msra.mxu0 0.0
  %2829 = vmatprep.subr.mxu0 0.0
  %2830 = vmatpush1.msra.mxu0 0.0
  %2831 = vmatprep.subr.mxu0 0.0
  %2832 = vmatpush1.msra.mxu0 0.0
  %2833 = vmatprep.subr.mxu0 0.0
  %2834 = vmatpush1.msra.mxu0 0.0
  %2835 = vmatprep.subr.mxu0 0.0
  %2836 = vmatpush1.msra.mxu0 0.0
  %2837 = vmatprep.subr.mxu0 0.0
  %2838 = vmatpush1.msra.mxu0 0.0
  %2839 = vmatprep.subr.mxu0 0.0
  %2840 = vmatpush1.msra.mxu0 0.0
  %2841 = vmatprep.subr.mxu0 0.0
  %2842 = vmatpush1.msra.mxu0 0.0
  %2843 = vmatprep.subr.mxu0 0.0
  %2844 = vmatpush1.msra.mxu0 0.0
  %2845 = vmatprep.subr.mxu0 0.0
  %2846 = vmatpush1.msra.mxu0 0.0
  %2847 = vmatprep.subr.mxu0 0.0
  %2848 = vmatpush1.msra.mxu0 0.0
  %2849 = vmatprep.subr.mxu0 0.0
  %2850 = vmatpush1.msra.mxu0 0.0
  %2851 = vmatprep.subr.mxu0 0.0
  %2852 = vmatpush1.msra.mxu0 0.0
  %2853 = vmatprep.subr.mxu0 0.0
  %2854 = vmatpush1.msra.mxu0 0.0
  %2855 = vmatprep.subr.mxu0 0.0
  %2856 = vmatpush1.msra.mxu0 0.0
  %2857 = vmatprep.mubr.f32.mxu0 0.0
  %2858 = vmatmul.mubr.f32.gmra.mrb[0].mxu0 %v2789
  %v2859 = vpop.f32.mrb[0].mxu0
  %v2860 = vadd.f32 0.0, %v2859
  %v2861 = vpop.f32.mrb[0].mxu0
  %2862 = vmatprep.mubr.f32.mxu0 0.0
  %2863 = vmatmul.mubr.f32.gmra.mrb[0].mxu0 %v2791
  %v2864 = vpop.f32.mrb[0].mxu0
  %v2865 = vadd.f32 0.0, %v2864
  %v2866 = vpop.f32.mrb[0].mxu0
  %2867 = vdwg.mxu0
  %v2868 = vadd.f32 %v2695, %v2860
  %v2869 = vadd.f32 %v2696, %v2865
  %v2870 = vmul.f32 %v1551, %v2602
  %v2871 = vmul.f32 %v1552, %v2697
  %v2872 = vmul.f32 %v1553, %v2698
  %v2873 = vmul.f32 %v1554, %v2699
  %v2874 = vmul.f32 %v1555, %v2700
  %v2875 = vmul.f32 %v1556, %v2701
  %v2876 = vmul.f32 %v1557, %v2702
  %v2877 = vmul.f32 %v1558, %v2703
  %v2878 = vmul.f32 %v1559, %v2606
  %v2879 = vmul.f32 %v1560, %v2704
  %v2880 = vmul.f32 %v1561, %v2705
  %v2881 = vmul.f32 %v1562, %v2706
  %v2882 = vmul.f32 %v1563, %v2707
  %v2883 = vmul.f32 %v1564, %v2708
  %v2884 = vmul.f32 %v1565, %v2709
  %v2885 = vmul.f32 %v1566, %v2710
  %v2886 = vld [vmem:[%s8 + $0x1d8] sm:$0xff]
  %v2887 = vld [vmem:[%s8 + $0x1e0] sm:$0xff]
  %v2888 = vld [vmem:[%s8 + $0x1e8] sm:$0xff]
  %v2889 = vld [vmem:[%s8 + $0x1f0] sm:$0xff]
  %v2906 = vrot.slane %v2871, 7
  %v2907 = vsel %vm1765, %v2906, %v2870
  %v2908 = vrot.slane %v2872, 6
  %v2909 = vsel %vm1768, %v2908, %v2907
  %v2910 = vrot.slane %v2873, 5
  %v2911 = vsel %vm1771, %v2910, %v2909
  %v2912 = vrot.slane %v2874, 4
  %v2913 = vsel %vm1774, %v2912, %v2911
  %v2914 = vrot.slane %v2875, 3
  %v2915 = vsel %vm1777, %v2914, %v2913
  %v2916 = vrot.slane %v2876, 2
  %v2917 = vsel %vm1780, %v2916, %v2915
  %v2918 = vrot.slane %v2877, 1
  %v2919 = vsel %vm1783, %v2918, %v2917
  %v2920 = vrot.slane %v2879, 7
  %v2921 = vsel %vm1765, %v2920, %v2878
  %v2922 = vrot.slane %v2880, 6
  %v2923 = vsel %vm1768, %v2922, %v2921
  %v2924 = vrot.slane %v2881, 5
  %v2925 = vsel %vm1771, %v2924, %v2923
  %v2926 = vrot.slane %v2882, 4
  %v2927 = vsel %vm1774, %v2926, %v2925
  %v2928 = vrot.slane %v2883, 3
  %v2929 = vsel %vm1777, %v2928, %v2927
  %v2930 = vrot.slane %v2884, 2
  %v2931 = vsel %vm1780, %v2930, %v2929
  %v2932 = vrot.slane %v2885, 1
  %v2933 = vsel %vm1783, %v2932, %v2931
  %v2934 = vsel %vm332, %v2919, 0
  %v2936 = vsel %vm332, %v2933, 0
  %2938 = vmatprep.subr.mxu0 0.0
  %2939 = vmatpush1.msra.mxu0 %v2886
  %2940 = vmatprep.subr.mxu0 0.0
  %2941 = vmatpush1.msra.mxu0 %v2887
  %2942 = vmatprep.subr.mxu0 0.0
  %2943 = vmatpush1.msra.mxu0 %v2888
  %2944 = vmatprep.subr.mxu0 0.0
  %2945 = vmatpush1.msra.mxu0 %v2889
  %2946 = vmatprep.subr.mxu0 0.0
  %2947 = vmatpush1.msra.mxu0 0.0
  %2948 = vmatprep.subr.mxu0 0.0
  %2949 = vmatpush1.msra.mxu0 0.0
  %2950 = vmatprep.subr.mxu0 0.0
  %2951 = vmatpush1.msra.mxu0 0.0
  %2952 = vmatprep.subr.mxu0 0.0
  %2953 = vmatpush1.msra.mxu0 0.0
  %2954 = vmatprep.subr.mxu0 0.0
  %2955 = vmatpush1.msra.mxu0 0.0
  %2956 = vmatprep.subr.mxu0 0.0
  %2957 = vmatpush1.msra.mxu0 0.0
  %2958 = vmatprep.subr.mxu0 0.0
  %2959 = vmatpush1.msra.mxu0 0.0
  %2960 = vmatprep.subr.mxu0 0.0
  %2961 = vmatpush1.msra.mxu0 0.0
  %2962 = vmatprep.subr.mxu0 0.0
  %2963 = vmatpush1.msra.mxu0 0.0
  %2964 = vmatprep.subr.mxu0 0.0
  %2965 = vmatpush1.msra.mxu0 0.0
  %2966 = vmatprep.subr.mxu0 0.0
  %2967 = vmatpush1.msra.mxu0 0.0
  %2968 = vmatprep.subr.mxu0 0.0
  %2969 = vmatpush1.msra.mxu0 0.0
  %2970 = vmatprep.subr.mxu0 0.0
  %2971 = vmatpush1.msra.mxu0 0.0
  %2972 = vmatprep.subr.mxu0 0.0
  %2973 = vmatpush1.msra.mxu0 0.0
  %2974 = vmatprep.subr.mxu0 0.0
  %2975 = vmatpush1.msra.mxu0 0.0
  %2976 = vmatprep.subr.mxu0 0.0
  %2977 = vmatpush1.msra.mxu0 0.0
  %2978 = vmatprep.subr.mxu0 0.0
  %2979 = vmatpush1.msra.mxu0 0.0
  %2980 = vmatprep.subr.mxu0 0.0
  %2981 = vmatpush1.msra.mxu0 0.0
  %2982 = vmatprep.subr.mxu0 0.0
  %2983 = vmatpush1.msra.mxu0 0.0
  %2984 = vmatprep.subr.mxu0 0.0
  %2985 = vmatpush1.msra.mxu0 0.0
  %2986 = vmatprep.subr.mxu0 0.0
  %2987 = vmatpush1.msra.mxu0 0.0
  %2988 = vmatprep.subr.mxu0 0.0
  %2989 = vmatpush1.msra.mxu0 0.0
  %2990 = vmatprep.subr.mxu0 0.0
  %2991 = vmatpush1.msra.mxu0 0.0
  %2992 = vmatprep.subr.mxu0 0.0
  %2993 = vmatpush1.msra.mxu0 0.0
  %2994 = vmatprep.subr.mxu0 0.0
  %2995 = vmatpush1.msra.mxu0 0.0
  %2996 = vmatprep.subr.mxu0 0.0
  %2997 = vmatpush1.msra.mxu0 0.0
  %2998 = vmatprep.subr.mxu0 0.0
  %2999 = vmatpush1.msra.mxu0 0.0
  %3000 = vmatprep.subr.mxu0 0.0
  %3001 = vmatpush1.msra.mxu0 0.0
  %3002 = vmatprep.mubr.f32.mxu0 0.0
  %3003 = vmatmul.mubr.f32.gmra.mrb[0].mxu0 %v2934
  %v3004 = vpop.f32.mrb[0].mxu0
  %v3005 = vadd.f32 0.0, %v3004
  %v3006 = vpop.f32.mrb[0].mxu0
  %3007 = vmatprep.mubr.f32.mxu0 0.0
  %3008 = vmatmul.mubr.f32.gmra.mrb[0].mxu0 %v2936
  %v3009 = vpop.f32.mrb[0].mxu0
  %v3010 = vadd.f32 0.0, %v3009
  %v3011 = vpop.f32.mrb[0].mxu0
  %3012 = vdwg.mxu0
  %v3013 = vadd.f32 %v2868, %v3005
  %v3014 = vadd.f32 %v2869, %v3010
  %v3015 = vmul.f32 %v803, %v2602
  %v3016 = vmul.f32 %v810, %v2606
  %v3017 = vld [vmem:[%s8 + $0x1f8] sm:$0xff]
  %v3018 = vld [vmem:[%s8 + $0x200] sm:$0xff]
  %v3019 = vld [vmem:[%s8 + $0x208] sm:$0xff]
  %v3020 = vld [vmem:[%s8 + $0x210] sm:$0xff]
  %v3022 = vsel %vm332, %v3015, 0
  %v3025 = vsel %vm332, %v3016, 0
  %3027 = vmatprep.subr.mxu0 0.0
  %3028 = vmatpush1.msra.mxu0 %v3017
  %3029 = vmatprep.subr.mxu0 0.0
  %3030 = vmatpush1.msra.mxu0 %v3018
  %3031 = vmatprep.subr.mxu0 0.0
  %3032 = vmatpush1.msra.mxu0 %v3019
  %3033 = vmatprep.subr.mxu0 0.0
  %3034 = vmatpush1.msra.mxu0 %v3020
  %3035 = vmatprep.subr.mxu0 0.0
  %3036 = vmatpush1.msra.mxu0 0.0
  %3037 = vmatprep.subr.mxu0 0.0
  %3038 = vmatpush1.msra.mxu0 0.0
  %3039 = vmatprep.subr.mxu0 0.0
  %3040 = vmatpush1.msra.mxu0 0.0
  %3041 = vmatprep.subr.mxu0 0.0
  %3042 = vmatpush1.msra.mxu0 0.0
  %3043 = vmatprep.subr.mxu0 0.0
  %3044 = vmatpush1.msra.mxu0 0.0
  %3045 = vmatprep.subr.mxu0 0.0
  %3046 = vmatpush1.msra.mxu0 0.0
  %3047 = vmatprep.subr.mxu0 0.0
  %3048 = vmatpush1.msra.mxu0 0.0
  %3049 = vmatprep.subr.mxu0 0.0
  %3050 = vmatpush1.msra.mxu0 0.0
  %3051 = vmatprep.subr.mxu0 0.0
  %3052 = vmatpush1.msra.mxu0 0.0
  %3053 = vmatprep.subr.mxu0 0.0
  %3054 = vmatpush1.msra.mxu0 0.0
  %3055 = vmatprep.subr.mxu0 0.0
  %3056 = vmatpush1.msra.mxu0 0.0
  %3057 = vmatprep.subr.mxu0 0.0
  %3058 = vmatpush1.msra.mxu0 0.0
  %3059 = vmatprep.subr.mxu0 0.0
  %3060 = vmatpush1.msra.mxu0 0.0
  %3061 = vmatprep.subr.mxu0 0.0
  %3062 = vmatpush1.msra.mxu0 0.0
  %3063 = vmatprep.subr.mxu0 0.0
  %3064 = vmatpush1.msra.mxu0 0.0
  %3065 = vmatprep.subr.mxu0 0.0
  %3066 = vmatpush1.msra.mxu0 0.0
  %3067 = vmatprep.subr.mxu0 0.0
  %3068 = vmatpush1.msra.mxu0 0.0
  %3069 = vmatprep.subr.mxu0 0.0
  %3070 = vmatpush1.msra.mxu0 0.0
  %3071 = vmatprep.subr.mxu0 0.0
  %3072 = vmatpush1.msra.mxu0 0.0
  %3073 = vmatprep.subr.mxu0 0.0
  %3074 = vmatpush1.msra.mxu0 0.0
  %3075 = vmatprep.subr.mxu0 0.0
  %3076 = vmatpush1.msra.mxu0 0.0
  %3077 = vmatprep.subr.mxu0 0.0
  %3078 = vmatpush1.msra.mxu0 0.0
  %3079 = vmatprep.subr.mxu0 0.0
  %3080 = vmatpush1.msra.mxu0 0.0
  %3081 = vmatprep.subr.mxu0 0.0
  %3082 = vmatpush1.msra.mxu0 0.0
  %3083 = vmatprep.subr.mxu0 0.0
  %3084 = vmatpush1.msra.mxu0 0.0
  %3085 = vmatprep.subr.mxu0 0.0
  %3086 = vmatpush1.msra.mxu0 0.0
  %3087 = vmatprep.subr.mxu0 0.0
  %3088 = vmatpush1.msra.mxu0 0.0
  %3089 = vmatprep.subr.mxu0 0.0
  %3090 = vmatpush1.msra.mxu0 0.0
  %3091 = vmatprep.mubr.f32.mxu0 0.0
  %3092 = vmatmul.mubr.f32.gmra.mrb[0].mxu0 %v3022
  %v3093 = vpop.f32.mrb[0].mxu0
  %v3094 = vadd.f32 0.0, %v3093
  %v3095 = vpop.f32.mrb[0].mxu0
  %3096 = vmatprep.mubr.f32.mxu0 0.0
  %3097 = vmatmul.mubr.f32.gmra.mrb[0].mxu0 %v3025
  %v3098 = vpop.f32.mrb[0].mxu0
  %v3099 = vadd.f32 0.0, %v3098
  %v3100 = vpop.f32.mrb[0].mxu0
  %3101 = vdwg.mxu0
  %v3102 = vadd.f32 %v3013, %v3094
  %v3103 = vadd.f32 %v3014, %v3099
  %3104 = vset.pattern.permute.xlu0 4
  %3105 = vperm.xlu0 %3104, %v131
  %v3106 = vpop.permute.xlu0 %3105
  %3108 = vset.pattern.permute.xlu0 4
  %3109 = vperm.xlu0 %3108, %v132
  %v3110 = vpop.permute.xlu0 %3109
  %v3112 = vmul.f32 %v3102, %v3106
  %v3113 = vmul.f32 %v3103, %v3110
  %v3114 = vadd.f32 %v126, %v3112
  %v3115 = vadd.f32 %v127, %v3113
  %3116 = vmatprep.subr.mxu0 0.0
  %3117 = vmatpush1.msra.mxu0 %v3114
  %3118 = vmatprep.subr.mxu0 0.0
  %3119 = vmatpush1.msra.mxu0 %v3115
  %3120 = vmatprep.subr.mxu0 0.0
  %3121 = vmatpush1.msra.mxu0 0.0
  %3122 = vmatprep.subr.mxu0 0.0
  %3123 = vmatpush1.msra.mxu0 0.0
  %3124 = vmatprep.subr.mxu0 0.0
  %3125 = vmatpush1.msra.mxu0 0.0
  %3126 = vmatprep.subr.mxu0 0.0
  %3127 = vmatpush1.msra.mxu0 0.0
  %3128 = vmatprep.subr.mxu0 0.0
  %3129 = vmatpush1.msra.mxu0 0.0
  %3130 = vmatprep.subr.mxu0 0.0
  %3131 = vmatpush1.msra.mxu0 0.0
  %3132 = vmatprep.subr.mxu0 0.0
  %3133 = vmatpush1.msra.mxu0 0.0
  %3134 = vmatprep.subr.mxu0 0.0
  %3135 = vmatpush1.msra.mxu0 0.0
  %3136 = vmatprep.subr.mxu0 0.0
  %3137 = vmatpush1.msra.mxu0 0.0
  %3138 = vmatprep.subr.mxu0 0.0
  %3139 = vmatpush1.msra.mxu0 0.0
  %3140 = vmatprep.subr.mxu0 0.0
  %3141 = vmatpush1.msra.mxu0 0.0
  %3142 = vmatprep.subr.mxu0 0.0
  %3143 = vmatpush1.msra.mxu0 0.0
  %3144 = vmatprep.subr.mxu0 0.0
  %3145 = vmatpush1.msra.mxu0 0.0
  %3146 = vmatprep.subr.mxu0 0.0
  %3147 = vmatpush1.msra.mxu0 0.0
  %3148 = vmatprep.subr.mxu0 0.0
  %3149 = vmatpush1.msra.mxu0 0.0
  %3150 = vmatprep.subr.mxu0 0.0
  %3151 = vmatpush1.msra.mxu0 0.0
  %3152 = vmatprep.subr.mxu0 0.0
  %3153 = vmatpush1.msra.mxu0 0.0
  %3154 = vmatprep.subr.mxu0 0.0
  %3155 = vmatpush1.msra.mxu0 0.0
  %3156 = vmatprep.subr.mxu0 0.0
  %3157 = vmatpush1.msra.mxu0 0.0
  %3158 = vmatprep.subr.mxu0 0.0
  %3159 = vmatpush1.msra.mxu0 0.0
  %3160 = vmatprep.subr.mxu0 0.0
  %3161 = vmatpush1.msra.mxu0 0.0
  %3162 = vmatprep.subr.mxu0 0.0
  %3163 = vmatpush1.msra.mxu0 0.0
  %3164 = vmatprep.subr.mxu0 0.0
  %3165 = vmatpush1.msra.mxu0 0.0
  %3166 = vmatprep.subr.mxu0 0.0
  %3167 = vmatpush1.msra.mxu0 0.0
  %3168 = vmatprep.subr.mxu0 0.0
  %3169 = vmatpush1.msra.mxu0 0.0
  %3170 = vmatprep.subr.mxu0 0.0
  %3171 = vmatpush1.msra.mxu0 0.0
  %3172 = vmatprep.subr.mxu0 0.0
  %3173 = vmatpush1.msra.mxu0 0.0
  %3174 = vmatprep.subr.mxu0 0.0
  %3175 = vmatpush1.msra.mxu0 0.0
  %3176 = vmatprep.subr.mxu0 0.0
  %3177 = vmatpush1.msra.mxu0 0.0
  %3178 = vmatprep.subr.mxu0 0.0
  %3179 = vmatpush1.msra.mxu0 0.0
  %3180 = vmatprep.mubr.f32.mxu0 0.0
  %3181 = vmatmul.mubr.f32.gmra.mrb[0].mxu0 %v147
  %v3182 = vpop.f32.mrb[0].mxu0
  %v3183 = vadd.f32 0.0, %v3182
  %v3184 = vpop.f32.mrb[0].mxu0
  %3185 = vmatprep.mubr.f32.mxu0 0.0
  %3186 = vmatmul.mubr.f32.gmra.mrb[0].mxu0 %v150
  %v3187 = vpop.f32.mrb[0].mxu0
  %v3188 = vadd.f32 0.0, %v3187
  %v3189 = vpop.f32.mrb[0].mxu0
  %3190 = vmatprep.mubr.f32.mxu0 0.0
  %3191 = vmatmul.mubr.f32.gmra.mrb[0].mxu0 %v153
  %v3192 = vpop.f32.mrb[0].mxu0
  %v3193 = vadd.f32 0.0, %v3192
  %v3194 = vpop.f32.mrb[0].mxu0
  %3195 = vdwg.mxu0
  %v3196 = vld [vmem:[%s8 + $0x220] sm:$0xff]
  %v3197 = vld [vmem:[%s8 + $0x228] sm:$0xff]
  %v3198 = vld [vmem:[%s8 + $0x230] sm:$0xff]
  %v3199 = vld [vmem:[%s8 + $0x238] sm:$0xff]
  %3200 = vmatprep.subr.mxu0 0.0
  %3201 = vmatpush1.msra.mxu0 %v3114
  %3202 = vmatprep.subr.mxu0 0.0
  %3203 = vmatpush1.msra.mxu0 %v3115
  %3204 = vmatprep.subr.mxu0 0.0
  %3205 = vmatpush1.msra.mxu0 0.0
  %3206 = vmatprep.subr.mxu0 0.0
  %3207 = vmatpush1.msra.mxu0 0.0
  %3208 = vmatprep.subr.mxu0 0.0
  %3209 = vmatpush1.msra.mxu0 0.0
  %3210 = vmatprep.subr.mxu0 0.0
  %3211 = vmatpush1.msra.mxu0 0.0
  %3212 = vmatprep.subr.mxu0 0.0
  %3213 = vmatpush1.msra.mxu0 0.0
  %3214 = vmatprep.subr.mxu0 0.0
  %3215 = vmatpush1.msra.mxu0 0.0
  %3216 = vmatprep.subr.mxu0 0.0
  %3217 = vmatpush1.msra.mxu0 0.0
  %3218 = vmatprep.subr.mxu0 0.0
  %3219 = vmatpush1.msra.mxu0 0.0
  %3220 = vmatprep.subr.mxu0 0.0
  %3221 = vmatpush1.msra.mxu0 0.0
  %3222 = vmatprep.subr.mxu0 0.0
  %3223 = vmatpush1.msra.mxu0 0.0
  %3224 = vmatprep.subr.mxu0 0.0
  %3225 = vmatpush1.msra.mxu0 0.0
  %3226 = vmatprep.subr.mxu0 0.0
  %3227 = vmatpush1.msra.mxu0 0.0
  %3228 = vmatprep.subr.mxu0 0.0
  %3229 = vmatpush1.msra.mxu0 0.0
  %3230 = vmatprep.subr.mxu0 0.0
  %3231 = vmatpush1.msra.mxu0 0.0
  %3232 = vmatprep.subr.mxu0 0.0
  %3233 = vmatpush1.msra.mxu0 0.0
  %3234 = vmatprep.subr.mxu0 0.0
  %3235 = vmatpush1.msra.mxu0 0.0
  %3236 = vmatprep.subr.mxu0 0.0
  %3237 = vmatpush1.msra.mxu0 0.0
  %3238 = vmatprep.subr.mxu0 0.0
  %3239 = vmatpush1.msra.mxu0 0.0
  %3240 = vmatprep.subr.mxu0 0.0
  %3241 = vmatpush1.msra.mxu0 0.0
  %3242 = vmatprep.subr.mxu0 0.0
  %3243 = vmatpush1.msra.mxu0 0.0
  %3244 = vmatprep.subr.mxu0 0.0
  %3245 = vmatpush1.msra.mxu0 0.0
  %3246 = vmatprep.subr.mxu0 0.0
  %3247 = vmatpush1.msra.mxu0 0.0
  %3248 = vmatprep.subr.mxu0 0.0
  %3249 = vmatpush1.msra.mxu0 0.0
  %3250 = vmatprep.subr.mxu0 0.0
  %3251 = vmatpush1.msra.mxu0 0.0
  %3252 = vmatprep.subr.mxu0 0.0
  %3253 = vmatpush1.msra.mxu0 0.0
  %3254 = vmatprep.subr.mxu0 0.0
  %3255 = vmatpush1.msra.mxu0 0.0
  %3256 = vmatprep.subr.mxu0 0.0
  %3257 = vmatpush1.msra.mxu0 0.0
  %3258 = vmatprep.subr.mxu0 0.0
  %3259 = vmatpush1.msra.mxu0 0.0
  %3260 = vmatprep.subr.mxu0 0.0
  %3261 = vmatpush1.msra.mxu0 0.0
  %3262 = vmatprep.subr.mxu0 0.0
  %3263 = vmatpush1.msra.mxu0 0.0
  %3264 = vmatprep.mubr.f32.mxu0 0.0
  %3265 = vmatmul.mubr.f32.gmra.mrb[0].mxu0 %v240
  %v3266 = vpop.f32.mrb[0].mxu0
  %v3267 = vadd.f32 0.0, %v3266
  %v3268 = vpop.f32.mrb[0].mxu0
  %3269 = vmatprep.mubr.f32.mxu0 0.0
  %3270 = vmatmul.mubr.f32.gmra.mrb[0].mxu0 %v243
  %v3271 = vpop.f32.mrb[0].mxu0
  %v3272 = vadd.f32 0.0, %v3271
  %v3273 = vpop.f32.mrb[0].mxu0
  %3274 = vmatprep.mubr.f32.mxu0 0.0
  %3275 = vmatmul.mubr.f32.gmra.mrb[0].mxu0 %v246
  %v3276 = vpop.f32.mrb[0].mxu0
  %v3277 = vadd.f32 0.0, %v3276
  %v3278 = vpop.f32.mrb[0].mxu0
  %3279 = vdwg.mxu0
  %v3280 = vld [vmem:[%s8 + $0x240] sm:$0xff]
  %v3281 = vld [vmem:[%s8 + $0x248] sm:$0xff]
  %v3282 = vld [vmem:[%s8 + $0x250] sm:$0xff]
  %v3283 = vld [vmem:[%s8 + $0x258] sm:$0xff]
  %v3285 = vsel %vm332, %v3267, 0
  %v3288 = vsel %vm332, %v3272, 0
  %v3291 = vsel %vm332, %v3277, 0
  %3293 = vmatprep.subr.mxu0 0.0
  %3294 = vmatpush1.msra.mxu0 %v3280
  %3295 = vmatprep.subr.mxu0 0.0
  %3296 = vmatpush1.msra.mxu0 %v3281
  %3297 = vmatprep.subr.mxu0 0.0
  %3298 = vmatpush1.msra.mxu0 %v3282
  %3299 = vmatprep.subr.mxu0 0.0
  %3300 = vmatpush1.msra.mxu0 %v3283
  %3301 = vmatprep.subr.mxu0 0.0
  %3302 = vmatpush1.msra.mxu0 0.0
  %3303 = vmatprep.subr.mxu0 0.0
  %3304 = vmatpush1.msra.mxu0 0.0
  %3305 = vmatprep.subr.mxu0 0.0
  %3306 = vmatpush1.msra.mxu0 0.0
  %3307 = vmatprep.subr.mxu0 0.0
  %3308 = vmatpush1.msra.mxu0 0.0
  %3309 = vmatprep.subr.mxu0 0.0
  %3310 = vmatpush1.msra.mxu0 0.0
  %3311 = vmatprep.subr.mxu0 0.0
  %3312 = vmatpush1.msra.mxu0 0.0
  %3313 = vmatprep.subr.mxu0 0.0
  %3314 = vmatpush1.msra.mxu0 0.0
  %3315 = vmatprep.subr.mxu0 0.0
  %3316 = vmatpush1.msra.mxu0 0.0
  %3317 = vmatprep.subr.mxu0 0.0
  %3318 = vmatpush1.msra.mxu0 0.0
  %3319 = vmatprep.subr.mxu0 0.0
  %3320 = vmatpush1.msra.mxu0 0.0
  %3321 = vmatprep.subr.mxu0 0.0
  %3322 = vmatpush1.msra.mxu0 0.0
  %3323 = vmatprep.subr.mxu0 0.0
  %3324 = vmatpush1.msra.mxu0 0.0
  %3325 = vmatprep.subr.mxu0 0.0
  %3326 = vmatpush1.msra.mxu0 0.0
  %3327 = vmatprep.subr.mxu0 0.0
  %3328 = vmatpush1.msra.mxu0 0.0
  %3329 = vmatprep.subr.mxu0 0.0
  %3330 = vmatpush1.msra.mxu0 0.0
  %3331 = vmatprep.subr.mxu0 0.0
  %3332 = vmatpush1.msra.mxu0 0.0
  %3333 = vmatprep.subr.mxu0 0.0
  %3334 = vmatpush1.msra.mxu0 0.0
  %3335 = vmatprep.subr.mxu0 0.0
  %3336 = vmatpush1.msra.mxu0 0.0
  %3337 = vmatprep.subr.mxu0 0.0
  %3338 = vmatpush1.msra.mxu0 0.0
  %3339 = vmatprep.subr.mxu0 0.0
  %3340 = vmatpush1.msra.mxu0 0.0
  %3341 = vmatprep.subr.mxu0 0.0
  %3342 = vmatpush1.msra.mxu0 0.0
  %3343 = vmatprep.subr.mxu0 0.0
  %3344 = vmatpush1.msra.mxu0 0.0
  %3345 = vmatprep.subr.mxu0 0.0
  %3346 = vmatpush1.msra.mxu0 0.0
  %3347 = vmatprep.subr.mxu0 0.0
  %3348 = vmatpush1.msra.mxu0 0.0
  %3349 = vmatprep.subr.mxu0 0.0
  %3350 = vmatpush1.msra.mxu0 0.0
  %3351 = vmatprep.subr.mxu0 0.0
  %3352 = vmatpush1.msra.mxu0 0.0
  %3353 = vmatprep.subr.mxu0 0.0
  %3354 = vmatpush1.msra.mxu0 0.0
  %3355 = vmatprep.subr.mxu0 0.0
  %3356 = vmatpush1.msra.mxu0 0.0
  %3357 = vmatprep.mubr.f32.mxu0 0.0
  %3358 = vmatmul.mubr.f32.gmra.mrb[0].mxu0 %v3285
  %v3359 = vpop.f32.mrb[0].mxu0
  %v3360 = vadd.f32 0.0, %v3359
  %v3361 = vpop.f32.mrb[0].mxu0
  %3362 = vmatprep.mubr.f32.mxu0 0.0
  %3363 = vmatmul.mubr.f32.gmra.mrb[0].mxu0 %v3288
  %v3364 = vpop.f32.mrb[0].mxu0
  %v3365 = vadd.f32 0.0, %v3364
  %v3366 = vpop.f32.mrb[0].mxu0
  %3367 = vmatprep.mubr.f32.mxu0 0.0
  %3368 = vmatmul.mubr.f32.gmra.mrb[0].mxu0 %v3291
  %v3369 = vpop.f32.mrb[0].mxu0
  %v3370 = vadd.f32 0.0, %v3369
  %v3371 = vpop.f32.mrb[0].mxu0
  %3372 = vdwg.mxu0
  %v3374 = vsel %vm332, %v3183, 0
  %v3377 = vsel %vm332, %v3188, 0
  %v3380 = vsel %vm332, %v3193, 0
  %3382 = vmatprep.subr.mxu0 0.0
  %3383 = vmatpush1.msra.mxu0 %v3196
  %3384 = vmatprep.subr.mxu0 0.0
  %3385 = vmatpush1.msra.mxu0 %v3197
  %3386 = vmatprep.subr.mxu0 0.0
  %3387 = vmatpush1.msra.mxu0 %v3198
  %3388 = vmatprep.subr.mxu0 0.0
  %3389 = vmatpush1.msra.mxu0 %v3199
  %3390 = vmatprep.subr.mxu0 0.0
  %3391 = vmatpush1.msra.mxu0 0.0
  %3392 = vmatprep.subr.mxu0 0.0
  %3393 = vmatpush1.msra.mxu0 0.0
  %3394 = vmatprep.subr.mxu0 0.0
  %3395 = vmatpush1.msra.mxu0 0.0
  %3396 = vmatprep.subr.mxu0 0.0
  %3397 = vmatpush1.msra.mxu0 0.0
  %3398 = vmatprep.subr.mxu0 0.0
  %3399 = vmatpush1.msra.mxu0 0.0
  %3400 = vmatprep.subr.mxu0 0.0
  %3401 = vmatpush1.msra.mxu0 0.0
  %3402 = vmatprep.subr.mxu0 0.0
  %3403 = vmatpush1.msra.mxu0 0.0
  %3404 = vmatprep.subr.mxu0 0.0
  %3405 = vmatpush1.msra.mxu0 0.0
  %3406 = vmatprep.subr.mxu0 0.0
  %3407 = vmatpush1.msra.mxu0 0.0
  %3408 = vmatprep.subr.mxu0 0.0
  %3409 = vmatpush1.msra.mxu0 0.0
  %3410 = vmatprep.subr.mxu0 0.0
  %3411 = vmatpush1.msra.mxu0 0.0
  %3412 = vmatprep.subr.mxu0 0.0
  %3413 = vmatpush1.msra.mxu0 0.0
  %3414 = vmatprep.subr.mxu0 0.0
  %3415 = vmatpush1.msra.mxu0 0.0
  %3416 = vmatprep.subr.mxu0 0.0
  %3417 = vmatpush1.msra.mxu0 0.0
  %3418 = vmatprep.subr.mxu0 0.0
  %3419 = vmatpush1.msra.mxu0 0.0
  %3420 = vmatprep.subr.mxu0 0.0
  %3421 = vmatpush1.msra.mxu0 0.0
  %3422 = vmatprep.subr.mxu0 0.0
  %3423 = vmatpush1.msra.mxu0 0.0
  %3424 = vmatprep.subr.mxu0 0.0
  %3425 = vmatpush1.msra.mxu0 0.0
  %3426 = vmatprep.subr.mxu0 0.0
  %3427 = vmatpush1.msra.mxu0 0.0
  %3428 = vmatprep.subr.mxu0 0.0
  %3429 = vmatpush1.msra.mxu0 0.0
  %3430 = vmatprep.subr.mxu0 0.0
  %3431 = vmatpush1.msra.mxu0 0.0
  %3432 = vmatprep.subr.mxu0 0.0
  %3433 = vmatpush1.msra.mxu0 0.0
  %3434 = vmatprep.subr.mxu0 0.0
  %3435 = vmatpush1.msra.mxu0 0.0
  %3436 = vmatprep.subr.mxu0 0.0
  %3437 = vmatpush1.msra.mxu0 0.0
  %3438 = vmatprep.subr.mxu0 0.0
  %3439 = vmatpush1.msra.mxu0 0.0
  %3440 = vmatprep.subr.mxu0 0.0
  %3441 = vmatpush1.msra.mxu0 0.0
  %3442 = vmatprep.subr.mxu0 0.0
  %3443 = vmatpush1.msra.mxu0 0.0
  %3444 = vmatprep.subr.mxu0 0.0
  %3445 = vmatpush1.msra.mxu0 0.0
  %3446 = vmatprep.mubr.f32.mxu0 0.0
  %3447 = vmatmul.mubr.f32.gmra.mrb[0].mxu0 %v3374
  %v3448 = vpop.f32.mrb[0].mxu0
  %v3449 = vadd.f32 %v3360, %v3448
  %v3450 = vpop.f32.mrb[0].mxu0
  %3451 = vmatprep.mubr.f32.mxu0 0.0
  %3452 = vmatmul.mubr.f32.gmra.mrb[0].mxu0 %v3377
  %v3453 = vpop.f32.mrb[0].mxu0
  %v3454 = vadd.f32 %v3365, %v3453
  %v3455 = vpop.f32.mrb[0].mxu0
  %3456 = vmatprep.mubr.f32.mxu0 0.0
  %3457 = vmatmul.mubr.f32.gmra.mrb[0].mxu0 %v3380
  %v3458 = vpop.f32.mrb[0].mxu0
  %v3459 = vadd.f32 %v3370, %v3458
  %v3460 = vpop.f32.mrb[0].mxu0
  %3461 = vdwg.mxu0
  %v3462 = vld [vmem:[%s8 + $0x260] sm:$0xff]
  %v3463 = vld [vmem:[%s8 + $0x268] sm:$0xff]
  %v3464 = vld [vmem:[%s8 + $0x270] sm:$0xff]
  %v3465 = vld [vmem:[%s8 + $0x278] sm:$0xff]
  %3466 = vmatprep.subr.mxu0 0.0
  %3467 = vmatpush1.msra.mxu0 %v3462
  %3468 = vmatprep.subr.mxu0 0.0
  %3469 = vmatpush1.msra.mxu0 %v3463
  %3470 = vmatprep.subr.mxu0 0.0
  %3471 = vmatpush1.msra.mxu0 %v3464
  %3472 = vmatprep.subr.mxu0 0.0
  %3473 = vmatpush1.msra.mxu0 %v3465
  %3474 = vmatprep.subr.mxu0 0.0
  %3475 = vmatpush1.msra.mxu0 0.0
  %3476 = vmatprep.subr.mxu0 0.0
  %3477 = vmatpush1.msra.mxu0 0.0
  %3478 = vmatprep.subr.mxu0 0.0
  %3479 = vmatpush1.msra.mxu0 0.0
  %3480 = vmatprep.subr.mxu0 0.0
  %3481 = vmatpush1.msra.mxu0 0.0
  %3482 = vmatprep.subr.mxu0 0.0
  %3483 = vmatpush1.msra.mxu0 0.0
  %3484 = vmatprep.subr.mxu0 0.0
  %3485 = vmatpush1.msra.mxu0 0.0
  %3486 = vmatprep.subr.mxu0 0.0
  %3487 = vmatpush1.msra.mxu0 0.0
  %3488 = vmatprep.subr.mxu0 0.0
  %3489 = vmatpush1.msra.mxu0 0.0
  %3490 = vmatprep.subr.mxu0 0.0
  %3491 = vmatpush1.msra.mxu0 0.0
  %3492 = vmatprep.subr.mxu0 0.0
  %3493 = vmatpush1.msra.mxu0 0.0
  %3494 = vmatprep.subr.mxu0 0.0
  %3495 = vmatpush1.msra.mxu0 0.0
  %3496 = vmatprep.subr.mxu0 0.0
  %3497 = vmatpush1.msra.mxu0 0.0
  %3498 = vmatprep.subr.mxu0 0.0
  %3499 = vmatpush1.msra.mxu0 0.0
  %3500 = vmatprep.subr.mxu0 0.0
  %3501 = vmatpush1.msra.mxu0 0.0
  %3502 = vmatprep.subr.mxu0 0.0
  %3503 = vmatpush1.msra.mxu0 0.0
  %3504 = vmatprep.subr.mxu0 0.0
  %3505 = vmatpush1.msra.mxu0 0.0
  %3506 = vmatprep.subr.mxu0 0.0
  %3507 = vmatpush1.msra.mxu0 0.0
  %3508 = vmatprep.subr.mxu0 0.0
  %3509 = vmatpush1.msra.mxu0 0.0
  %3510 = vmatprep.subr.mxu0 0.0
  %3511 = vmatpush1.msra.mxu0 0.0
  %3512 = vmatprep.subr.mxu0 0.0
  %3513 = vmatpush1.msra.mxu0 0.0
  %3514 = vmatprep.subr.mxu0 0.0
  %3515 = vmatpush1.msra.mxu0 0.0
  %3516 = vmatprep.subr.mxu0 0.0
  %3517 = vmatpush1.msra.mxu0 0.0
  %3518 = vmatprep.subr.mxu0 0.0
  %3519 = vmatpush1.msra.mxu0 0.0
  %3520 = vmatprep.subr.mxu0 0.0
  %3521 = vmatpush1.msra.mxu0 0.0
  %3522 = vmatprep.subr.mxu0 0.0
  %3523 = vmatpush1.msra.mxu0 0.0
  %3524 = vmatprep.subr.mxu0 0.0
  %3525 = vmatpush1.msra.mxu0 0.0
  %3526 = vmatprep.subr.mxu0 0.0
  %3527 = vmatpush1.msra.mxu0 0.0
  %3528 = vmatprep.subr.mxu0 0.0
  %3529 = vmatpush1.msra.mxu0 0.0
  %3530 = vmatprep.mubr.f32.mxu0 0.0
  %3531 = vmatmul.mubr.f32.gmra.mrb[0].mxu0 %v516
  %v3532 = vpop.f32.mrb[0].mxu0
  %v3533 = vadd.f32 0.0, %v3532
  %v3534 = vpop.f32.mrb[0].mxu0
  %3535 = vmatprep.mubr.f32.mxu0 0.0
  %3536 = vmatmul.mubr.f32.gmra.mrb[0].mxu0 %v519
  %v3537 = vpop.f32.mrb[0].mxu0
  %v3538 = vadd.f32 0.0, %v3537
  %v3539 = vpop.f32.mrb[0].mxu0
  %3540 = vmatprep.mubr.f32.mxu0 0.0
  %3541 = vmatmul.mubr.f32.gmra.mrb[0].mxu0 %v522
  %v3542 = vpop.f32.mrb[0].mxu0
  %v3543 = vadd.f32 0.0, %v3542
  %v3544 = vpop.f32.mrb[0].mxu0
  %3545 = vdwg.mxu0
  %v3546 = vadd.f32 %v3449, %v3533
  %v3547 = vadd.f32 %v3454, %v3538
  %v3548 = vadd.f32 %v3459, %v3543
  %v3549 = vld [vmem:[%s8 + $0x280] sm:$0x1]
  %v3550 = vlaneseq
  %v3551 = vshrl.u32 %v3550, 7
  %v3552 = vsub.s32 0, %v3551
  %v3553 = vrot.slane %v3549, %v3552
  %v3554 = vadd.f32 %v3546, %v3553
  %v3555 = vadd.f32 %v3547, %v3553
  %v3556 = vadd.f32 %v3548, %v3553
  %3557 = vmatprep.subr.mxu0 0.0
  %3558 = vmatpush1.msra.mxu0 %v3554
  %3559 = vmatprep.subr.mxu0 0.0
  %3560 = vmatpush1.msra.mxu0 %v3555
  %3561 = vmatprep.subr.mxu0 0.0
  %3562 = vmatpush1.msra.mxu0 %v3556
  %3563 = vmatprep.subr.mxu0 0.0
  %3564 = vmatpush1.msra.mxu0 0.0
  %3565 = vmatprep.subr.mxu0 0.0
  %3566 = vmatpush1.msra.mxu0 0.0
  %3567 = vmatprep.subr.mxu0 0.0
  %3568 = vmatpush1.msra.mxu0 0.0
  %3569 = vmatprep.subr.mxu0 0.0
  %3570 = vmatpush1.msra.mxu0 0.0
  %3571 = vmatprep.subr.mxu0 0.0
  %3572 = vmatpush1.msra.mxu0 0.0
  %3573 = vmatprep.subr.mxu0 0.0
  %3574 = vmatpush1.msra.mxu0 0.0
  %3575 = vmatprep.subr.mxu0 0.0
  %3576 = vmatpush1.msra.mxu0 0.0
  %3577 = vmatprep.subr.mxu0 0.0
  %3578 = vmatpush1.msra.mxu0 0.0
  %3579 = vmatprep.subr.mxu0 0.0
  %3580 = vmatpush1.msra.mxu0 0.0
  %3581 = vmatprep.subr.mxu0 0.0
  %3582 = vmatpush1.msra.mxu0 0.0
  %3583 = vmatprep.subr.mxu0 0.0
  %3584 = vmatpush1.msra.mxu0 0.0
  %3585 = vmatprep.subr.mxu0 0.0
  %3586 = vmatpush1.msra.mxu0 0.0
  %3587 = vmatprep.subr.mxu0 0.0
  %3588 = vmatpush1.msra.mxu0 0.0
  %3589 = vmatprep.subr.mxu0 0.0
  %3590 = vmatpush1.msra.mxu0 0.0
  %3591 = vmatprep.subr.mxu0 0.0
  %3592 = vmatpush1.msra.mxu0 0.0
  %3593 = vmatprep.subr.mxu0 0.0
  %3594 = vmatpush1.msra.mxu0 0.0
  %3595 = vmatprep.subr.mxu0 0.0
  %3596 = vmatpush1.msra.mxu0 0.0
  %3597 = vmatprep.subr.mxu0 0.0
  %3598 = vmatpush1.msra.mxu0 0.0
  %3599 = vmatprep.subr.mxu0 0.0
  %3600 = vmatpush1.msra.mxu0 0.0
  %3601 = vmatprep.subr.mxu0 0.0
  %3602 = vmatpush1.msra.mxu0 0.0
  %3603 = vmatprep.subr.mxu0 0.0
  %3604 = vmatpush1.msra.mxu0 0.0
  %3605 = vmatprep.subr.mxu0 0.0
  %3606 = vmatpush1.msra.mxu0 0.0
  %3607 = vmatprep.subr.mxu0 0.0
  %3608 = vmatpush1.msra.mxu0 0.0
  %3609 = vmatprep.subr.mxu0 0.0
  %3610 = vmatpush1.msra.mxu0 0.0
  %3611 = vmatprep.subr.mxu0 0.0
  %3612 = vmatpush1.msra.mxu0 0.0
  %3613 = vmatprep.subr.mxu0 0.0
  %3614 = vmatpush1.msra.mxu0 0.0
  %3615 = vmatprep.subr.mxu0 0.0
  %3616 = vmatpush1.msra.mxu0 0.0
  %3617 = vmatprep.subr.mxu0 0.0
  %3618 = vmatpush1.msra.mxu0 0.0
  %3619 = vmatprep.subr.mxu0 0.0
  %3620 = vmatpush1.msra.mxu0 0.0
  %3621 = vmatprep.mubr.f32.mxu0 0.0
  %3622 = vmatmul.mubr.f32.gmra.mrb[0].mxu0 %v617
  %v3623 = vpop.f32.mrb[0].mxu0
  %v3624 = vadd.f32 0.0, %v3623
  %v3625 = vpop.f32.mrb[0].mxu0
  %3626 = vmatprep.mubr.f32.mxu0 0.0
  %3627 = vmatmul.mubr.f32.gmra.mrb[0].mxu0 %v620
  %v3628 = vpop.f32.mrb[0].mxu0
  %v3629 = vadd.f32 0.0, %v3628
  %v3630 = vpop.f32.mrb[0].mxu0
  %3631 = vdwg.mxu0
  %v3632 = vmul.f32 %v3624, %v700
  %v3633 = vmul.f32 %v3629, %v705
  %v3634 = vmul.f32 %v3554, %v3554
  %v3635 = vmul.f32 %v3555, %v3555
  %v3636 = vmul.f32 %v3556, %v3556
  %3637 = vmatprep.subr.mxu0 0.0
  %3638 = vmatpush1.msra.mxu0 %v3634
  %3639 = vmatprep.subr.mxu0 0.0
  %3640 = vmatpush1.msra.mxu0 %v3635
  %3641 = vmatprep.subr.mxu0 0.0
  %3642 = vmatpush1.msra.mxu0 %v3636
  %3643 = vmatprep.subr.mxu0 0.0
  %3644 = vmatpush1.msra.mxu0 0.0
  %3645 = vmatprep.subr.mxu0 0.0
  %3646 = vmatpush1.msra.mxu0 0.0
  %3647 = vmatprep.subr.mxu0 0.0
  %3648 = vmatpush1.msra.mxu0 0.0
  %3649 = vmatprep.subr.mxu0 0.0
  %3650 = vmatpush1.msra.mxu0 0.0
  %3651 = vmatprep.subr.mxu0 0.0
  %3652 = vmatpush1.msra.mxu0 0.0
  %3653 = vmatprep.subr.mxu0 0.0
  %3654 = vmatpush1.msra.mxu0 0.0
  %3655 = vmatprep.subr.mxu0 0.0
  %3656 = vmatpush1.msra.mxu0 0.0
  %3657 = vmatprep.subr.mxu0 0.0
  %3658 = vmatpush1.msra.mxu0 0.0
  %3659 = vmatprep.subr.mxu0 0.0
  %3660 = vmatpush1.msra.mxu0 0.0
  %3661 = vmatprep.subr.mxu0 0.0
  %3662 = vmatpush1.msra.mxu0 0.0
  %3663 = vmatprep.subr.mxu0 0.0
  %3664 = vmatpush1.msra.mxu0 0.0
  %3665 = vmatprep.subr.mxu0 0.0
  %3666 = vmatpush1.msra.mxu0 0.0
  %3667 = vmatprep.subr.mxu0 0.0
  %3668 = vmatpush1.msra.mxu0 0.0
  %3669 = vmatprep.subr.mxu0 0.0
  %3670 = vmatpush1.msra.mxu0 0.0
  %3671 = vmatprep.subr.mxu0 0.0
  %3672 = vmatpush1.msra.mxu0 0.0
  %3673 = vmatprep.subr.mxu0 0.0
  %3674 = vmatpush1.msra.mxu0 0.0
  %3675 = vmatprep.subr.mxu0 0.0
  %3676 = vmatpush1.msra.mxu0 0.0
  %3677 = vmatprep.subr.mxu0 0.0
  %3678 = vmatpush1.msra.mxu0 0.0
  %3679 = vmatprep.subr.mxu0 0.0
  %3680 = vmatpush1.msra.mxu0 0.0
  %3681 = vmatprep.subr.mxu0 0.0
  %3682 = vmatpush1.msra.mxu0 0.0
  %3683 = vmatprep.subr.mxu0 0.0
  %3684 = vmatpush1.msra.mxu0 0.0
  %3685 = vmatprep.subr.mxu0 0.0
  %3686 = vmatpush1.msra.mxu0 0.0
  %3687 = vmatprep.subr.mxu0 0.0
  %3688 = vmatpush1.msra.mxu0 0.0
  %3689 = vmatprep.subr.mxu0 0.0
  %3690 = vmatpush1.msra.mxu0 0.0
  %3691 = vmatprep.subr.mxu0 0.0
  %3692 = vmatpush1.msra.mxu0 0.0
  %3693 = vmatprep.subr.mxu0 0.0
  %3694 = vmatpush1.msra.mxu0 0.0
  %3695 = vmatprep.subr.mxu0 0.0
  %3696 = vmatpush1.msra.mxu0 0.0
  %3697 = vmatprep.subr.mxu0 0.0
  %3698 = vmatpush1.msra.mxu0 0.0
  %3699 = vmatprep.subr.mxu0 0.0
  %3700 = vmatpush1.msra.mxu0 0.0
  %3701 = vmatprep.mubr.f32.mxu0 0.0
  %3702 = vmatmul.mubr.f32.gmra.mrb[0].mxu0 %v617
  %v3703 = vpop.f32.mrb[0].mxu0
  %v3704 = vadd.f32 0.0, %v3703
  %v3705 = vpop.f32.mrb[0].mxu0
  %3706 = vmatprep.mubr.f32.mxu0 0.0
  %3707 = vmatmul.mubr.f32.gmra.mrb[0].mxu0 %v620
  %v3708 = vpop.f32.mrb[0].mxu0
  %v3709 = vadd.f32 0.0, %v3708
  %v3710 = vpop.f32.mrb[0].mxu0
  %3711 = vdwg.mxu0
  %v3712 = vmul.f32 %v3704, %v700
  %v3713 = vmul.f32 %v3709, %v705
  %v3714 = vmul.f32 %v3632, %v3632
  %v3715 = vmul.f32 %v3633, %v3633
  %v3716 = vsub.f32 %v3712, %v3714
  %v3717 = vsub.f32 %v3713, %v3715
  %v3718 = vmax.f32 %v3716, 0.0
  %v3719 = vmax.f32 %v3717, 0.0
  %v3720 = vadd.f32 %v3718, 1e-05
  %v3721 = vadd.f32 %v3719, 1e-05
  %v3722 = vrsqrt.pop %v3720
  %v3723 = vmul.f32 %v3720, %v3722
  %vm3724 = vcmp.eq.f32.partialorder %v3720, inf
  %v3725 = vsel %vm3724, %v3720, %v3723
  %vm3726 = vcmp.eq.f32.partialorder %v3720, 0.0
  %v3727 = vand.u32 %v3720, 2147483648
  %v3728 = vsel %vm3726, %v3727, %v3725
  %v3729 = vrsqrt.pop %v3721
  %v3730 = vmul.f32 %v3721, %v3729
  %vm3731 = vcmp.eq.f32.partialorder %v3721, inf
  %v3732 = vsel %vm3731, %v3721, %v3730
  %vm3733 = vcmp.eq.f32.partialorder %v3721, 0.0
  %v3734 = vand.u32 %v3721, 2147483648
  %v3735 = vsel %vm3733, %v3734, %v3732
  %v3736 = vadd.f32 %v3554, %v817
  %v3737 = vadd.f32 %v3555, %v821
  %v3738 = vadd.f32 %v3556, %v825
  %v3739 = vadd.f32 %v3554, %v832
  %v3740 = vadd.f32 %v3555, %v836
  %v3741 = vadd.f32 %v3556, %v840
  %v3742 = vadd.f32 %v3554, %v847
  %v3743 = vadd.f32 %v3555, %v851
  %v3744 = vadd.f32 %v3556, %v855
  %v3745 = vadd.f32 %v3554, %v862
  %v3746 = vadd.f32 %v3555, %v866
  %v3747 = vadd.f32 %v3556, %v870
  %v3748 = vadd.f32 %v3554, %v877
  %v3749 = vadd.f32 %v3555, %v881
  %v3750 = vadd.f32 %v3556, %v885
  %v3751 = vadd.f32 %v3554, %v892
  %v3752 = vadd.f32 %v3555, %v896
  %v3753 = vadd.f32 %v3556, %v900
  %v3754 = vadd.f32 %v3554, %v907
  %v3755 = vadd.f32 %v3555, %v911
  %v3756 = vadd.f32 %v3556, %v915
  %v3757 = vadd.f32 %v3554, %v922
  %v3758 = vadd.f32 %v3555, %v926
  %v3759 = vadd.f32 %v3556, %v930
  %v3760 = vadd.f32 %v3554, %v937
  %v3761 = vadd.f32 %v3555, %v941
  %v3762 = vadd.f32 %v3556, %v945
  %v3763 = vadd.f32 %v3554, %v952
  %v3764 = vadd.f32 %v3555, %v956
  %v3765 = vadd.f32 %v3556, %v960
  %v3766 = vadd.f32 %v3554, %v967
  %v3767 = vadd.f32 %v3555, %v971
  %v3768 = vadd.f32 %v3556, %v975
  %v3769 = vadd.f32 %v3554, %v982
  %v3770 = vadd.f32 %v3555, %v986
  %v3771 = vadd.f32 %v3556, %v990
  %v3772 = vadd.f32 %v3554, %v997
  %v3773 = vadd.f32 %v3555, %v1001
  %v3774 = vadd.f32 %v3556, %v1005
  %v3775 = vadd.f32 %v3554, %v1012
  %v3776 = vadd.f32 %v3555, %v1016
  %v3777 = vadd.f32 %v3556, %v1020
  %v3778 = vadd.f32 %v3554, %v1027
  %v3779 = vadd.f32 %v3555, %v1031
  %v3780 = vadd.f32 %v3556, %v1035
  %v3781 = vadd.f32 %v3554, %v1042
  %v3782 = vadd.f32 %v3555, %v1046
  %v3783 = vadd.f32 %v3556, %v1050
  %v3784 = vsel %vm332, %v3736, -inf
  %v3785 = vsel %vm332, %v3737, -inf
  %v3786 = vmax.f32 %v3784, %v3785
  %v3787 = vsel %vm332, %v3738, -inf
  %v3788 = vmax.f32 %v3786, %v3787
  %v3789 = vrot.slane %v3788, 4
  %v3790 = vmax.f32 %v3788, %v3789
  %v3791 = vrot.slane %v3790, 2
  %v3792 = vmax.f32 %v3790, %v3791
  %v3793 = vrot.slane %v3792, 1
  %v3794 = vmax.f32 %v3792, %v3793
  %v3795 = vsel %vm332, %v3739, -inf
  %v3796 = vsel %vm332, %v3740, -inf
  %v3797 = vmax.f32 %v3795, %v3796
  %v3798 = vsel %vm332, %v3741, -inf
  %v3799 = vmax.f32 %v3797, %v3798
  %v3800 = vrot.slane %v3799, 4
  %v3801 = vmax.f32 %v3799, %v3800
  %v3802 = vrot.slane %v3801, 2
  %v3803 = vmax.f32 %v3801, %v3802
  %v3804 = vrot.slane %v3803, 1
  %v3805 = vmax.f32 %v3803, %v3804
  %v3806 = vsel %vm332, %v3742, -inf
  %v3807 = vsel %vm332, %v3743, -inf
  %v3808 = vmax.f32 %v3806, %v3807
  %v3809 = vsel %vm332, %v3744, -inf
  %v3810 = vmax.f32 %v3808, %v3809
  %v3811 = vrot.slane %v3810, 4
  %v3812 = vmax.f32 %v3810, %v3811
  %v3813 = vrot.slane %v3812, 2
  %v3814 = vmax.f32 %v3812, %v3813
  %v3815 = vrot.slane %v3814, 1
  %v3816 = vmax.f32 %v3814, %v3815
  %v3817 = vsel %vm332, %v3745, -inf
  %v3818 = vsel %vm332, %v3746, -inf
  %v3819 = vmax.f32 %v3817, %v3818
  %v3820 = vsel %vm332, %v3747, -inf
  %v3821 = vmax.f32 %v3819, %v3820
  %v3822 = vrot.slane %v3821, 4
  %v3823 = vmax.f32 %v3821, %v3822
  %v3824 = vrot.slane %v3823, 2
  %v3825 = vmax.f32 %v3823, %v3824
  %v3826 = vrot.slane %v3825, 1
  %v3827 = vmax.f32 %v3825, %v3826
  %v3828 = vsel %vm332, %v3748, -inf
  %v3829 = vsel %vm332, %v3749, -inf
  %v3830 = vmax.f32 %v3828, %v3829
  %v3831 = vsel %vm332, %v3750, -inf
  %v3832 = vmax.f32 %v3830, %v3831
  %v3833 = vrot.slane %v3832, 4
  %v3834 = vmax.f32 %v3832, %v3833
  %v3835 = vrot.slane %v3834, 2
  %v3836 = vmax.f32 %v3834, %v3835
  %v3837 = vrot.slane %v3836, 1
  %v3838 = vmax.f32 %v3836, %v3837
  %v3839 = vsel %vm332, %v3751, -inf
  %v3840 = vsel %vm332, %v3752, -inf
  %v3841 = vmax.f32 %v3839, %v3840
  %v3842 = vsel %vm332, %v3753, -inf
  %v3843 = vmax.f32 %v3841, %v3842
  %v3844 = vrot.slane %v3843, 4
  %v3845 = vmax.f32 %v3843, %v3844
  %v3846 = vrot.slane %v3845, 2
  %v3847 = vmax.f32 %v3845, %v3846
  %v3848 = vrot.slane %v3847, 1
  %v3849 = vmax.f32 %v3847, %v3848
  %v3850 = vsel %vm332, %v3754, -inf
  %v3851 = vsel %vm332, %v3755, -inf
  %v3852 = vmax.f32 %v3850, %v3851
  %v3853 = vsel %vm332, %v3756, -inf
  %v3854 = vmax.f32 %v3852, %v3853
  %v3855 = vrot.slane %v3854, 4
  %v3856 = vmax.f32 %v3854, %v3855
  %v3857 = vrot.slane %v3856, 2
  %v3858 = vmax.f32 %v3856, %v3857
  %v3859 = vrot.slane %v3858, 1
  %v3860 = vmax.f32 %v3858, %v3859
  %v3861 = vsel %vm332, %v3757, -inf
  %v3862 = vsel %vm332, %v3758, -inf
  %v3863 = vmax.f32 %v3861, %v3862
  %v3864 = vsel %vm332, %v3759, -inf
  %v3865 = vmax.f32 %v3863, %v3864
  %v3866 = vrot.slane %v3865, 4
  %v3867 = vmax.f32 %v3865, %v3866
  %v3868 = vrot.slane %v3867, 2
  %v3869 = vmax.f32 %v3867, %v3868
  %v3870 = vrot.slane %v3869, 1
  %v3871 = vmax.f32 %v3869, %v3870
  %v3872 = vsel %vm332, %v3760, -inf
  %v3873 = vsel %vm332, %v3761, -inf
  %v3874 = vmax.f32 %v3872, %v3873
  %v3875 = vsel %vm332, %v3762, -inf
  %v3876 = vmax.f32 %v3874, %v3875
  %v3877 = vrot.slane %v3876, 4
  %v3878 = vmax.f32 %v3876, %v3877
  %v3879 = vrot.slane %v3878, 2
  %v3880 = vmax.f32 %v3878, %v3879
  %v3881 = vrot.slane %v3880, 1
  %v3882 = vmax.f32 %v3880, %v3881
  %v3883 = vsel %vm332, %v3763, -inf
  %v3884 = vsel %vm332, %v3764, -inf
  %v3885 = vmax.f32 %v3883, %v3884
  %v3886 = vsel %vm332, %v3765, -inf
  %v3887 = vmax.f32 %v3885, %v3886
  %v3888 = vrot.slane %v3887, 4
  %v3889 = vmax.f32 %v3887, %v3888
  %v3890 = vrot.slane %v3889, 2
  %v3891 = vmax.f32 %v3889, %v3890
  %v3892 = vrot.slane %v3891, 1
  %v3893 = vmax.f32 %v3891, %v3892
  %v3894 = vsel %vm332, %v3766, -inf
  %v3895 = vsel %vm332, %v3767, -inf
  %v3896 = vmax.f32 %v3894, %v3895
  %v3897 = vsel %vm332, %v3768, -inf
  %v3898 = vmax.f32 %v3896, %v3897
  %v3899 = vrot.slane %v3898, 4
  %v3900 = vmax.f32 %v3898, %v3899
  %v3901 = vrot.slane %v3900, 2
  %v3902 = vmax.f32 %v3900, %v3901
  %v3903 = vrot.slane %v3902, 1
  %v3904 = vmax.f32 %v3902, %v3903
  %v3905 = vsel %vm332, %v3769, -inf
  %v3906 = vsel %vm332, %v3770, -inf
  %v3907 = vmax.f32 %v3905, %v3906
  %v3908 = vsel %vm332, %v3771, -inf
  %v3909 = vmax.f32 %v3907, %v3908
  %v3910 = vrot.slane %v3909, 4
  %v3911 = vmax.f32 %v3909, %v3910
  %v3912 = vrot.slane %v3911, 2
  %v3913 = vmax.f32 %v3911, %v3912
  %v3914 = vrot.slane %v3913, 1
  %v3915 = vmax.f32 %v3913, %v3914
  %v3916 = vsel %vm332, %v3772, -inf
  %v3917 = vsel %vm332, %v3773, -inf
  %v3918 = vmax.f32 %v3916, %v3917
  %v3919 = vsel %vm332, %v3774, -inf
  %v3920 = vmax.f32 %v3918, %v3919
  %v3921 = vrot.slane %v3920, 4
  %v3922 = vmax.f32 %v3920, %v3921
  %v3923 = vrot.slane %v3922, 2
  %v3924 = vmax.f32 %v3922, %v3923
  %v3925 = vrot.slane %v3924, 1
  %v3926 = vmax.f32 %v3924, %v3925
  %v3927 = vsel %vm332, %v3775, -inf
  %v3928 = vsel %vm332, %v3776, -inf
  %v3929 = vmax.f32 %v3927, %v3928
  %v3930 = vsel %vm332, %v3777, -inf
  %v3931 = vmax.f32 %v3929, %v3930
  %v3932 = vrot.slane %v3931, 4
  %v3933 = vmax.f32 %v3931, %v3932
  %v3934 = vrot.slane %v3933, 2
  %v3935 = vmax.f32 %v3933, %v3934
  %v3936 = vrot.slane %v3935, 1
  %v3937 = vmax.f32 %v3935, %v3936
  %v3938 = vsel %vm332, %v3778, -inf
  %v3939 = vsel %vm332, %v3779, -inf
  %v3940 = vmax.f32 %v3938, %v3939
  %v3941 = vsel %vm332, %v3780, -inf
  %v3942 = vmax.f32 %v3940, %v3941
  %v3943 = vrot.slane %v3942, 4
  %v3944 = vmax.f32 %v3942, %v3943
  %v3945 = vrot.slane %v3944, 2
  %v3946 = vmax.f32 %v3944, %v3945
  %v3947 = vrot.slane %v3946, 1
  %v3948 = vmax.f32 %v3946, %v3947
  %v3949 = vsel %vm332, %v3781, -inf
  %v3950 = vsel %vm332, %v3782, -inf
  %v3951 = vmax.f32 %v3949, %v3950
  %v3952 = vsel %vm332, %v3783, -inf
  %v3953 = vmax.f32 %v3951, %v3952
  %v3954 = vrot.slane %v3953, 4
  %v3955 = vmax.f32 %v3953, %v3954
  %v3956 = vrot.slane %v3955, 2
  %v3957 = vmax.f32 %v3955, %v3956
  %v3958 = vrot.slane %v3957, 1
  %v3959 = vmax.f32 %v3957, %v3958
  %v3960 = vmul.f32 %v3794, %v1277
  %v3961 = vmul.f32 %v3805, %v1281
  %v3962 = vmul.f32 %v3816, %v1282
  %v3963 = vmul.f32 %v3827, %v1283
  %v3964 = vmul.f32 %v3838, %v1284
  %v3965 = vmul.f32 %v3849, %v1285
  %v3966 = vmul.f32 %v3860, %v1286
  %v3967 = vmul.f32 %v3871, %v1287
  %v3968 = vmul.f32 %v3882, %v1280
  %v3969 = vmul.f32 %v3893, %v1288
  %v3970 = vmul.f32 %v3904, %v1289
  %v3971 = vmul.f32 %v3915, %v1290
  %v3972 = vmul.f32 %v3926, %v1291
  %v3973 = vmul.f32 %v3937, %v1292
  %v3974 = vmul.f32 %v3948, %v1293
  %v3975 = vmul.f32 %v3959, %v1294
  %v3976 = vsub.f32 %v3554, %v817
  %v3977 = vsub.f32 %v3555, %v821
  %v3978 = vsub.f32 %v3556, %v825
  %v3979 = vsub.f32 %v3554, %v832
  %v3980 = vsub.f32 %v3555, %v836
  %v3981 = vsub.f32 %v3556, %v840
  %v3982 = vsub.f32 %v3554, %v847
  %v3983 = vsub.f32 %v3555, %v851
  %v3984 = vsub.f32 %v3556, %v855
  %v3985 = vsub.f32 %v3554, %v862
  %v3986 = vsub.f32 %v3555, %v866
  %v3987 = vsub.f32 %v3556, %v870
  %v3988 = vsub.f32 %v3554, %v877
  %v3989 = vsub.f32 %v3555, %v881
  %v3990 = vsub.f32 %v3556, %v885
  %v3991 = vsub.f32 %v3554, %v892
  %v3992 = vsub.f32 %v3555, %v896
  %v3993 = vsub.f32 %v3556, %v900
  %v3994 = vsub.f32 %v3554, %v907
  %v3995 = vsub.f32 %v3555, %v911
  %v3996 = vsub.f32 %v3556, %v915
  %v3997 = vsub.f32 %v3554, %v922
  %v3998 = vsub.f32 %v3555, %v926
  %v3999 = vsub.f32 %v3556, %v930
  %v4000 = vsub.f32 %v3554, %v937
  %v4001 = vsub.f32 %v3555, %v941
  %v4002 = vsub.f32 %v3556, %v945
  %v4003 = vsub.f32 %v3554, %v952
  %v4004 = vsub.f32 %v3555, %v956
  %v4005 = vsub.f32 %v3556, %v960
  %v4006 = vsub.f32 %v3554, %v967
  %v4007 = vsub.f32 %v3555, %v971
  %v4008 = vsub.f32 %v3556, %v975
  %v4009 = vsub.f32 %v3554, %v982
  %v4010 = vsub.f32 %v3555, %v986
  %v4011 = vsub.f32 %v3556, %v990
  %v4012 = vsub.f32 %v3554, %v997
  %v4013 = vsub.f32 %v3555, %v1001
  %v4014 = vsub.f32 %v3556, %v1005
  %v4015 = vsub.f32 %v3554, %v1012
  %v4016 = vsub.f32 %v3555, %v1016
  %v4017 = vsub.f32 %v3556, %v1020
  %v4018 = vsub.f32 %v3554, %v1027
  %v4019 = vsub.f32 %v3555, %v1031
  %v4020 = vsub.f32 %v3556, %v1035
  %v4021 = vsub.f32 %v3554, %v1042
  %v4022 = vsub.f32 %v3555, %v1046
  %v4023 = vsub.f32 %v3556, %v1050
  %v4024 = vsel %vm332, %v3976, inf
  %v4025 = vsel %vm332, %v3977, inf
  %v4026 = vmin.f32 %v4024, %v4025
  %v4027 = vsel %vm332, %v3978, inf
  %v4028 = vmin.f32 %v4026, %v4027
  %v4029 = vrot.slane %v4028, 4
  %v4030 = vmin.f32 %v4028, %v4029
  %v4031 = vrot.slane %v4030, 2
  %v4032 = vmin.f32 %v4030, %v4031
  %v4033 = vrot.slane %v4032, 1
  %v4034 = vmin.f32 %v4032, %v4033
  %v4035 = vsel %vm332, %v3979, inf
  %v4036 = vsel %vm332, %v3980, inf
  %v4037 = vmin.f32 %v4035, %v4036
  %v4038 = vsel %vm332, %v3981, inf
  %v4039 = vmin.f32 %v4037, %v4038
  %v4040 = vrot.slane %v4039, 4
  %v4041 = vmin.f32 %v4039, %v4040
  %v4042 = vrot.slane %v4041, 2
  %v4043 = vmin.f32 %v4041, %v4042
  %v4044 = vrot.slane %v4043, 1
  %v4045 = vmin.f32 %v4043, %v4044
  %v4046 = vsel %vm332, %v3982, inf
  %v4047 = vsel %vm332, %v3983, inf
  %v4048 = vmin.f32 %v4046, %v4047
  %v4049 = vsel %vm332, %v3984, inf
  %v4050 = vmin.f32 %v4048, %v4049
  %v4051 = vrot.slane %v4050, 4
  %v4052 = vmin.f32 %v4050, %v4051
  %v4053 = vrot.slane %v4052, 2
  %v4054 = vmin.f32 %v4052, %v4053
  %v4055 = vrot.slane %v4054, 1
  %v4056 = vmin.f32 %v4054, %v4055
  %v4057 = vsel %vm332, %v3985, inf
  %v4058 = vsel %vm332, %v3986, inf
  %v4059 = vmin.f32 %v4057, %v4058
  %v4060 = vsel %vm332, %v3987, inf
  %v4061 = vmin.f32 %v4059, %v4060
  %v4062 = vrot.slane %v4061, 4
  %v4063 = vmin.f32 %v4061, %v4062
  %v4064 = vrot.slane %v4063, 2
  %v4065 = vmin.f32 %v4063, %v4064
  %v4066 = vrot.slane %v4065, 1
  %v4067 = vmin.f32 %v4065, %v4066
  %v4068 = vsel %vm332, %v3988, inf
  %v4069 = vsel %vm332, %v3989, inf
  %v4070 = vmin.f32 %v4068, %v4069
  %v4071 = vsel %vm332, %v3990, inf
  %v4072 = vmin.f32 %v4070, %v4071
  %v4073 = vrot.slane %v4072, 4
  %v4074 = vmin.f32 %v4072, %v4073
  %v4075 = vrot.slane %v4074, 2
  %v4076 = vmin.f32 %v4074, %v4075
  %v4077 = vrot.slane %v4076, 1
  %v4078 = vmin.f32 %v4076, %v4077
  %v4079 = vsel %vm332, %v3991, inf
  %v4080 = vsel %vm332, %v3992, inf
  %v4081 = vmin.f32 %v4079, %v4080
  %v4082 = vsel %vm332, %v3993, inf
  %v4083 = vmin.f32 %v4081, %v4082
  %v4084 = vrot.slane %v4083, 4
  %v4085 = vmin.f32 %v4083, %v4084
  %v4086 = vrot.slane %v4085, 2
  %v4087 = vmin.f32 %v4085, %v4086
  %v4088 = vrot.slane %v4087, 1
  %v4089 = vmin.f32 %v4087, %v4088
  %v4090 = vsel %vm332, %v3994, inf
  %v4091 = vsel %vm332, %v3995, inf
  %v4092 = vmin.f32 %v4090, %v4091
  %v4093 = vsel %vm332, %v3996, inf
  %v4094 = vmin.f32 %v4092, %v4093
  %v4095 = vrot.slane %v4094, 4
  %v4096 = vmin.f32 %v4094, %v4095
  %v4097 = vrot.slane %v4096, 2
  %v4098 = vmin.f32 %v4096, %v4097
  %v4099 = vrot.slane %v4098, 1
  %v4100 = vmin.f32 %v4098, %v4099
  %v4101 = vsel %vm332, %v3997, inf
  %v4102 = vsel %vm332, %v3998, inf
  %v4103 = vmin.f32 %v4101, %v4102
  %v4104 = vsel %vm332, %v3999, inf
  %v4105 = vmin.f32 %v4103, %v4104
  %v4106 = vrot.slane %v4105, 4
  %v4107 = vmin.f32 %v4105, %v4106
  %v4108 = vrot.slane %v4107, 2
  %v4109 = vmin.f32 %v4107, %v4108
  %v4110 = vrot.slane %v4109, 1
  %v4111 = vmin.f32 %v4109, %v4110
  %v4112 = vsel %vm332, %v4000, inf
  %v4113 = vsel %vm332, %v4001, inf
  %v4114 = vmin.f32 %v4112, %v4113
  %v4115 = vsel %vm332, %v4002, inf
  %v4116 = vmin.f32 %v4114, %v4115
  %v4117 = vrot.slane %v4116, 4
  %v4118 = vmin.f32 %v4116, %v4117
  %v4119 = vrot.slane %v4118, 2
  %v4120 = vmin.f32 %v4118, %v4119
  %v4121 = vrot.slane %v4120, 1
  %v4122 = vmin.f32 %v4120, %v4121
  %v4123 = vsel %vm332, %v4003, inf
  %v4124 = vsel %vm332, %v4004, inf
  %v4125 = vmin.f32 %v4123, %v4124
  %v4126 = vsel %vm332, %v4005, inf
  %v4127 = vmin.f32 %v4125, %v4126
  %v4128 = vrot.slane %v4127, 4
  %v4129 = vmin.f32 %v4127, %v4128
  %v4130 = vrot.slane %v4129, 2
  %v4131 = vmin.f32 %v4129, %v4130
  %v4132 = vrot.slane %v4131, 1
  %v4133 = vmin.f32 %v4131, %v4132
  %v4134 = vsel %vm332, %v4006, inf
  %v4135 = vsel %vm332, %v4007, inf
  %v4136 = vmin.f32 %v4134, %v4135
  %v4137 = vsel %vm332, %v4008, inf
  %v4138 = vmin.f32 %v4136, %v4137
  %v4139 = vrot.slane %v4138, 4
  %v4140 = vmin.f32 %v4138, %v4139
  %v4141 = vrot.slane %v4140, 2
  %v4142 = vmin.f32 %v4140, %v4141
  %v4143 = vrot.slane %v4142, 1
  %v4144 = vmin.f32 %v4142, %v4143
  %v4145 = vsel %vm332, %v4009, inf
  %v4146 = vsel %vm332, %v4010, inf
  %v4147 = vmin.f32 %v4145, %v4146
  %v4148 = vsel %vm332, %v4011, inf
  %v4149 = vmin.f32 %v4147, %v4148
  %v4150 = vrot.slane %v4149, 4
  %v4151 = vmin.f32 %v4149, %v4150
  %v4152 = vrot.slane %v4151, 2
  %v4153 = vmin.f32 %v4151, %v4152
  %v4154 = vrot.slane %v4153, 1
  %v4155 = vmin.f32 %v4153, %v4154
  %v4156 = vsel %vm332, %v4012, inf
  %v4157 = vsel %vm332, %v4013, inf
  %v4158 = vmin.f32 %v4156, %v4157
  %v4159 = vsel %vm332, %v4014, inf
  %v4160 = vmin.f32 %v4158, %v4159
  %v4161 = vrot.slane %v4160, 4
  %v4162 = vmin.f32 %v4160, %v4161
  %v4163 = vrot.slane %v4162, 2
  %v4164 = vmin.f32 %v4162, %v4163
  %v4165 = vrot.slane %v4164, 1
  %v4166 = vmin.f32 %v4164, %v4165
  %v4167 = vsel %vm332, %v4015, inf
  %v4168 = vsel %vm332, %v4016, inf
  %v4169 = vmin.f32 %v4167, %v4168
  %v4170 = vsel %vm332, %v4017, inf
  %v4171 = vmin.f32 %v4169, %v4170
  %v4172 = vrot.slane %v4171, 4
  %v4173 = vmin.f32 %v4171, %v4172
  %v4174 = vrot.slane %v4173, 2
  %v4175 = vmin.f32 %v4173, %v4174
  %v4176 = vrot.slane %v4175, 1
  %v4177 = vmin.f32 %v4175, %v4176
  %v4178 = vsel %vm332, %v4018, inf
  %v4179 = vsel %vm332, %v4019, inf
  %v4180 = vmin.f32 %v4178, %v4179
  %v4181 = vsel %vm332, %v4020, inf
  %v4182 = vmin.f32 %v4180, %v4181
  %v4183 = vrot.slane %v4182, 4
  %v4184 = vmin.f32 %v4182, %v4183
  %v4185 = vrot.slane %v4184, 2
  %v4186 = vmin.f32 %v4184, %v4185
  %v4187 = vrot.slane %v4186, 1
  %v4188 = vmin.f32 %v4186, %v4187
  %v4189 = vsel %vm332, %v4021, inf
  %v4190 = vsel %vm332, %v4022, inf
  %v4191 = vmin.f32 %v4189, %v4190
  %v4192 = vsel %vm332, %v4023, inf
  %v4193 = vmin.f32 %v4191, %v4192
  %v4194 = vrot.slane %v4193, 4
  %v4195 = vmin.f32 %v4193, %v4194
  %v4196 = vrot.slane %v4195, 2
  %v4197 = vmin.f32 %v4195, %v4196
  %v4198 = vrot.slane %v4197, 1
  %v4199 = vmin.f32 %v4197, %v4198
  %v4200 = vmul.f32 %v4034, %v1277
  %v4201 = vmul.f32 %v4045, %v1281
  %v4202 = vmul.f32 %v4056, %v1282
  %v4203 = vmul.f32 %v4067, %v1283
  %v4204 = vmul.f32 %v4078, %v1284
  %v4205 = vmul.f32 %v4089, %v1285
  %v4206 = vmul.f32 %v4100, %v1286
  %v4207 = vmul.f32 %v4111, %v1287
  %v4208 = vmul.f32 %v4122, %v1280
  %v4209 = vmul.f32 %v4133, %v1288
  %v4210 = vmul.f32 %v4144, %v1289
  %v4211 = vmul.f32 %v4155, %v1290
  %v4212 = vmul.f32 %v4166, %v1291
  %v4213 = vmul.f32 %v4177, %v1292
  %v4214 = vmul.f32 %v4188, %v1293
  %v4215 = vmul.f32 %v4199, %v1294
  %v4216 = vld [vmem:[%s8 + $0x288] sm:$0xff]
  %v4217 = vld [vmem:[%s8 + $0x290] sm:$0xff]
  %v4218 = vld [vmem:[%s8 + $0x298] sm:$0xff]
  %v4219 = vld [vmem:[%s8 + $0x2a0] sm:$0xff]
  %v4220 = vld [vmem:[%s8 + $0x428] sm:$0x1]
  %v4221 = vlaneseq
  %v4222 = vshrl.u32 %v4221, 7
  %v4223 = vsub.s32 0, %v4222
  %v4224 = vrot.slane %v4220, %v4223
  %v4226 = vsel %vm332, %v3114, 0
  %v4229 = vsel %vm332, %v3115, 0
  %4231 = vmatprep.subr.mxu0 0.0
  %4232 = vmatpush1.msra.mxu0 %v4216
  %4233 = vmatprep.subr.mxu0 0.0
  %4234 = vmatpush1.msra.mxu0 %v4217
  %4235 = vmatprep.subr.mxu0 0.0
  %4236 = vmatpush1.msra.mxu0 %v4218
  %4237 = vmatprep.subr.mxu0 0.0
  %4238 = vmatpush1.msra.mxu0 %v4219
  %4239 = vmatprep.subr.mxu0 0.0
  %4240 = vmatpush1.msra.mxu0 0.0
  %4241 = vmatprep.subr.mxu0 0.0
  %4242 = vmatpush1.msra.mxu0 0.0
  %4243 = vmatprep.subr.mxu0 0.0
  %4244 = vmatpush1.msra.mxu0 0.0
  %4245 = vmatprep.subr.mxu0 0.0
  %4246 = vmatpush1.msra.mxu0 0.0
  %4247 = vmatprep.subr.mxu0 0.0
  %4248 = vmatpush1.msra.mxu0 0.0
  %4249 = vmatprep.subr.mxu0 0.0
  %4250 = vmatpush1.msra.mxu0 0.0
  %4251 = vmatprep.subr.mxu0 0.0
  %4252 = vmatpush1.msra.mxu0 0.0
  %4253 = vmatprep.subr.mxu0 0.0
  %4254 = vmatpush1.msra.mxu0 0.0
  %4255 = vmatprep.subr.mxu0 0.0
  %4256 = vmatpush1.msra.mxu0 0.0
  %4257 = vmatprep.subr.mxu0 0.0
  %4258 = vmatpush1.msra.mxu0 0.0
  %4259 = vmatprep.subr.mxu0 0.0
  %4260 = vmatpush1.msra.mxu0 0.0
  %4261 = vmatprep.subr.mxu0 0.0
  %4262 = vmatpush1.msra.mxu0 0.0
  %4263 = vmatprep.subr.mxu0 0.0
  %4264 = vmatpush1.msra.mxu0 0.0
  %4265 = vmatprep.subr.mxu0 0.0
  %4266 = vmatpush1.msra.mxu0 0.0
  %4267 = vmatprep.subr.mxu0 0.0
  %4268 = vmatpush1.msra.mxu0 0.0
  %4269 = vmatprep.subr.mxu0 0.0
  %4270 = vmatpush1.msra.mxu0 0.0
  %4271 = vmatprep.subr.mxu0 0.0
  %4272 = vmatpush1.msra.mxu0 0.0
  %4273 = vmatprep.subr.mxu0 0.0
  %4274 = vmatpush1.msra.mxu0 0.0
  %4275 = vmatprep.subr.mxu0 0.0
  %4276 = vmatpush1.msra.mxu0 0.0
  %4277 = vmatprep.subr.mxu0 0.0
  %4278 = vmatpush1.msra.mxu0 0.0
  %4279 = vmatprep.subr.mxu0 0.0
  %4280 = vmatpush1.msra.mxu0 0.0
  %4281 = vmatprep.subr.mxu0 0.0
  %4282 = vmatpush1.msra.mxu0 0.0
  %4283 = vmatprep.subr.mxu0 0.0
  %4284 = vmatpush1.msra.mxu0 0.0
  %4285 = vmatprep.subr.mxu0 0.0
  %4286 = vmatpush1.msra.mxu0 0.0
  %4287 = vmatprep.subr.mxu0 0.0
  %4288 = vmatpush1.msra.mxu0 0.0
  %4289 = vmatprep.subr.mxu0 0.0
  %4290 = vmatpush1.msra.mxu0 0.0
  %4291 = vmatprep.subr.mxu0 0.0
  %4292 = vmatpush1.msra.mxu0 0.0
  %4293 = vmatprep.subr.mxu0 0.0
  %4294 = vmatpush1.msra.mxu0 0.0
  %4295 = vmatprep.mubr.f32.mxu0 0.0
  %4296 = vmatmul.mubr.f32.gmra.mrb[0].mxu0 %v4226
  %v4297 = vpop.f32.mrb[0].mxu0
  %v4298 = vadd.f32 %v4224, %v4297
  %v4299 = vpop.f32.mrb[0].mxu0
  %4300 = vmatprep.mubr.f32.mxu0 0.0
  %4301 = vmatmul.mubr.f32.gmra.mrb[0].mxu0 %v4229
  %v4302 = vpop.f32.mrb[0].mxu0
  %v4303 = vadd.f32 %v4224, %v4302
  %v4304 = vpop.f32.mrb[0].mxu0
  %4305 = vdwg.mxu0
  %v4306 = vld [vmem:[%s8 + $0x2a8] sm:$0xff]
  %v4307 = vld [vmem:[%s8 + $0x2b0] sm:$0xff]
  %v4308 = vld [vmem:[%s8 + $0x2b8] sm:$0xff]
  %v4309 = vld [vmem:[%s8 + $0x2c0] sm:$0xff]
  %v4311 = vsel %vm332, %v3632, 0
  %v4314 = vsel %vm332, %v3633, 0
  %4316 = vmatprep.subr.mxu0 0.0
  %4317 = vmatpush1.msra.mxu0 %v4306
  %4318 = vmatprep.subr.mxu0 0.0
  %4319 = vmatpush1.msra.mxu0 %v4307
  %4320 = vmatprep.subr.mxu0 0.0
  %4321 = vmatpush1.msra.mxu0 %v4308
  %4322 = vmatprep.subr.mxu0 0.0
  %4323 = vmatpush1.msra.mxu0 %v4309
  %4324 = vmatprep.subr.mxu0 0.0
  %4325 = vmatpush1.msra.mxu0 0.0
  %4326 = vmatprep.subr.mxu0 0.0
  %4327 = vmatpush1.msra.mxu0 0.0
  %4328 = vmatprep.subr.mxu0 0.0
  %4329 = vmatpush1.msra.mxu0 0.0
  %4330 = vmatprep.subr.mxu0 0.0
  %4331 = vmatpush1.msra.mxu0 0.0
  %4332 = vmatprep.subr.mxu0 0.0
  %4333 = vmatpush1.msra.mxu0 0.0
  %4334 = vmatprep.subr.mxu0 0.0
  %4335 = vmatpush1.msra.mxu0 0.0
  %4336 = vmatprep.subr.mxu0 0.0
  %4337 = vmatpush1.msra.mxu0 0.0
  %4338 = vmatprep.subr.mxu0 0.0
  %4339 = vmatpush1.msra.mxu0 0.0
  %4340 = vmatprep.subr.mxu0 0.0
  %4341 = vmatpush1.msra.mxu0 0.0
  %4342 = vmatprep.subr.mxu0 0.0
  %4343 = vmatpush1.msra.mxu0 0.0
  %4344 = vmatprep.subr.mxu0 0.0
  %4345 = vmatpush1.msra.mxu0 0.0
  %4346 = vmatprep.subr.mxu0 0.0
  %4347 = vmatpush1.msra.mxu0 0.0
  %4348 = vmatprep.subr.mxu0 0.0
  %4349 = vmatpush1.msra.mxu0 0.0
  %4350 = vmatprep.subr.mxu0 0.0
  %4351 = vmatpush1.msra.mxu0 0.0
  %4352 = vmatprep.subr.mxu0 0.0
  %4353 = vmatpush1.msra.mxu0 0.0
  %4354 = vmatprep.subr.mxu0 0.0
  %4355 = vmatpush1.msra.mxu0 0.0
  %4356 = vmatprep.subr.mxu0 0.0
  %4357 = vmatpush1.msra.mxu0 0.0
  %4358 = vmatprep.subr.mxu0 0.0
  %4359 = vmatpush1.msra.mxu0 0.0
  %4360 = vmatprep.subr.mxu0 0.0
  %4361 = vmatpush1.msra.mxu0 0.0
  %4362 = vmatprep.subr.mxu0 0.0
  %4363 = vmatpush1.msra.mxu0 0.0
  %4364 = vmatprep.subr.mxu0 0.0
  %4365 = vmatpush1.msra.mxu0 0.0
  %4366 = vmatprep.subr.mxu0 0.0
  %4367 = vmatpush1.msra.mxu0 0.0
  %4368 = vmatprep.subr.mxu0 0.0
  %4369 = vmatpush1.msra.mxu0 0.0
  %4370 = vmatprep.subr.mxu0 0.0
  %4371 = vmatpush1.msra.mxu0 0.0
  %4372 = vmatprep.subr.mxu0 0.0
  %4373 = vmatpush1.msra.mxu0 0.0
  %4374 = vmatprep.subr.mxu0 0.0
  %4375 = vmatpush1.msra.mxu0 0.0
  %4376 = vmatprep.subr.mxu0 0.0
  %4377 = vmatpush1.msra.mxu0 0.0
  %4378 = vmatprep.subr.mxu0 0.0
  %4379 = vmatpush1.msra.mxu0 0.0
  %4380 = vmatprep.mubr.f32.mxu0 0.0
  %4381 = vmatmul.mubr.f32.gmra.mrb[0].mxu0 %v4311
  %v4382 = vpop.f32.mrb[0].mxu0
  %v4383 = vadd.f32 0.0, %v4382
  %v4384 = vpop.f32.mrb[0].mxu0
  %4385 = vmatprep.mubr.f32.mxu0 0.0
  %4386 = vmatmul.mubr.f32.gmra.mrb[0].mxu0 %v4314
  %v4387 = vpop.f32.mrb[0].mxu0
  %v4388 = vadd.f32 0.0, %v4387
  %v4389 = vpop.f32.mrb[0].mxu0
  %4390 = vdwg.mxu0
  %v4391 = vadd.f32 %v4298, %v4383
  %v4392 = vadd.f32 %v4303, %v4388
  %v4393 = vld [vmem:[%s8 + $0x2c8] sm:$0xff]
  %v4394 = vld [vmem:[%s8 + $0x2d0] sm:$0xff]
  %v4395 = vld [vmem:[%s8 + $0x2d8] sm:$0xff]
  %v4396 = vld [vmem:[%s8 + $0x2e0] sm:$0xff]
  %v4413 = vrot.slane %v3961, 7
  %v4414 = vsel %vm1765, %v4413, %v3960
  %v4415 = vrot.slane %v3962, 6
  %v4416 = vsel %vm1768, %v4415, %v4414
  %v4417 = vrot.slane %v3963, 5
  %v4418 = vsel %vm1771, %v4417, %v4416
  %v4419 = vrot.slane %v3964, 4
  %v4420 = vsel %vm1774, %v4419, %v4418
  %v4421 = vrot.slane %v3965, 3
  %v4422 = vsel %vm1777, %v4421, %v4420
  %v4423 = vrot.slane %v3966, 2
  %v4424 = vsel %vm1780, %v4423, %v4422
  %v4425 = vrot.slane %v3967, 1
  %v4426 = vsel %vm1783, %v4425, %v4424
  %v4427 = vrot.slane %v3969, 7
  %v4428 = vsel %vm1765, %v4427, %v3968
  %v4429 = vrot.slane %v3970, 6
  %v4430 = vsel %vm1768, %v4429, %v4428
  %v4431 = vrot.slane %v3971, 5
  %v4432 = vsel %vm1771, %v4431, %v4430
  %v4433 = vrot.slane %v3972, 4
  %v4434 = vsel %vm1774, %v4433, %v4432
  %v4435 = vrot.slane %v3973, 3
  %v4436 = vsel %vm1777, %v4435, %v4434
  %v4437 = vrot.slane %v3974, 2
  %v4438 = vsel %vm1780, %v4437, %v4436
  %v4439 = vrot.slane %v3975, 1
  %v4440 = vsel %vm1783, %v4439, %v4438
  %v4441 = vsel %vm332, %v4426, 0
  %v4443 = vsel %vm332, %v4440, 0
  %4445 = vmatprep.subr.mxu0 0.0
  %4446 = vmatpush1.msra.mxu0 %v4393
  %4447 = vmatprep.subr.mxu0 0.0
  %4448 = vmatpush1.msra.mxu0 %v4394
  %4449 = vmatprep.subr.mxu0 0.0
  %4450 = vmatpush1.msra.mxu0 %v4395
  %4451 = vmatprep.subr.mxu0 0.0
  %4452 = vmatpush1.msra.mxu0 %v4396
  %4453 = vmatprep.subr.mxu0 0.0
  %4454 = vmatpush1.msra.mxu0 0.0
  %4455 = vmatprep.subr.mxu0 0.0
  %4456 = vmatpush1.msra.mxu0 0.0
  %4457 = vmatprep.subr.mxu0 0.0
  %4458 = vmatpush1.msra.mxu0 0.0
  %4459 = vmatprep.subr.mxu0 0.0
  %4460 = vmatpush1.msra.mxu0 0.0
  %4461 = vmatprep.subr.mxu0 0.0
  %4462 = vmatpush1.msra.mxu0 0.0
  %4463 = vmatprep.subr.mxu0 0.0
  %4464 = vmatpush1.msra.mxu0 0.0
  %4465 = vmatprep.subr.mxu0 0.0
  %4466 = vmatpush1.msra.mxu0 0.0
  %4467 = vmatprep.subr.mxu0 0.0
  %4468 = vmatpush1.msra.mxu0 0.0
  %4469 = vmatprep.subr.mxu0 0.0
  %4470 = vmatpush1.msra.mxu0 0.0
  %4471 = vmatprep.subr.mxu0 0.0
  %4472 = vmatpush1.msra.mxu0 0.0
  %4473 = vmatprep.subr.mxu0 0.0
  %4474 = vmatpush1.msra.mxu0 0.0
  %4475 = vmatprep.subr.mxu0 0.0
  %4476 = vmatpush1.msra.mxu0 0.0
  %4477 = vmatprep.subr.mxu0 0.0
  %4478 = vmatpush1.msra.mxu0 0.0
  %4479 = vmatprep.subr.mxu0 0.0
  %4480 = vmatpush1.msra.mxu0 0.0
  %4481 = vmatprep.subr.mxu0 0.0
  %4482 = vmatpush1.msra.mxu0 0.0
  %4483 = vmatprep.subr.mxu0 0.0
  %4484 = vmatpush1.msra.mxu0 0.0
  %4485 = vmatprep.subr.mxu0 0.0
  %4486 = vmatpush1.msra.mxu0 0.0
  %4487 = vmatprep.subr.mxu0 0.0
  %4488 = vmatpush1.msra.mxu0 0.0
  %4489 = vmatprep.subr.mxu0 0.0
  %4490 = vmatpush1.msra.mxu0 0.0
  %4491 = vmatprep.subr.mxu0 0.0
  %4492 = vmatpush1.msra.mxu0 0.0
  %4493 = vmatprep.subr.mxu0 0.0
  %4494 = vmatpush1.msra.mxu0 0.0
  %4495 = vmatprep.subr.mxu0 0.0
  %4496 = vmatpush1.msra.mxu0 0.0
  %4497 = vmatprep.subr.mxu0 0.0
  %4498 = vmatpush1.msra.mxu0 0.0
  %4499 = vmatprep.subr.mxu0 0.0
  %4500 = vmatpush1.msra.mxu0 0.0
  %4501 = vmatprep.subr.mxu0 0.0
  %4502 = vmatpush1.msra.mxu0 0.0
  %4503 = vmatprep.subr.mxu0 0.0
  %4504 = vmatpush1.msra.mxu0 0.0
  %4505 = vmatprep.subr.mxu0 0.0
  %4506 = vmatpush1.msra.mxu0 0.0
  %4507 = vmatprep.subr.mxu0 0.0
  %4508 = vmatpush1.msra.mxu0 0.0
  %4509 = vmatprep.mubr.f32.mxu0 0.0
  %4510 = vmatmul.mubr.f32.gmra.mrb[0].mxu0 %v4441
  %v4511 = vpop.f32.mrb[0].mxu0
  %v4512 = vadd.f32 0.0, %v4511
  %v4513 = vpop.f32.mrb[0].mxu0
  %4514 = vmatprep.mubr.f32.mxu0 0.0
  %4515 = vmatmul.mubr.f32.gmra.mrb[0].mxu0 %v4443
  %v4516 = vpop.f32.mrb[0].mxu0
  %v4517 = vadd.f32 0.0, %v4516
  %v4518 = vpop.f32.mrb[0].mxu0
  %4519 = vdwg.mxu0
  %v4520 = vadd.f32 %v4391, %v4512
  %v4521 = vadd.f32 %v4392, %v4517
  %v4522 = vld [vmem:[%s8 + $0x2e8] sm:$0xff]
  %v4523 = vld [vmem:[%s8 + $0x2f0] sm:$0xff]
  %v4524 = vld [vmem:[%s8 + $0x2f8] sm:$0xff]
  %v4525 = vld [vmem:[%s8 + $0x300] sm:$0xff]
  %v4542 = vrot.slane %v4201, 7
  %v4543 = vsel %vm1765, %v4542, %v4200
  %v4544 = vrot.slane %v4202, 6
  %v4545 = vsel %vm1768, %v4544, %v4543
  %v4546 = vrot.slane %v4203, 5
  %v4547 = vsel %vm1771, %v4546, %v4545
  %v4548 = vrot.slane %v4204, 4
  %v4549 = vsel %vm1774, %v4548, %v4547
  %v4550 = vrot.slane %v4205, 3
  %v4551 = vsel %vm1777, %v4550, %v4549
  %v4552 = vrot.slane %v4206, 2
  %v4553 = vsel %vm1780, %v4552, %v4551
  %v4554 = vrot.slane %v4207, 1
  %v4555 = vsel %vm1783, %v4554, %v4553
  %v4556 = vrot.slane %v4209, 7
  %v4557 = vsel %vm1765, %v4556, %v4208
  %v4558 = vrot.slane %v4210, 6
  %v4559 = vsel %vm1768, %v4558, %v4557
  %v4560 = vrot.slane %v4211, 5
  %v4561 = vsel %vm1771, %v4560, %v4559
  %v4562 = vrot.slane %v4212, 4
  %v4563 = vsel %vm1774, %v4562, %v4561
  %v4564 = vrot.slane %v4213, 3
  %v4565 = vsel %vm1777, %v4564, %v4563
  %v4566 = vrot.slane %v4214, 2
  %v4567 = vsel %vm1780, %v4566, %v4565
  %v4568 = vrot.slane %v4215, 1
  %v4569 = vsel %vm1783, %v4568, %v4567
  %v4570 = vsel %vm332, %v4555, 0
  %v4572 = vsel %vm332, %v4569, 0
  %4574 = vmatprep.subr.mxu0 0.0
  %4575 = vmatpush1.msra.mxu0 %v4522
  %4576 = vmatprep.subr.mxu0 0.0
  %4577 = vmatpush1.msra.mxu0 %v4523
  %4578 = vmatprep.subr.mxu0 0.0
  %4579 = vmatpush1.msra.mxu0 %v4524
  %4580 = vmatprep.subr.mxu0 0.0
  %4581 = vmatpush1.msra.mxu0 %v4525
  %4582 = vmatprep.subr.mxu0 0.0
  %4583 = vmatpush1.msra.mxu0 0.0
  %4584 = vmatprep.subr.mxu0 0.0
  %4585 = vmatpush1.msra.mxu0 0.0
  %4586 = vmatprep.subr.mxu0 0.0
  %4587 = vmatpush1.msra.mxu0 0.0
  %4588 = vmatprep.subr.mxu0 0.0
  %4589 = vmatpush1.msra.mxu0 0.0
  %4590 = vmatprep.subr.mxu0 0.0
  %4591 = vmatpush1.msra.mxu0 0.0
  %4592 = vmatprep.subr.mxu0 0.0
  %4593 = vmatpush1.msra.mxu0 0.0
  %4594 = vmatprep.subr.mxu0 0.0
  %4595 = vmatpush1.msra.mxu0 0.0
  %4596 = vmatprep.subr.mxu0 0.0
  %4597 = vmatpush1.msra.mxu0 0.0
  %4598 = vmatprep.subr.mxu0 0.0
  %4599 = vmatpush1.msra.mxu0 0.0
  %4600 = vmatprep.subr.mxu0 0.0
  %4601 = vmatpush1.msra.mxu0 0.0
  %4602 = vmatprep.subr.mxu0 0.0
  %4603 = vmatpush1.msra.mxu0 0.0
  %4604 = vmatprep.subr.mxu0 0.0
  %4605 = vmatpush1.msra.mxu0 0.0
  %4606 = vmatprep.subr.mxu0 0.0
  %4607 = vmatpush1.msra.mxu0 0.0
  %4608 = vmatprep.subr.mxu0 0.0
  %4609 = vmatpush1.msra.mxu0 0.0
  %4610 = vmatprep.subr.mxu0 0.0
  %4611 = vmatpush1.msra.mxu0 0.0
  %4612 = vmatprep.subr.mxu0 0.0
  %4613 = vmatpush1.msra.mxu0 0.0
  %4614 = vmatprep.subr.mxu0 0.0
  %4615 = vmatpush1.msra.mxu0 0.0
  %4616 = vmatprep.subr.mxu0 0.0
  %4617 = vmatpush1.msra.mxu0 0.0
  %4618 = vmatprep.subr.mxu0 0.0
  %4619 = vmatpush1.msra.mxu0 0.0
  %4620 = vmatprep.subr.mxu0 0.0
  %4621 = vmatpush1.msra.mxu0 0.0
  %4622 = vmatprep.subr.mxu0 0.0
  %4623 = vmatpush1.msra.mxu0 0.0
  %4624 = vmatprep.subr.mxu0 0.0
  %4625 = vmatpush1.msra.mxu0 0.0
  %4626 = vmatprep.subr.mxu0 0.0
  %4627 = vmatpush1.msra.mxu0 0.0
  %4628 = vmatprep.subr.mxu0 0.0
  %4629 = vmatpush1.msra.mxu0 0.0
  %4630 = vmatprep.subr.mxu0 0.0
  %4631 = vmatpush1.msra.mxu0 0.0
  %4632 = vmatprep.subr.mxu0 0.0
  %4633 = vmatpush1.msra.mxu0 0.0
  %4634 = vmatprep.subr.mxu0 0.0
  %4635 = vmatpush1.msra.mxu0 0.0
  %4636 = vmatprep.subr.mxu0 0.0
  %4637 = vmatpush1.msra.mxu0 0.0
  %4638 = vmatprep.mubr.f32.mxu0 0.0
  %4639 = vmatmul.mubr.f32.gmra.mrb[0].mxu0 %v4570
  %v4640 = vpop.f32.mrb[0].mxu0
  %v4641 = vadd.f32 0.0, %v4640
  %v4642 = vpop.f32.mrb[0].mxu0
  %4643 = vmatprep.mubr.f32.mxu0 0.0
  %4644 = vmatmul.mubr.f32.gmra.mrb[0].mxu0 %v4572
  %v4645 = vpop.f32.mrb[0].mxu0
  %v4646 = vadd.f32 0.0, %v4645
  %v4647 = vpop.f32.mrb[0].mxu0
  %4648 = vdwg.mxu0
  %v4649 = vadd.f32 %v4520, %v4641
  %v4650 = vadd.f32 %v4521, %v4646
  %v4651 = vld [vmem:[%s8 + $0x308] sm:$0xff]
  %v4652 = vld [vmem:[%s8 + $0x310] sm:$0xff]
  %v4653 = vld [vmem:[%s8 + $0x318] sm:$0xff]
  %v4654 = vld [vmem:[%s8 + $0x320] sm:$0xff]
  %v4656 = vsel %vm332, %v3728, 0
  %v4659 = vsel %vm332, %v3735, 0
  %4661 = vmatprep.subr.mxu0 0.0
  %4662 = vmatpush1.msra.mxu0 %v4651
  %4663 = vmatprep.subr.mxu0 0.0
  %4664 = vmatpush1.msra.mxu0 %v4652
  %4665 = vmatprep.subr.mxu0 0.0
  %4666 = vmatpush1.msra.mxu0 %v4653
  %4667 = vmatprep.subr.mxu0 0.0
  %4668 = vmatpush1.msra.mxu0 %v4654
  %4669 = vmatprep.subr.mxu0 0.0
  %4670 = vmatpush1.msra.mxu0 0.0
  %4671 = vmatprep.subr.mxu0 0.0
  %4672 = vmatpush1.msra.mxu0 0.0
  %4673 = vmatprep.subr.mxu0 0.0
  %4674 = vmatpush1.msra.mxu0 0.0
  %4675 = vmatprep.subr.mxu0 0.0
  %4676 = vmatpush1.msra.mxu0 0.0
  %4677 = vmatprep.subr.mxu0 0.0
  %4678 = vmatpush1.msra.mxu0 0.0
  %4679 = vmatprep.subr.mxu0 0.0
  %4680 = vmatpush1.msra.mxu0 0.0
  %4681 = vmatprep.subr.mxu0 0.0
  %4682 = vmatpush1.msra.mxu0 0.0
  %4683 = vmatprep.subr.mxu0 0.0
  %4684 = vmatpush1.msra.mxu0 0.0
  %4685 = vmatprep.subr.mxu0 0.0
  %4686 = vmatpush1.msra.mxu0 0.0
  %4687 = vmatprep.subr.mxu0 0.0
  %4688 = vmatpush1.msra.mxu0 0.0
  %4689 = vmatprep.subr.mxu0 0.0
  %4690 = vmatpush1.msra.mxu0 0.0
  %4691 = vmatprep.subr.mxu0 0.0
  %4692 = vmatpush1.msra.mxu0 0.0
  %4693 = vmatprep.subr.mxu0 0.0
  %4694 = vmatpush1.msra.mxu0 0.0
  %4695 = vmatprep.subr.mxu0 0.0
  %4696 = vmatpush1.msra.mxu0 0.0
  %4697 = vmatprep.subr.mxu0 0.0
  %4698 = vmatpush1.msra.mxu0 0.0
  %4699 = vmatprep.subr.mxu0 0.0
  %4700 = vmatpush1.msra.mxu0 0.0
  %4701 = vmatprep.subr.mxu0 0.0
  %4702 = vmatpush1.msra.mxu0 0.0
  %4703 = vmatprep.subr.mxu0 0.0
  %4704 = vmatpush1.msra.mxu0 0.0
  %4705 = vmatprep.subr.mxu0 0.0
  %4706 = vmatpush1.msra.mxu0 0.0
  %4707 = vmatprep.subr.mxu0 0.0
  %4708 = vmatpush1.msra.mxu0 0.0
  %4709 = vmatprep.subr.mxu0 0.0
  %4710 = vmatpush1.msra.mxu0 0.0
  %4711 = vmatprep.subr.mxu0 0.0
  %4712 = vmatpush1.msra.mxu0 0.0
  %4713 = vmatprep.subr.mxu0 0.0
  %4714 = vmatpush1.msra.mxu0 0.0
  %4715 = vmatprep.subr.mxu0 0.0
  %4716 = vmatpush1.msra.mxu0 0.0
  %4717 = vmatprep.subr.mxu0 0.0
  %4718 = vmatpush1.msra.mxu0 0.0
  %4719 = vmatprep.subr.mxu0 0.0
  %4720 = vmatpush1.msra.mxu0 0.0
  %4721 = vmatprep.subr.mxu0 0.0
  %4722 = vmatpush1.msra.mxu0 0.0
  %4723 = vmatprep.subr.mxu0 0.0
  %4724 = vmatpush1.msra.mxu0 0.0
  %4725 = vmatprep.mubr.f32.mxu0 0.0
  %4726 = vmatmul.mubr.f32.gmra.mrb[0].mxu0 %v4656
  %v4727 = vpop.f32.mrb[0].mxu0
  %v4728 = vadd.f32 0.0, %v4727
  %v4729 = vpop.f32.mrb[0].mxu0
  %4730 = vmatprep.mubr.f32.mxu0 0.0
  %4731 = vmatmul.mubr.f32.gmra.mrb[0].mxu0 %v4659
  %v4732 = vpop.f32.mrb[0].mxu0
  %v4733 = vadd.f32 0.0, %v4732
  %v4734 = vpop.f32.mrb[0].mxu0
  %4735 = vdwg.mxu0
  %v4736 = vadd.f32 %v4649, %v4728
  %v4737 = vadd.f32 %v4650, %v4733
  %v4738 = vmul.f32 %v3632, %v2098
  %v4739 = vmul.f32 %v3633, %v2102
  %v4740 = vld [vmem:[%s8 + $0x328] sm:$0xff]
  %v4741 = vld [vmem:[%s8 + $0x330] sm:$0xff]
  %v4742 = vld [vmem:[%s8 + $0x338] sm:$0xff]
  %v4743 = vld [vmem:[%s8 + $0x340] sm:$0xff]
  %v4745 = vsel %vm332, %v4738, 0
  %v4748 = vsel %vm332, %v4739, 0
  %4750 = vmatprep.subr.mxu0 0.0
  %4751 = vmatpush1.msra.mxu0 %v4740
  %4752 = vmatprep.subr.mxu0 0.0
  %4753 = vmatpush1.msra.mxu0 %v4741
  %4754 = vmatprep.subr.mxu0 0.0
  %4755 = vmatpush1.msra.mxu0 %v4742
  %4756 = vmatprep.subr.mxu0 0.0
  %4757 = vmatpush1.msra.mxu0 %v4743
  %4758 = vmatprep.subr.mxu0 0.0
  %4759 = vmatpush1.msra.mxu0 0.0
  %4760 = vmatprep.subr.mxu0 0.0
  %4761 = vmatpush1.msra.mxu0 0.0
  %4762 = vmatprep.subr.mxu0 0.0
  %4763 = vmatpush1.msra.mxu0 0.0
  %4764 = vmatprep.subr.mxu0 0.0
  %4765 = vmatpush1.msra.mxu0 0.0
  %4766 = vmatprep.subr.mxu0 0.0
  %4767 = vmatpush1.msra.mxu0 0.0
  %4768 = vmatprep.subr.mxu0 0.0
  %4769 = vmatpush1.msra.mxu0 0.0
  %4770 = vmatprep.subr.mxu0 0.0
  %4771 = vmatpush1.msra.mxu0 0.0
  %4772 = vmatprep.subr.mxu0 0.0
  %4773 = vmatpush1.msra.mxu0 0.0
  %4774 = vmatprep.subr.mxu0 0.0
  %4775 = vmatpush1.msra.mxu0 0.0
  %4776 = vmatprep.subr.mxu0 0.0
  %4777 = vmatpush1.msra.mxu0 0.0
  %4778 = vmatprep.subr.mxu0 0.0
  %4779 = vmatpush1.msra.mxu0 0.0
  %4780 = vmatprep.subr.mxu0 0.0
  %4781 = vmatpush1.msra.mxu0 0.0
  %4782 = vmatprep.subr.mxu0 0.0
  %4783 = vmatpush1.msra.mxu0 0.0
  %4784 = vmatprep.subr.mxu0 0.0
  %4785 = vmatpush1.msra.mxu0 0.0
  %4786 = vmatprep.subr.mxu0 0.0
  %4787 = vmatpush1.msra.mxu0 0.0
  %4788 = vmatprep.subr.mxu0 0.0
  %4789 = vmatpush1.msra.mxu0 0.0
  %4790 = vmatprep.subr.mxu0 0.0
  %4791 = vmatpush1.msra.mxu0 0.0
  %4792 = vmatprep.subr.mxu0 0.0
  %4793 = vmatpush1.msra.mxu0 0.0
  %4794 = vmatprep.subr.mxu0 0.0
  %4795 = vmatpush1.msra.mxu0 0.0
  %4796 = vmatprep.subr.mxu0 0.0
  %4797 = vmatpush1.msra.mxu0 0.0
  %4798 = vmatprep.subr.mxu0 0.0
  %4799 = vmatpush1.msra.mxu0 0.0
  %4800 = vmatprep.subr.mxu0 0.0
  %4801 = vmatpush1.msra.mxu0 0.0
  %4802 = vmatprep.subr.mxu0 0.0
  %4803 = vmatpush1.msra.mxu0 0.0
  %4804 = vmatprep.subr.mxu0 0.0
  %4805 = vmatpush1.msra.mxu0 0.0
  %4806 = vmatprep.subr.mxu0 0.0
  %4807 = vmatpush1.msra.mxu0 0.0
  %4808 = vmatprep.subr.mxu0 0.0
  %4809 = vmatpush1.msra.mxu0 0.0
  %4810 = vmatprep.subr.mxu0 0.0
  %4811 = vmatpush1.msra.mxu0 0.0
  %4812 = vmatprep.subr.mxu0 0.0
  %4813 = vmatpush1.msra.mxu0 0.0
  %4814 = vmatprep.mubr.f32.mxu0 0.0
  %4815 = vmatmul.mubr.f32.gmra.mrb[0].mxu0 %v4745
  %v4816 = vpop.f32.mrb[0].mxu0
  %v4817 = vadd.f32 0.0, %v4816
  %v4818 = vpop.f32.mrb[0].mxu0
  %4819 = vmatprep.mubr.f32.mxu0 0.0
  %4820 = vmatmul.mubr.f32.gmra.mrb[0].mxu0 %v4748
  %v4821 = vpop.f32.mrb[0].mxu0
  %v4822 = vadd.f32 0.0, %v4821
  %v4823 = vpop.f32.mrb[0].mxu0
  %4824 = vdwg.mxu0
  %v4825 = vadd.f32 %v4736, %v4817
  %v4826 = vadd.f32 %v4737, %v4822
  %v4827 = vmul.f32 %v3960, %v2098
  %v4828 = vmul.f32 %v3961, %v2193
  %v4829 = vmul.f32 %v3962, %v2194
  %v4830 = vmul.f32 %v3963, %v2195
  %v4831 = vmul.f32 %v3964, %v2196
  %v4832 = vmul.f32 %v3965, %v2197
  %v4833 = vmul.f32 %v3966, %v2198
  %v4834 = vmul.f32 %v3967, %v2199
  %v4835 = vmul.f32 %v3968, %v2102
  %v4836 = vmul.f32 %v3969, %v2200
  %v4837 = vmul.f32 %v3970, %v2201
  %v4838 = vmul.f32 %v3971, %v2202
  %v4839 = vmul.f32 %v3972, %v2203
  %v4840 = vmul.f32 %v3973, %v2204
  %v4841 = vmul.f32 %v3974, %v2205
  %v4842 = vmul.f32 %v3975, %v2206
  %v4843 = vld [vmem:[%s8 + $0x348] sm:$0xff]
  %v4844 = vld [vmem:[%s8 + $0x350] sm:$0xff]
  %v4845 = vld [vmem:[%s8 + $0x358] sm:$0xff]
  %v4846 = vld [vmem:[%s8 + $0x360] sm:$0xff]
  %v4863 = vrot.slane %v4828, 7
  %v4864 = vsel %vm1765, %v4863, %v4827
  %v4865 = vrot.slane %v4829, 6
  %v4866 = vsel %vm1768, %v4865, %v4864
  %v4867 = vrot.slane %v4830, 5
  %v4868 = vsel %vm1771, %v4867, %v4866
  %v4869 = vrot.slane %v4831, 4
  %v4870 = vsel %vm1774, %v4869, %v4868
  %v4871 = vrot.slane %v4832, 3
  %v4872 = vsel %vm1777, %v4871, %v4870
  %v4873 = vrot.slane %v4833, 2
  %v4874 = vsel %vm1780, %v4873, %v4872
  %v4875 = vrot.slane %v4834, 1
  %v4876 = vsel %vm1783, %v4875, %v4874
  %v4877 = vrot.slane %v4836, 7
  %v4878 = vsel %vm1765, %v4877, %v4835
  %v4879 = vrot.slane %v4837, 6
  %v4880 = vsel %vm1768, %v4879, %v4878
  %v4881 = vrot.slane %v4838, 5
  %v4882 = vsel %vm1771, %v4881, %v4880
  %v4883 = vrot.slane %v4839, 4
  %v4884 = vsel %vm1774, %v4883, %v4882
  %v4885 = vrot.slane %v4840, 3
  %v4886 = vsel %vm1777, %v4885, %v4884
  %v4887 = vrot.slane %v4841, 2
  %v4888 = vsel %vm1780, %v4887, %v4886
  %v4889 = vrot.slane %v4842, 1
  %v4890 = vsel %vm1783, %v4889, %v4888
  %v4891 = vsel %vm332, %v4876, 0
  %v4893 = vsel %vm332, %v4890, 0
  %4895 = vmatprep.subr.mxu0 0.0
  %4896 = vmatpush1.msra.mxu0 %v4843
  %4897 = vmatprep.subr.mxu0 0.0
  %4898 = vmatpush1.msra.mxu0 %v4844
  %4899 = vmatprep.subr.mxu0 0.0
  %4900 = vmatpush1.msra.mxu0 %v4845
  %4901 = vmatprep.subr.mxu0 0.0
  %4902 = vmatpush1.msra.mxu0 %v4846
  %4903 = vmatprep.subr.mxu0 0.0
  %4904 = vmatpush1.msra.mxu0 0.0
  %4905 = vmatprep.subr.mxu0 0.0
  %4906 = vmatpush1.msra.mxu0 0.0
  %4907 = vmatprep.subr.mxu0 0.0
  %4908 = vmatpush1.msra.mxu0 0.0
  %4909 = vmatprep.subr.mxu0 0.0
  %4910 = vmatpush1.msra.mxu0 0.0
  %4911 = vmatprep.subr.mxu0 0.0
  %4912 = vmatpush1.msra.mxu0 0.0
  %4913 = vmatprep.subr.mxu0 0.0
  %4914 = vmatpush1.msra.mxu0 0.0
  %4915 = vmatprep.subr.mxu0 0.0
  %4916 = vmatpush1.msra.mxu0 0.0
  %4917 = vmatprep.subr.mxu0 0.0
  %4918 = vmatpush1.msra.mxu0 0.0
  %4919 = vmatprep.subr.mxu0 0.0
  %4920 = vmatpush1.msra.mxu0 0.0
  %4921 = vmatprep.subr.mxu0 0.0
  %4922 = vmatpush1.msra.mxu0 0.0
  %4923 = vmatprep.subr.mxu0 0.0
  %4924 = vmatpush1.msra.mxu0 0.0
  %4925 = vmatprep.subr.mxu0 0.0
  %4926 = vmatpush1.msra.mxu0 0.0
  %4927 = vmatprep.subr.mxu0 0.0
  %4928 = vmatpush1.msra.mxu0 0.0
  %4929 = vmatprep.subr.mxu0 0.0
  %4930 = vmatpush1.msra.mxu0 0.0
  %4931 = vmatprep.subr.mxu0 0.0
  %4932 = vmatpush1.msra.mxu0 0.0
  %4933 = vmatprep.subr.mxu0 0.0
  %4934 = vmatpush1.msra.mxu0 0.0
  %4935 = vmatprep.subr.mxu0 0.0
  %4936 = vmatpush1.msra.mxu0 0.0
  %4937 = vmatprep.subr.mxu0 0.0
  %4938 = vmatpush1.msra.mxu0 0.0
  %4939 = vmatprep.subr.mxu0 0.0
  %4940 = vmatpush1.msra.mxu0 0.0
  %4941 = vmatprep.subr.mxu0 0.0
  %4942 = vmatpush1.msra.mxu0 0.0
  %4943 = vmatprep.subr.mxu0 0.0
  %4944 = vmatpush1.msra.mxu0 0.0
  %4945 = vmatprep.subr.mxu0 0.0
  %4946 = vmatpush1.msra.mxu0 0.0
  %4947 = vmatprep.subr.mxu0 0.0
  %4948 = vmatpush1.msra.mxu0 0.0
  %4949 = vmatprep.subr.mxu0 0.0
  %4950 = vmatpush1.msra.mxu0 0.0
  %4951 = vmatprep.subr.mxu0 0.0
  %4952 = vmatpush1.msra.mxu0 0.0
  %4953 = vmatprep.subr.mxu0 0.0
  %4954 = vmatpush1.msra.mxu0 0.0
  %4955 = vmatprep.subr.mxu0 0.0
  %4956 = vmatpush1.msra.mxu0 0.0
  %4957 = vmatprep.subr.mxu0 0.0
  %4958 = vmatpush1.msra.mxu0 0.0
  %4959 = vmatprep.mubr.f32.mxu0 0.0
  %4960 = vmatmul.mubr.f32.gmra.mrb[0].mxu0 %v4891
  %v4961 = vpop.f32.mrb[0].mxu0
  %v4962 = vadd.f32 0.0, %v4961
  %v4963 = vpop.f32.mrb[0].mxu0
  %4964 = vmatprep.mubr.f32.mxu0 0.0
  %4965 = vmatmul.mubr.f32.gmra.mrb[0].mxu0 %v4893
  %v4966 = vpop.f32.mrb[0].mxu0
  %v4967 = vadd.f32 0.0, %v4966
  %v4968 = vpop.f32.mrb[0].mxu0
  %4969 = vdwg.mxu0
  %v4970 = vadd.f32 %v4825, %v4962
  %v4971 = vadd.f32 %v4826, %v4967
  %v4972 = vmul.f32 %v4200, %v2098
  %v4973 = vmul.f32 %v4201, %v2193
  %v4974 = vmul.f32 %v4202, %v2194
  %v4975 = vmul.f32 %v4203, %v2195
  %v4976 = vmul.f32 %v4204, %v2196
  %v4977 = vmul.f32 %v4205, %v2197
  %v4978 = vmul.f32 %v4206, %v2198
  %v4979 = vmul.f32 %v4207, %v2199
  %v4980 = vmul.f32 %v4208, %v2102
  %v4981 = vmul.f32 %v4209, %v2200
  %v4982 = vmul.f32 %v4210, %v2201
  %v4983 = vmul.f32 %v4211, %v2202
  %v4984 = vmul.f32 %v4212, %v2203
  %v4985 = vmul.f32 %v4213, %v2204
  %v4986 = vmul.f32 %v4214, %v2205
  %v4987 = vmul.f32 %v4215, %v2206
  %v4988 = vld [vmem:[%s8 + $0x368] sm:$0xff]
  %v4989 = vld [vmem:[%s8 + $0x370] sm:$0xff]
  %v4990 = vld [vmem:[%s8 + $0x378] sm:$0xff]
  %v4991 = vld [vmem:[%s8 + $0x380] sm:$0xff]
  %v5008 = vrot.slane %v4973, 7
  %v5009 = vsel %vm1765, %v5008, %v4972
  %v5010 = vrot.slane %v4974, 6
  %v5011 = vsel %vm1768, %v5010, %v5009
  %v5012 = vrot.slane %v4975, 5
  %v5013 = vsel %vm1771, %v5012, %v5011
  %v5014 = vrot.slane %v4976, 4
  %v5015 = vsel %vm1774, %v5014, %v5013
  %v5016 = vrot.slane %v4977, 3
  %v5017 = vsel %vm1777, %v5016, %v5015
  %v5018 = vrot.slane %v4978, 2
  %v5019 = vsel %vm1780, %v5018, %v5017
  %v5020 = vrot.slane %v4979, 1
  %v5021 = vsel %vm1783, %v5020, %v5019
  %v5022 = vrot.slane %v4981, 7
  %v5023 = vsel %vm1765, %v5022, %v4980
  %v5024 = vrot.slane %v4982, 6
  %v5025 = vsel %vm1768, %v5024, %v5023
  %v5026 = vrot.slane %v4983, 5
  %v5027 = vsel %vm1771, %v5026, %v5025
  %v5028 = vrot.slane %v4984, 4
  %v5029 = vsel %vm1774, %v5028, %v5027
  %v5030 = vrot.slane %v4985, 3
  %v5031 = vsel %vm1777, %v5030, %v5029
  %v5032 = vrot.slane %v4986, 2
  %v5033 = vsel %vm1780, %v5032, %v5031
  %v5034 = vrot.slane %v4987, 1
  %v5035 = vsel %vm1783, %v5034, %v5033
  %v5036 = vsel %vm332, %v5021, 0
  %v5038 = vsel %vm332, %v5035, 0
  %5040 = vmatprep.subr.mxu0 0.0
  %5041 = vmatpush1.msra.mxu0 %v4988
  %5042 = vmatprep.subr.mxu0 0.0
  %5043 = vmatpush1.msra.mxu0 %v4989
  %5044 = vmatprep.subr.mxu0 0.0
  %5045 = vmatpush1.msra.mxu0 %v4990
  %5046 = vmatprep.subr.mxu0 0.0
  %5047 = vmatpush1.msra.mxu0 %v4991
  %5048 = vmatprep.subr.mxu0 0.0
  %5049 = vmatpush1.msra.mxu0 0.0
  %5050 = vmatprep.subr.mxu0 0.0
  %5051 = vmatpush1.msra.mxu0 0.0
  %5052 = vmatprep.subr.mxu0 0.0
  %5053 = vmatpush1.msra.mxu0 0.0
  %5054 = vmatprep.subr.mxu0 0.0
  %5055 = vmatpush1.msra.mxu0 0.0
  %5056 = vmatprep.subr.mxu0 0.0
  %5057 = vmatpush1.msra.mxu0 0.0
  %5058 = vmatprep.subr.mxu0 0.0
  %5059 = vmatpush1.msra.mxu0 0.0
  %5060 = vmatprep.subr.mxu0 0.0
  %5061 = vmatpush1.msra.mxu0 0.0
  %5062 = vmatprep.subr.mxu0 0.0
  %5063 = vmatpush1.msra.mxu0 0.0
  %5064 = vmatprep.subr.mxu0 0.0
  %5065 = vmatpush1.msra.mxu0 0.0
  %5066 = vmatprep.subr.mxu0 0.0
  %5067 = vmatpush1.msra.mxu0 0.0
  %5068 = vmatprep.subr.mxu0 0.0
  %5069 = vmatpush1.msra.mxu0 0.0
  %5070 = vmatprep.subr.mxu0 0.0
  %5071 = vmatpush1.msra.mxu0 0.0
  %5072 = vmatprep.subr.mxu0 0.0
  %5073 = vmatpush1.msra.mxu0 0.0
  %5074 = vmatprep.subr.mxu0 0.0
  %5075 = vmatpush1.msra.mxu0 0.0
  %5076 = vmatprep.subr.mxu0 0.0
  %5077 = vmatpush1.msra.mxu0 0.0
  %5078 = vmatprep.subr.mxu0 0.0
  %5079 = vmatpush1.msra.mxu0 0.0
  %5080 = vmatprep.subr.mxu0 0.0
  %5081 = vmatpush1.msra.mxu0 0.0
  %5082 = vmatprep.subr.mxu0 0.0
  %5083 = vmatpush1.msra.mxu0 0.0
  %5084 = vmatprep.subr.mxu0 0.0
  %5085 = vmatpush1.msra.mxu0 0.0
  %5086 = vmatprep.subr.mxu0 0.0
  %5087 = vmatpush1.msra.mxu0 0.0
  %5088 = vmatprep.subr.mxu0 0.0
  %5089 = vmatpush1.msra.mxu0 0.0
  %5090 = vmatprep.subr.mxu0 0.0
  %5091 = vmatpush1.msra.mxu0 0.0
  %5092 = vmatprep.subr.mxu0 0.0
  %5093 = vmatpush1.msra.mxu0 0.0
  %5094 = vmatprep.subr.mxu0 0.0
  %5095 = vmatpush1.msra.mxu0 0.0
  %5096 = vmatprep.subr.mxu0 0.0
  %5097 = vmatpush1.msra.mxu0 0.0
  %5098 = vmatprep.subr.mxu0 0.0
  %5099 = vmatpush1.msra.mxu0 0.0
  %5100 = vmatprep.subr.mxu0 0.0
  %5101 = vmatpush1.msra.mxu0 0.0
  %5102 = vmatprep.subr.mxu0 0.0
  %5103 = vmatpush1.msra.mxu0 0.0
  %5104 = vmatprep.mubr.f32.mxu0 0.0
  %5105 = vmatmul.mubr.f32.gmra.mrb[0].mxu0 %v5036
  %v5106 = vpop.f32.mrb[0].mxu0
  %v5107 = vadd.f32 0.0, %v5106
  %v5108 = vpop.f32.mrb[0].mxu0
  %5109 = vmatprep.mubr.f32.mxu0 0.0
  %5110 = vmatmul.mubr.f32.gmra.mrb[0].mxu0 %v5038
  %v5111 = vpop.f32.mrb[0].mxu0
  %v5112 = vadd.f32 0.0, %v5111
  %v5113 = vpop.f32.mrb[0].mxu0
  %5114 = vdwg.mxu0
  %v5115 = vadd.f32 %v4970, %v5107
  %v5116 = vadd.f32 %v4971, %v5112
  %v5117 = vmul.f32 %v3728, %v2098
  %v5118 = vmul.f32 %v3735, %v2102
  %v5119 = vld [vmem:[%s8 + $0x388] sm:$0xff]
  %v5120 = vld [vmem:[%s8 + $0x390] sm:$0xff]
  %v5121 = vld [vmem:[%s8 + $0x398] sm:$0xff]
  %v5122 = vld [vmem:[%s8 + $0x3a0] sm:$0xff]
  %v5124 = vsel %vm332, %v5117, 0
  %v5127 = vsel %vm332, %v5118, 0
  %5129 = vmatprep.subr.mxu0 0.0
  %5130 = vmatpush1.msra.mxu0 %v5119
  %5131 = vmatprep.subr.mxu0 0.0
  %5132 = vmatpush1.msra.mxu0 %v5120
  %5133 = vmatprep.subr.mxu0 0.0
  %5134 = vmatpush1.msra.mxu0 %v5121
  %5135 = vmatprep.subr.mxu0 0.0
  %5136 = vmatpush1.msra.mxu0 %v5122
  %5137 = vmatprep.subr.mxu0 0.0
  %5138 = vmatpush1.msra.mxu0 0.0
  %5139 = vmatprep.subr.mxu0 0.0
  %5140 = vmatpush1.msra.mxu0 0.0
  %5141 = vmatprep.subr.mxu0 0.0
  %5142 = vmatpush1.msra.mxu0 0.0
  %5143 = vmatprep.subr.mxu0 0.0
  %5144 = vmatpush1.msra.mxu0 0.0
  %5145 = vmatprep.subr.mxu0 0.0
  %5146 = vmatpush1.msra.mxu0 0.0
  %5147 = vmatprep.subr.mxu0 0.0
  %5148 = vmatpush1.msra.mxu0 0.0
  %5149 = vmatprep.subr.mxu0 0.0
  %5150 = vmatpush1.msra.mxu0 0.0
  %5151 = vmatprep.subr.mxu0 0.0
  %5152 = vmatpush1.msra.mxu0 0.0
  %5153 = vmatprep.subr.mxu0 0.0
  %5154 = vmatpush1.msra.mxu0 0.0
  %5155 = vmatprep.subr.mxu0 0.0
  %5156 = vmatpush1.msra.mxu0 0.0
  %5157 = vmatprep.subr.mxu0 0.0
  %5158 = vmatpush1.msra.mxu0 0.0
  %5159 = vmatprep.subr.mxu0 0.0
  %5160 = vmatpush1.msra.mxu0 0.0
  %5161 = vmatprep.subr.mxu0 0.0
  %5162 = vmatpush1.msra.mxu0 0.0
  %5163 = vmatprep.subr.mxu0 0.0
  %5164 = vmatpush1.msra.mxu0 0.0
  %5165 = vmatprep.subr.mxu0 0.0
  %5166 = vmatpush1.msra.mxu0 0.0
  %5167 = vmatprep.subr.mxu0 0.0
  %5168 = vmatpush1.msra.mxu0 0.0
  %5169 = vmatprep.subr.mxu0 0.0
  %5170 = vmatpush1.msra.mxu0 0.0
  %5171 = vmatprep.subr.mxu0 0.0
  %5172 = vmatpush1.msra.mxu0 0.0
  %5173 = vmatprep.subr.mxu0 0.0
  %5174 = vmatpush1.msra.mxu0 0.0
  %5175 = vmatprep.subr.mxu0 0.0
  %5176 = vmatpush1.msra.mxu0 0.0
  %5177 = vmatprep.subr.mxu0 0.0
  %5178 = vmatpush1.msra.mxu0 0.0
  %5179 = vmatprep.subr.mxu0 0.0
  %5180 = vmatpush1.msra.mxu0 0.0
  %5181 = vmatprep.subr.mxu0 0.0
  %5182 = vmatpush1.msra.mxu0 0.0
  %5183 = vmatprep.subr.mxu0 0.0
  %5184 = vmatpush1.msra.mxu0 0.0
  %5185 = vmatprep.subr.mxu0 0.0
  %5186 = vmatpush1.msra.mxu0 0.0
  %5187 = vmatprep.subr.mxu0 0.0
  %5188 = vmatpush1.msra.mxu0 0.0
  %5189 = vmatprep.subr.mxu0 0.0
  %5190 = vmatpush1.msra.mxu0 0.0
  %5191 = vmatprep.subr.mxu0 0.0
  %5192 = vmatpush1.msra.mxu0 0.0
  %5193 = vmatprep.mubr.f32.mxu0 0.0
  %5194 = vmatmul.mubr.f32.gmra.mrb[0].mxu0 %v5124
  %v5195 = vpop.f32.mrb[0].mxu0
  %v5196 = vadd.f32 0.0, %v5195
  %v5197 = vpop.f32.mrb[0].mxu0
  %5198 = vmatprep.mubr.f32.mxu0 0.0
  %5199 = vmatmul.mubr.f32.gmra.mrb[0].mxu0 %v5127
  %v5200 = vpop.f32.mrb[0].mxu0
  %v5201 = vadd.f32 0.0, %v5200
  %v5202 = vpop.f32.mrb[0].mxu0
  %5203 = vdwg.mxu0
  %v5204 = vadd.f32 %v5115, %v5196
  %v5205 = vadd.f32 %v5116, %v5201
  %v5206 = vmul.f32 %v3632, %v2602
  %v5207 = vmul.f32 %v3633, %v2606
  %v5208 = vld [vmem:[%s8 + $0x3a8] sm:$0xff]
  %v5209 = vld [vmem:[%s8 + $0x3b0] sm:$0xff]
  %v5210 = vld [vmem:[%s8 + $0x3b8] sm:$0xff]
  %v5211 = vld [vmem:[%s8 + $0x3c0] sm:$0xff]
  %v5213 = vsel %vm332, %v5206, 0
  %v5216 = vsel %vm332, %v5207, 0
  %5218 = vmatprep.subr.mxu0 0.0
  %5219 = vmatpush1.msra.mxu0 %v5208
  %5220 = vmatprep.subr.mxu0 0.0
  %5221 = vmatpush1.msra.mxu0 %v5209
  %5222 = vmatprep.subr.mxu0 0.0
  %5223 = vmatpush1.msra.mxu0 %v5210
  %5224 = vmatprep.subr.mxu0 0.0
  %5225 = vmatpush1.msra.mxu0 %v5211
  %5226 = vmatprep.subr.mxu0 0.0
  %5227 = vmatpush1.msra.mxu0 0.0
  %5228 = vmatprep.subr.mxu0 0.0
  %5229 = vmatpush1.msra.mxu0 0.0
  %5230 = vmatprep.subr.mxu0 0.0
  %5231 = vmatpush1.msra.mxu0 0.0
  %5232 = vmatprep.subr.mxu0 0.0
  %5233 = vmatpush1.msra.mxu0 0.0
  %5234 = vmatprep.subr.mxu0 0.0
  %5235 = vmatpush1.msra.mxu0 0.0
  %5236 = vmatprep.subr.mxu0 0.0
  %5237 = vmatpush1.msra.mxu0 0.0
  %5238 = vmatprep.subr.mxu0 0.0
  %5239 = vmatpush1.msra.mxu0 0.0
  %5240 = vmatprep.subr.mxu0 0.0
  %5241 = vmatpush1.msra.mxu0 0.0
  %5242 = vmatprep.subr.mxu0 0.0
  %5243 = vmatpush1.msra.mxu0 0.0
  %5244 = vmatprep.subr.mxu0 0.0
  %5245 = vmatpush1.msra.mxu0 0.0
  %5246 = vmatprep.subr.mxu0 0.0
  %5247 = vmatpush1.msra.mxu0 0.0
  %5248 = vmatprep.subr.mxu0 0.0
  %5249 = vmatpush1.msra.mxu0 0.0
  %5250 = vmatprep.subr.mxu0 0.0
  %5251 = vmatpush1.msra.mxu0 0.0
  %5252 = vmatprep.subr.mxu0 0.0
  %5253 = vmatpush1.msra.mxu0 0.0
  %5254 = vmatprep.subr.mxu0 0.0
  %5255 = vmatpush1.msra.mxu0 0.0
  %5256 = vmatprep.subr.mxu0 0.0
  %5257 = vmatpush1.msra.mxu0 0.0
  %5258 = vmatprep.subr.mxu0 0.0
  %5259 = vmatpush1.msra.mxu0 0.0
  %5260 = vmatprep.subr.mxu0 0.0
  %5261 = vmatpush1.msra.mxu0 0.0
  %5262 = vmatprep.subr.mxu0 0.0
  %5263 = vmatpush1.msra.mxu0 0.0
  %5264 = vmatprep.subr.mxu0 0.0
  %5265 = vmatpush1.msra.mxu0 0.0
  %5266 = vmatprep.subr.mxu0 0.0
  %5267 = vmatpush1.msra.mxu0 0.0
  %5268 = vmatprep.subr.mxu0 0.0
  %5269 = vmatpush1.msra.mxu0 0.0
  %5270 = vmatprep.subr.mxu0 0.0
  %5271 = vmatpush1.msra.mxu0 0.0
  %5272 = vmatprep.subr.mxu0 0.0
  %5273 = vmatpush1.msra.mxu0 0.0
  %5274 = vmatprep.subr.mxu0 0.0
  %5275 = vmatpush1.msra.mxu0 0.0
  %5276 = vmatprep.subr.mxu0 0.0
  %5277 = vmatpush1.msra.mxu0 0.0
  %5278 = vmatprep.subr.mxu0 0.0
  %5279 = vmatpush1.msra.mxu0 0.0
  %5280 = vmatprep.subr.mxu0 0.0
  %5281 = vmatpush1.msra.mxu0 0.0
  %5282 = vmatprep.mubr.f32.mxu0 0.0
  %5283 = vmatmul.mubr.f32.gmra.mrb[0].mxu0 %v5213
  %v5284 = vpop.f32.mrb[0].mxu0
  %v5285 = vadd.f32 0.0, %v5284
  %v5286 = vpop.f32.mrb[0].mxu0
  %5287 = vmatprep.mubr.f32.mxu0 0.0
  %5288 = vmatmul.mubr.f32.gmra.mrb[0].mxu0 %v5216
  %v5289 = vpop.f32.mrb[0].mxu0
  %v5290 = vadd.f32 0.0, %v5289
  %v5291 = vpop.f32.mrb[0].mxu0
  %5292 = vdwg.mxu0
  %v5293 = vadd.f32 %v5204, %v5285
  %v5294 = vadd.f32 %v5205, %v5290
  %v5295 = vmul.f32 %v3960, %v2602
  %v5296 = vmul.f32 %v3961, %v2697
  %v5297 = vmul.f32 %v3962, %v2698
  %v5298 = vmul.f32 %v3963, %v2699
  %v5299 = vmul.f32 %v3964, %v2700
  %v5300 = vmul.f32 %v3965, %v2701
  %v5301 = vmul.f32 %v3966, %v2702
  %v5302 = vmul.f32 %v3967, %v2703
  %v5303 = vmul.f32 %v3968, %v2606
  %v5304 = vmul.f32 %v3969, %v2704
  %v5305 = vmul.f32 %v3970, %v2705
  %v5306 = vmul.f32 %v3971, %v2706
  %v5307 = vmul.f32 %v3972, %v2707
  %v5308 = vmul.f32 %v3973, %v2708
  %v5309 = vmul.f32 %v3974, %v2709
  %v5310 = vmul.f32 %v3975, %v2710
  %v5311 = vld [vmem:[%s8 + $0x3c8] sm:$0xff]
  %v5312 = vld [vmem:[%s8 + $0x3d0] sm:$0xff]
  %v5313 = vld [vmem:[%s8 + $0x3d8] sm:$0xff]
  %v5314 = vld [vmem:[%s8 + $0x3e0] sm:$0xff]
  %v5331 = vrot.slane %v5296, 7
  %v5332 = vsel %vm1765, %v5331, %v5295
  %v5333 = vrot.slane %v5297, 6
  %v5334 = vsel %vm1768, %v5333, %v5332
  %v5335 = vrot.slane %v5298, 5
  %v5336 = vsel %vm1771, %v5335, %v5334
  %v5337 = vrot.slane %v5299, 4
  %v5338 = vsel %vm1774, %v5337, %v5336
  %v5339 = vrot.slane %v5300, 3
  %v5340 = vsel %vm1777, %v5339, %v5338
  %v5341 = vrot.slane %v5301, 2
  %v5342 = vsel %vm1780, %v5341, %v5340
  %v5343 = vrot.slane %v5302, 1
  %v5344 = vsel %vm1783, %v5343, %v5342
  %v5345 = vrot.slane %v5304, 7
  %v5346 = vsel %vm1765, %v5345, %v5303
  %v5347 = vrot.slane %v5305, 6
  %v5348 = vsel %vm1768, %v5347, %v5346
  %v5349 = vrot.slane %v5306, 5
  %v5350 = vsel %vm1771, %v5349, %v5348
  %v5351 = vrot.slane %v5307, 4
  %v5352 = vsel %vm1774, %v5351, %v5350
  %v5353 = vrot.slane %v5308, 3
  %v5354 = vsel %vm1777, %v5353, %v5352
  %v5355 = vrot.slane %v5309, 2
  %v5356 = vsel %vm1780, %v5355, %v5354
  %v5357 = vrot.slane %v5310, 1
  %v5358 = vsel %vm1783, %v5357, %v5356
  %v5359 = vsel %vm332, %v5344, 0
  %v5361 = vsel %vm332, %v5358, 0
  %5363 = vmatprep.subr.mxu0 0.0
  %5364 = vmatpush1.msra.mxu0 %v5311
  %5365 = vmatprep.subr.mxu0 0.0
  %5366 = vmatpush1.msra.mxu0 %v5312
  %5367 = vmatprep.subr.mxu0 0.0
  %5368 = vmatpush1.msra.mxu0 %v5313
  %5369 = vmatprep.subr.mxu0 0.0
  %5370 = vmatpush1.msra.mxu0 %v5314
  %5371 = vmatprep.subr.mxu0 0.0
  %5372 = vmatpush1.msra.mxu0 0.0
  %5373 = vmatprep.subr.mxu0 0.0
  %5374 = vmatpush1.msra.mxu0 0.0
  %5375 = vmatprep.subr.mxu0 0.0
  %5376 = vmatpush1.msra.mxu0 0.0
  %5377 = vmatprep.subr.mxu0 0.0
  %5378 = vmatpush1.msra.mxu0 0.0
  %5379 = vmatprep.subr.mxu0 0.0
  %5380 = vmatpush1.msra.mxu0 0.0
  %5381 = vmatprep.subr.mxu0 0.0
  %5382 = vmatpush1.msra.mxu0 0.0
  %5383 = vmatprep.subr.mxu0 0.0
  %5384 = vmatpush1.msra.mxu0 0.0
  %5385 = vmatprep.subr.mxu0 0.0
  %5386 = vmatpush1.msra.mxu0 0.0
  %5387 = vmatprep.subr.mxu0 0.0
  %5388 = vmatpush1.msra.mxu0 0.0
  %5389 = vmatprep.subr.mxu0 0.0
  %5390 = vmatpush1.msra.mxu0 0.0
  %5391 = vmatprep.subr.mxu0 0.0
  %5392 = vmatpush1.msra.mxu0 0.0
  %5393 = vmatprep.subr.mxu0 0.0
  %5394 = vmatpush1.msra.mxu0 0.0
  %5395 = vmatprep.subr.mxu0 0.0
  %5396 = vmatpush1.msra.mxu0 0.0
  %5397 = vmatprep.subr.mxu0 0.0
  %5398 = vmatpush1.msra.mxu0 0.0
  %5399 = vmatprep.subr.mxu0 0.0
  %5400 = vmatpush1.msra.mxu0 0.0
  %5401 = vmatprep.subr.mxu0 0.0
  %5402 = vmatpush1.msra.mxu0 0.0
  %5403 = vmatprep.subr.mxu0 0.0
  %5404 = vmatpush1.msra.mxu0 0.0
  %5405 = vmatprep.subr.mxu0 0.0
  %5406 = vmatpush1.msra.mxu0 0.0
  %5407 = vmatprep.subr.mxu0 0.0
  %5408 = vmatpush1.msra.mxu0 0.0
  %5409 = vmatprep.subr.mxu0 0.0
  %5410 = vmatpush1.msra.mxu0 0.0
  %5411 = vmatprep.subr.mxu0 0.0
  %5412 = vmatpush1.msra.mxu0 0.0
  %5413 = vmatprep.subr.mxu0 0.0
  %5414 = vmatpush1.msra.mxu0 0.0
  %5415 = vmatprep.subr.mxu0 0.0
  %5416 = vmatpush1.msra.mxu0 0.0
  %5417 = vmatprep.subr.mxu0 0.0
  %5418 = vmatpush1.msra.mxu0 0.0
  %5419 = vmatprep.subr.mxu0 0.0
  %5420 = vmatpush1.msra.mxu0 0.0
  %5421 = vmatprep.subr.mxu0 0.0
  %5422 = vmatpush1.msra.mxu0 0.0
  %5423 = vmatprep.subr.mxu0 0.0
  %5424 = vmatpush1.msra.mxu0 0.0
  %5425 = vmatprep.subr.mxu0 0.0
  %5426 = vmatpush1.msra.mxu0 0.0
  %5427 = vmatprep.mubr.f32.mxu0 0.0
  %5428 = vmatmul.mubr.f32.gmra.mrb[0].mxu0 %v5359
  %v5429 = vpop.f32.mrb[0].mxu0
  %v5430 = vadd.f32 0.0, %v5429
  %v5431 = vpop.f32.mrb[0].mxu0
  %5432 = vmatprep.mubr.f32.mxu0 0.0
  %5433 = vmatmul.mubr.f32.gmra.mrb[0].mxu0 %v5361
  %v5434 = vpop.f32.mrb[0].mxu0
  %v5435 = vadd.f32 0.0, %v5434
  %v5436 = vpop.f32.mrb[0].mxu0
  %5437 = vdwg.mxu0
  %v5438 = vadd.f32 %v5293, %v5430
  %v5439 = vadd.f32 %v5294, %v5435
  %v5440 = vmul.f32 %v4200, %v2602
  %v5441 = vmul.f32 %v4201, %v2697
  %v5442 = vmul.f32 %v4202, %v2698
  %v5443 = vmul.f32 %v4203, %v2699
  %v5444 = vmul.f32 %v4204, %v2700
  %v5445 = vmul.f32 %v4205, %v2701
  %v5446 = vmul.f32 %v4206, %v2702
  %v5447 = vmul.f32 %v4207, %v2703
  %v5448 = vmul.f32 %v4208, %v2606
  %v5449 = vmul.f32 %v4209, %v2704
  %v5450 = vmul.f32 %v4210, %v2705
  %v5451 = vmul.f32 %v4211, %v2706
  %v5452 = vmul.f32 %v4212, %v2707
  %v5453 = vmul.f32 %v4213, %v2708
  %v5454 = vmul.f32 %v4214, %v2709
  %v5455 = vmul.f32 %v4215, %v2710
  %v5456 = vld [vmem:[%s8 + $0x3e8] sm:$0xff]
  %v5457 = vld [vmem:[%s8 + $0x3f0] sm:$0xff]
  %v5458 = vld [vmem:[%s8 + $0x3f8] sm:$0xff]
  %v5459 = vld [vmem:[%s8 + $0x400] sm:$0xff]
  %v5476 = vrot.slane %v5441, 7
  %v5477 = vsel %vm1765, %v5476, %v5440
  %v5478 = vrot.slane %v5442, 6
  %v5479 = vsel %vm1768, %v5478, %v5477
  %v5480 = vrot.slane %v5443, 5
  %v5481 = vsel %vm1771, %v5480, %v5479
  %v5482 = vrot.slane %v5444, 4
  %v5483 = vsel %vm1774, %v5482, %v5481
  %v5484 = vrot.slane %v5445, 3
  %v5485 = vsel %vm1777, %v5484, %v5483
  %v5486 = vrot.slane %v5446, 2
  %v5487 = vsel %vm1780, %v5486, %v5485
  %v5488 = vrot.slane %v5447, 1
  %v5489 = vsel %vm1783, %v5488, %v5487
  %v5490 = vrot.slane %v5449, 7
  %v5491 = vsel %vm1765, %v5490, %v5448
  %v5492 = vrot.slane %v5450, 6
  %v5493 = vsel %vm1768, %v5492, %v5491
  %v5494 = vrot.slane %v5451, 5
  %v5495 = vsel %vm1771, %v5494, %v5493
  %v5496 = vrot.slane %v5452, 4
  %v5497 = vsel %vm1774, %v5496, %v5495
  %v5498 = vrot.slane %v5453, 3
  %v5499 = vsel %vm1777, %v5498, %v5497
  %v5500 = vrot.slane %v5454, 2
  %v5501 = vsel %vm1780, %v5500, %v5499
  %v5502 = vrot.slane %v5455, 1
  %v5503 = vsel %vm1783, %v5502, %v5501
  %v5504 = vsel %vm332, %v5489, 0
  %v5506 = vsel %vm332, %v5503, 0
  %5508 = vmatprep.subr.mxu0 0.0
  %5509 = vmatpush1.msra.mxu0 %v5456
  %5510 = vmatprep.subr.mxu0 0.0
  %5511 = vmatpush1.msra.mxu0 %v5457
  %5512 = vmatprep.subr.mxu0 0.0
  %5513 = vmatpush1.msra.mxu0 %v5458
  %5514 = vmatprep.subr.mxu0 0.0
  %5515 = vmatpush1.msra.mxu0 %v5459
  %5516 = vmatprep.subr.mxu0 0.0
  %5517 = vmatpush1.msra.mxu0 0.0
  %5518 = vmatprep.subr.mxu0 0.0
  %5519 = vmatpush1.msra.mxu0 0.0
  %5520 = vmatprep.subr.mxu0 0.0
  %5521 = vmatpush1.msra.mxu0 0.0
  %5522 = vmatprep.subr.mxu0 0.0
  %5523 = vmatpush1.msra.mxu0 0.0
  %5524 = vmatprep.subr.mxu0 0.0
  %5525 = vmatpush1.msra.mxu0 0.0
  %5526 = vmatprep.subr.mxu0 0.0
  %5527 = vmatpush1.msra.mxu0 0.0
  %5528 = vmatprep.subr.mxu0 0.0
  %5529 = vmatpush1.msra.mxu0 0.0
  %5530 = vmatprep.subr.mxu0 0.0
  %5531 = vmatpush1.msra.mxu0 0.0
  %5532 = vmatprep.subr.mxu0 0.0
  %5533 = vmatpush1.msra.mxu0 0.0
  %5534 = vmatprep.subr.mxu0 0.0
  %5535 = vmatpush1.msra.mxu0 0.0
  %5536 = vmatprep.subr.mxu0 0.0
  %5537 = vmatpush1.msra.mxu0 0.0
  %5538 = vmatprep.subr.mxu0 0.0
  %5539 = vmatpush1.msra.mxu0 0.0
  %5540 = vmatprep.subr.mxu0 0.0
  %5541 = vmatpush1.msra.mxu0 0.0
  %5542 = vmatprep.subr.mxu0 0.0
  %5543 = vmatpush1.msra.mxu0 0.0
  %5544 = vmatprep.subr.mxu0 0.0
  %5545 = vmatpush1.msra.mxu0 0.0
  %5546 = vmatprep.subr.mxu0 0.0
  %5547 = vmatpush1.msra.mxu0 0.0
  %5548 = vmatprep.subr.mxu0 0.0
  %5549 = vmatpush1.msra.mxu0 0.0
  %5550 = vmatprep.subr.mxu0 0.0
  %5551 = vmatpush1.msra.mxu0 0.0
  %5552 = vmatprep.subr.mxu0 0.0
  %5553 = vmatpush1.msra.mxu0 0.0
  %5554 = vmatprep.subr.mxu0 0.0
  %5555 = vmatpush1.msra.mxu0 0.0
  %5556 = vmatprep.subr.mxu0 0.0
  %5557 = vmatpush1.msra.mxu0 0.0
  %5558 = vmatprep.subr.mxu0 0.0
  %5559 = vmatpush1.msra.mxu0 0.0
  %5560 = vmatprep.subr.mxu0 0.0
  %5561 = vmatpush1.msra.mxu0 0.0
  %5562 = vmatprep.subr.mxu0 0.0
  %5563 = vmatpush1.msra.mxu0 0.0
  %5564 = vmatprep.subr.mxu0 0.0
  %5565 = vmatpush1.msra.mxu0 0.0
  %5566 = vmatprep.subr.mxu0 0.0
  %5567 = vmatpush1.msra.mxu0 0.0
  %5568 = vmatprep.subr.mxu0 0.0
  %5569 = vmatpush1.msra.mxu0 0.0
  %5570 = vmatprep.subr.mxu0 0.0
  %5571 = vmatpush1.msra.mxu0 0.0
  %5572 = vmatprep.mubr.f32.mxu0 0.0
  %5573 = vmatmul.mubr.f32.gmra.mrb[0].mxu0 %v5504
  %v5574 = vpop.f32.mrb[0].mxu0
  %v5575 = vadd.f32 0.0, %v5574
  %v5576 = vpop.f32.mrb[0].mxu0
  %5577 = vmatprep.mubr.f32.mxu0 0.0
  %5578 = vmatmul.mubr.f32.gmra.mrb[0].mxu0 %v5506
  %v5579 = vpop.f32.mrb[0].mxu0
  %v5580 = vadd.f32 0.0, %v5579
  %v5581 = vpop.f32.mrb[0].mxu0
  %5582 = vdwg.mxu0
  %v5583 = vadd.f32 %v5438, %v5575
  %v5584 = vadd.f32 %v5439, %v5580
  %v5585 = vmul.f32 %v3728, %v2602
  %v5586 = vmul.f32 %v3735, %v2606
  %v5587 = vld [vmem:[%s8 + $0x408] sm:$0xff]
  %v5588 = vld [vmem:[%s8 + $0x410] sm:$0xff]
  %v5589 = vld [vmem:[%s8 + $0x418] sm:$0xff]
  %v5590 = vld [vmem:[%s8 + $0x420] sm:$0xff]
  %v5592 = vsel %vm332, %v5585, 0
  %v5595 = vsel %vm332, %v5586, 0
  %5597 = vmatprep.subr.mxu0 0.0
  %5598 = vmatpush1.msra.mxu0 %v5587
  %5599 = vmatprep.subr.mxu0 0.0
  %5600 = vmatpush1.msra.mxu0 %v5588
  %5601 = vmatprep.subr.mxu0 0.0
  %5602 = vmatpush1.msra.mxu0 %v5589
  %5603 = vmatprep.subr.mxu0 0.0
  %5604 = vmatpush1.msra.mxu0 %v5590
  %5605 = vmatprep.subr.mxu0 0.0
  %5606 = vmatpush1.msra.mxu0 0.0
  %5607 = vmatprep.subr.mxu0 0.0
  %5608 = vmatpush1.msra.mxu0 0.0
  %5609 = vmatprep.subr.mxu0 0.0
  %5610 = vmatpush1.msra.mxu0 0.0
  %5611 = vmatprep.subr.mxu0 0.0
  %5612 = vmatpush1.msra.mxu0 0.0
  %5613 = vmatprep.subr.mxu0 0.0
  %5614 = vmatpush1.msra.mxu0 0.0
  %5615 = vmatprep.subr.mxu0 0.0
  %5616 = vmatpush1.msra.mxu0 0.0
  %5617 = vmatprep.subr.mxu0 0.0
  %5618 = vmatpush1.msra.mxu0 0.0
  %5619 = vmatprep.subr.mxu0 0.0
  %5620 = vmatpush1.msra.mxu0 0.0
  %5621 = vmatprep.subr.mxu0 0.0
  %5622 = vmatpush1.msra.mxu0 0.0
  %5623 = vmatprep.subr.mxu0 0.0
  %5624 = vmatpush1.msra.mxu0 0.0
  %5625 = vmatprep.subr.mxu0 0.0
  %5626 = vmatpush1.msra.mxu0 0.0
  %5627 = vmatprep.subr.mxu0 0.0
  %5628 = vmatpush1.msra.mxu0 0.0
  %5629 = vmatprep.subr.mxu0 0.0
  %5630 = vmatpush1.msra.mxu0 0.0
  %5631 = vmatprep.subr.mxu0 0.0
  %5632 = vmatpush1.msra.mxu0 0.0
  %5633 = vmatprep.subr.mxu0 0.0
  %5634 = vmatpush1.msra.mxu0 0.0
  %5635 = vmatprep.subr.mxu0 0.0
  %5636 = vmatpush1.msra.mxu0 0.0
  %5637 = vmatprep.subr.mxu0 0.0
  %5638 = vmatpush1.msra.mxu0 0.0
  %5639 = vmatprep.subr.mxu0 0.0
  %5640 = vmatpush1.msra.mxu0 0.0
  %5641 = vmatprep.subr.mxu0 0.0
  %5642 = vmatpush1.msra.mxu0 0.0
  %5643 = vmatprep.subr.mxu0 0.0
  %5644 = vmatpush1.msra.mxu0 0.0
  %5645 = vmatprep.subr.mxu0 0.0
  %5646 = vmatpush1.msra.mxu0 0.0
  %5647 = vmatprep.subr.mxu0 0.0
  %5648 = vmatpush1.msra.mxu0 0.0
  %5649 = vmatprep.subr.mxu0 0.0
  %5650 = vmatpush1.msra.mxu0 0.0
  %5651 = vmatprep.subr.mxu0 0.0
  %5652 = vmatpush1.msra.mxu0 0.0
  %5653 = vmatprep.subr.mxu0 0.0
  %5654 = vmatpush1.msra.mxu0 0.0
  %5655 = vmatprep.subr.mxu0 0.0
  %5656 = vmatpush1.msra.mxu0 0.0
  %5657 = vmatprep.subr.mxu0 0.0
  %5658 = vmatpush1.msra.mxu0 0.0
  %5659 = vmatprep.subr.mxu0 0.0
  %5660 = vmatpush1.msra.mxu0 0.0
  %5661 = vmatprep.mubr.f32.mxu0 0.0
  %5662 = vmatmul.mubr.f32.gmra.mrb[0].mxu0 %v5592
  %v5663 = vpop.f32.mrb[0].mxu0
  %v5664 = vadd.f32 0.0, %v5663
  %v5665 = vpop.f32.mrb[0].mxu0
  %5666 = vmatprep.mubr.f32.mxu0 0.0
  %5667 = vmatmul.mubr.f32.gmra.mrb[0].mxu0 %v5595
  %v5668 = vpop.f32.mrb[0].mxu0
  %v5669 = vadd.f32 0.0, %v5668
  %v5670 = vpop.f32.mrb[0].mxu0
  %5671 = vdwg.mxu0
  %v5672 = vadd.f32 %v5583, %v5664
  %v5673 = vadd.f32 %v5584, %v5669
  %v5674 = vmul.f32 %v5672, %v3106
  %v5675 = vmul.f32 %v5673, %v3110
  %v5676 = vadd.f32 %v3114, %v5674
  %v5677 = vadd.f32 %v3115, %v5675
  %v5678 = vld [vmem:[%s7] sm:$0x3]
  %v5680 = vsel %vm145, %v5678, 0
  %5682 = vmatprep.subr.mxu0 0.0
  %5683 = vmatpush1.msra.mxu0 %v5676
  %5684 = vmatprep.subr.mxu0 0.0
  %5685 = vmatpush1.msra.mxu0 %v5677
  %5686 = vmatprep.subr.mxu0 0.0
  %5687 = vmatpush1.msra.mxu0 0.0
  %5688 = vmatprep.subr.mxu0 0.0
  %5689 = vmatpush1.msra.mxu0 0.0
  %5690 = vmatprep.subr.mxu0 0.0
  %5691 = vmatpush1.msra.mxu0 0.0
  %5692 = vmatprep.subr.mxu0 0.0
  %5693 = vmatpush1.msra.mxu0 0.0
  %5694 = vmatprep.subr.mxu0 0.0
  %5695 = vmatpush1.msra.mxu0 0.0
  %5696 = vmatprep.subr.mxu0 0.0
  %5697 = vmatpush1.msra.mxu0 0.0
  %5698 = vmatprep.subr.mxu0 0.0
  %5699 = vmatpush1.msra.mxu0 0.0
  %5700 = vmatprep.subr.mxu0 0.0
  %5701 = vmatpush1.msra.mxu0 0.0
  %5702 = vmatprep.subr.mxu0 0.0
  %5703 = vmatpush1.msra.mxu0 0.0
  %5704 = vmatprep.subr.mxu0 0.0
  %5705 = vmatpush1.msra.mxu0 0.0
  %5706 = vmatprep.subr.mxu0 0.0
  %5707 = vmatpush1.msra.mxu0 0.0
  %5708 = vmatprep.subr.mxu0 0.0
  %5709 = vmatpush1.msra.mxu0 0.0
  %5710 = vmatprep.subr.mxu0 0.0
  %5711 = vmatpush1.msra.mxu0 0.0
  %5712 = vmatprep.subr.mxu0 0.0
  %5713 = vmatpush1.msra.mxu0 0.0
  %5714 = vmatprep.subr.mxu0 0.0
  %5715 = vmatpush1.msra.mxu0 0.0
  %5716 = vmatprep.subr.mxu0 0.0
  %5717 = vmatpush1.msra.mxu0 0.0
  %5718 = vmatprep.subr.mxu0 0.0
  %5719 = vmatpush1.msra.mxu0 0.0
  %5720 = vmatprep.subr.mxu0 0.0
  %5721 = vmatpush1.msra.mxu0 0.0
  %5722 = vmatprep.subr.mxu0 0.0
  %5723 = vmatpush1.msra.mxu0 0.0
  %5724 = vmatprep.subr.mxu0 0.0
  %5725 = vmatpush1.msra.mxu0 0.0
  %5726 = vmatprep.subr.mxu0 0.0
  %5727 = vmatpush1.msra.mxu0 0.0
  %5728 = vmatprep.subr.mxu0 0.0
  %5729 = vmatpush1.msra.mxu0 0.0
  %5730 = vmatprep.subr.mxu0 0.0
  %5731 = vmatpush1.msra.mxu0 0.0
  %5732 = vmatprep.subr.mxu0 0.0
  %5733 = vmatpush1.msra.mxu0 0.0
  %5734 = vmatprep.subr.mxu0 0.0
  %5735 = vmatpush1.msra.mxu0 0.0
  %5736 = vmatprep.subr.mxu0 0.0
  %5737 = vmatpush1.msra.mxu0 0.0
  %5738 = vmatprep.subr.mxu0 0.0
  %5739 = vmatpush1.msra.mxu0 0.0
  %5740 = vmatprep.subr.mxu0 0.0
  %5741 = vmatpush1.msra.mxu0 0.0
  %5742 = vmatprep.subr.mxu0 0.0
  %5743 = vmatpush1.msra.mxu0 0.0
  %5744 = vmatprep.subr.mxu0 0.0
  %5745 = vmatpush1.msra.mxu0 0.0
  %5746 = vmatprep.mubr.f32.mxu0 0.0
  %5747 = vmatmul.mubr.f32.gmra.mrb[0].mxu0 %v5680
  %v5748 = vpop.f32.mrb[0].mxu0
  %v5749 = vadd.f32 0.0, %v5748
  %v5750 = vpop.f32.mrb[0].mxu0
  %5751 = vdwg.mxu0
  %v5752 = vld [vmem:[%s8 + $0x430] sm:$0xff]
  %v5753 = vld [vmem:[%s8 + $0x438] sm:$0xff]
  %v5754 = vld [vmem:[%s8 + $0x440] sm:$0xff]
  %v5755 = vld [vmem:[%s8 + $0x448] sm:$0xff]
  %v5756 = vld [vmem:[%s8 + $0x450] sm:$0x1]
  %v5757 = vlaneseq
  %v5758 = vshrl.u32 %v5757, 7
  %v5759 = vsub.s32 0, %v5758
  %v5760 = vrot.slane %v5756, %v5759
  %v5762 = vsel %vm332, %v5749, 0
  %5764 = vmatprep.subr.mxu0 0.0
  %5765 = vmatpush1.msra.mxu0 %v5752
  %5766 = vmatprep.subr.mxu0 0.0
  %5767 = vmatpush1.msra.mxu0 %v5753
  %5768 = vmatprep.subr.mxu0 0.0
  %5769 = vmatpush1.msra.mxu0 %v5754
  %5770 = vmatprep.subr.mxu0 0.0
  %5771 = vmatpush1.msra.mxu0 %v5755
  %5772 = vmatprep.subr.mxu0 0.0
  %5773 = vmatpush1.msra.mxu0 0.0
  %5774 = vmatprep.subr.mxu0 0.0
  %5775 = vmatpush1.msra.mxu0 0.0
  %5776 = vmatprep.subr.mxu0 0.0
  %5777 = vmatpush1.msra.mxu0 0.0
  %5778 = vmatprep.subr.mxu0 0.0
  %5779 = vmatpush1.msra.mxu0 0.0
  %5780 = vmatprep.subr.mxu0 0.0
  %5781 = vmatpush1.msra.mxu0 0.0
  %5782 = vmatprep.subr.mxu0 0.0
  %5783 = vmatpush1.msra.mxu0 0.0
  %5784 = vmatprep.subr.mxu0 0.0
  %5785 = vmatpush1.msra.mxu0 0.0
  %5786 = vmatprep.subr.mxu0 0.0
  %5787 = vmatpush1.msra.mxu0 0.0
  %5788 = vmatprep.subr.mxu0 0.0
  %5789 = vmatpush1.msra.mxu0 0.0
  %5790 = vmatprep.subr.mxu0 0.0
  %5791 = vmatpush1.msra.mxu0 0.0
  %5792 = vmatprep.subr.mxu0 0.0
  %5793 = vmatpush1.msra.mxu0 0.0
  %5794 = vmatprep.subr.mxu0 0.0
  %5795 = vmatpush1.msra.mxu0 0.0
  %5796 = vmatprep.subr.mxu0 0.0
  %5797 = vmatpush1.msra.mxu0 0.0
  %5798 = vmatprep.subr.mxu0 0.0
  %5799 = vmatpush1.msra.mxu0 0.0
  %5800 = vmatprep.subr.mxu0 0.0
  %5801 = vmatpush1.msra.mxu0 0.0
  %5802 = vmatprep.subr.mxu0 0.0
  %5803 = vmatpush1.msra.mxu0 0.0
  %5804 = vmatprep.subr.mxu0 0.0
  %5805 = vmatpush1.msra.mxu0 0.0
  %5806 = vmatprep.subr.mxu0 0.0
  %5807 = vmatpush1.msra.mxu0 0.0
  %5808 = vmatprep.subr.mxu0 0.0
  %5809 = vmatpush1.msra.mxu0 0.0
  %5810 = vmatprep.subr.mxu0 0.0
  %5811 = vmatpush1.msra.mxu0 0.0
  %5812 = vmatprep.subr.mxu0 0.0
  %5813 = vmatpush1.msra.mxu0 0.0
  %5814 = vmatprep.subr.mxu0 0.0
  %5815 = vmatpush1.msra.mxu0 0.0
  %5816 = vmatprep.subr.mxu0 0.0
  %5817 = vmatpush1.msra.mxu0 0.0
  %5818 = vmatprep.subr.mxu0 0.0
  %5819 = vmatpush1.msra.mxu0 0.0
  %5820 = vmatprep.subr.mxu0 0.0
  %5821 = vmatpush1.msra.mxu0 0.0
  %5822 = vmatprep.subr.mxu0 0.0
  %5823 = vmatpush1.msra.mxu0 0.0
  %5824 = vmatprep.subr.mxu0 0.0
  %5825 = vmatpush1.msra.mxu0 0.0
  %5826 = vmatprep.subr.mxu0 0.0
  %5827 = vmatpush1.msra.mxu0 0.0
  %5828 = vmatprep.mubr.f32.mxu0 0.0
  %5829 = vmatmul.mubr.f32.gmra.mrb[0].mxu0 %v5762
  %v5830 = vpop.f32.mrb[0].mxu0
  %v5831 = vadd.f32 %v5760, %v5830
  %v5832 = vpop.f32.mrb[0].mxu0
  %5833 = vdwg.mxu0
  %v5834 = vmax.f32 %v5831, 0.0
  %v5835 = vld [vmem:[%s8 + $0x458] sm:$0xff]
  %v5836 = vld [vmem:[%s8 + $0x460] sm:$0xff]
  %v5837 = vld [vmem:[%s8 + $0x468] sm:$0xff]
  %v5838 = vld [vmem:[%s8 + $0x470] sm:$0xff]
  %v5839 = vld [vmem:[%s8 + $0x478] sm:$0x1]
  %v5840 = vlaneseq
  %v5841 = vshrl.u32 %v5840, 7
  %v5842 = vsub.s32 0, %v5841
  %v5843 = vrot.slane %v5839, %v5842
  %v5845 = vsel %vm332, %v5834, 0
  %5847 = vmatprep.subr.mxu0 0.0
  %5848 = vmatpush1.msra.mxu0 %v5835
  %5849 = vmatprep.subr.mxu0 0.0
  %5850 = vmatpush1.msra.mxu0 %v5836
  %5851 = vmatprep.subr.mxu0 0.0
  %5852 = vmatpush1.msra.mxu0 %v5837
  %5853 = vmatprep.subr.mxu0 0.0
  %5854 = vmatpush1.msra.mxu0 %v5838
  %5855 = vmatprep.subr.mxu0 0.0
  %5856 = vmatpush1.msra.mxu0 0.0
  %5857 = vmatprep.subr.mxu0 0.0
  %5858 = vmatpush1.msra.mxu0 0.0
  %5859 = vmatprep.subr.mxu0 0.0
  %5860 = vmatpush1.msra.mxu0 0.0
  %5861 = vmatprep.subr.mxu0 0.0
  %5862 = vmatpush1.msra.mxu0 0.0
  %5863 = vmatprep.subr.mxu0 0.0
  %5864 = vmatpush1.msra.mxu0 0.0
  %5865 = vmatprep.subr.mxu0 0.0
  %5866 = vmatpush1.msra.mxu0 0.0
  %5867 = vmatprep.subr.mxu0 0.0
  %5868 = vmatpush1.msra.mxu0 0.0
  %5869 = vmatprep.subr.mxu0 0.0
  %5870 = vmatpush1.msra.mxu0 0.0
  %5871 = vmatprep.subr.mxu0 0.0
  %5872 = vmatpush1.msra.mxu0 0.0
  %5873 = vmatprep.subr.mxu0 0.0
  %5874 = vmatpush1.msra.mxu0 0.0
  %5875 = vmatprep.subr.mxu0 0.0
  %5876 = vmatpush1.msra.mxu0 0.0
  %5877 = vmatprep.subr.mxu0 0.0
  %5878 = vmatpush1.msra.mxu0 0.0
  %5879 = vmatprep.subr.mxu0 0.0
  %5880 = vmatpush1.msra.mxu0 0.0
  %5881 = vmatprep.subr.mxu0 0.0
  %5882 = vmatpush1.msra.mxu0 0.0
  %5883 = vmatprep.subr.mxu0 0.0
  %5884 = vmatpush1.msra.mxu0 0.0
  %5885 = vmatprep.subr.mxu0 0.0
  %5886 = vmatpush1.msra.mxu0 0.0
  %5887 = vmatprep.subr.mxu0 0.0
  %5888 = vmatpush1.msra.mxu0 0.0
  %5889 = vmatprep.subr.mxu0 0.0
  %5890 = vmatpush1.msra.mxu0 0.0
  %5891 = vmatprep.subr.mxu0 0.0
  %5892 = vmatpush1.msra.mxu0 0.0
  %5893 = vmatprep.subr.mxu0 0.0
  %5894 = vmatpush1.msra.mxu0 0.0
  %5895 = vmatprep.subr.mxu0 0.0
  %5896 = vmatpush1.msra.mxu0 0.0
  %5897 = vmatprep.subr.mxu0 0.0
  %5898 = vmatpush1.msra.mxu0 0.0
  %5899 = vmatprep.subr.mxu0 0.0
  %5900 = vmatpush1.msra.mxu0 0.0
  %5901 = vmatprep.subr.mxu0 0.0
  %5902 = vmatpush1.msra.mxu0 0.0
  %5903 = vmatprep.subr.mxu0 0.0
  %5904 = vmatpush1.msra.mxu0 0.0
  %5905 = vmatprep.subr.mxu0 0.0
  %5906 = vmatpush1.msra.mxu0 0.0
  %5907 = vmatprep.subr.mxu0 0.0
  %5908 = vmatpush1.msra.mxu0 0.0
  %5909 = vmatprep.subr.mxu0 0.0
  %5910 = vmatpush1.msra.mxu0 0.0
  %5911 = vmatprep.mubr.f32.mxu0 0.0
  %5912 = vmatmul.mubr.f32.gmra.mrb[0].mxu0 %v5845
  %v5913 = vpop.f32.mrb[0].mxu0
  %v5914 = vadd.f32 %v5843, %v5913
  %v5915 = vpop.f32.mrb[0].mxu0
  %5916 = vdwg.mxu0
  %v5917 = vmax.f32 %v5914, 0.0
  %v5918 = vld [vmem:[%s8 + $0x480] sm:$0xff]
  %v5919 = vld [vmem:[%s8 + $0x488] sm:$0xff]
  %v5920 = vld [vmem:[%s8 + $0x490] sm:$0xff]
  %v5921 = vld [vmem:[%s8 + $0x498] sm:$0xff]
  %v5922 = vld [vmem:[%s8 + $0x4a0] sm:$0x1]
  %v5923 = vlaneseq
  %v5924 = vshrl.u32 %v5923, 7
  %v5925 = vsub.s32 0, %v5924
  %v5926 = vrot.slane %v5922, %v5925
  %v5928 = vsel %vm332, %v5917, 0
  %5930 = vmatprep.subr.mxu0 0.0
  %5931 = vmatpush1.msra.mxu0 %v5918
  %5932 = vmatprep.subr.mxu0 0.0
  %5933 = vmatpush1.msra.mxu0 %v5919
  %5934 = vmatprep.subr.mxu0 0.0
  %5935 = vmatpush1.msra.mxu0 %v5920
  %5936 = vmatprep.subr.mxu0 0.0
  %5937 = vmatpush1.msra.mxu0 %v5921
  %5938 = vmatprep.subr.mxu0 0.0
  %5939 = vmatpush1.msra.mxu0 0.0
  %5940 = vmatprep.subr.mxu0 0.0
  %5941 = vmatpush1.msra.mxu0 0.0
  %5942 = vmatprep.subr.mxu0 0.0
  %5943 = vmatpush1.msra.mxu0 0.0
  %5944 = vmatprep.subr.mxu0 0.0
  %5945 = vmatpush1.msra.mxu0 0.0
  %5946 = vmatprep.subr.mxu0 0.0
  %5947 = vmatpush1.msra.mxu0 0.0
  %5948 = vmatprep.subr.mxu0 0.0
  %5949 = vmatpush1.msra.mxu0 0.0
  %5950 = vmatprep.subr.mxu0 0.0
  %5951 = vmatpush1.msra.mxu0 0.0
  %5952 = vmatprep.subr.mxu0 0.0
  %5953 = vmatpush1.msra.mxu0 0.0
  %5954 = vmatprep.subr.mxu0 0.0
  %5955 = vmatpush1.msra.mxu0 0.0
  %5956 = vmatprep.subr.mxu0 0.0
  %5957 = vmatpush1.msra.mxu0 0.0
  %5958 = vmatprep.subr.mxu0 0.0
  %5959 = vmatpush1.msra.mxu0 0.0
  %5960 = vmatprep.subr.mxu0 0.0
  %5961 = vmatpush1.msra.mxu0 0.0
  %5962 = vmatprep.subr.mxu0 0.0
  %5963 = vmatpush1.msra.mxu0 0.0
  %5964 = vmatprep.subr.mxu0 0.0
  %5965 = vmatpush1.msra.mxu0 0.0
  %5966 = vmatprep.subr.mxu0 0.0
  %5967 = vmatpush1.msra.mxu0 0.0
  %5968 = vmatprep.subr.mxu0 0.0
  %5969 = vmatpush1.msra.mxu0 0.0
  %5970 = vmatprep.subr.mxu0 0.0
  %5971 = vmatpush1.msra.mxu0 0.0
  %5972 = vmatprep.subr.mxu0 0.0
  %5973 = vmatpush1.msra.mxu0 0.0
  %5974 = vmatprep.subr.mxu0 0.0
  %5975 = vmatpush1.msra.mxu0 0.0
  %5976 = vmatprep.subr.mxu0 0.0
  %5977 = vmatpush1.msra.mxu0 0.0
  %5978 = vmatprep.subr.mxu0 0.0
  %5979 = vmatpush1.msra.mxu0 0.0
  %5980 = vmatprep.subr.mxu0 0.0
  %5981 = vmatpush1.msra.mxu0 0.0
  %5982 = vmatprep.subr.mxu0 0.0
  %5983 = vmatpush1.msra.mxu0 0.0
  %5984 = vmatprep.subr.mxu0 0.0
  %5985 = vmatpush1.msra.mxu0 0.0
  %5986 = vmatprep.subr.mxu0 0.0
  %5987 = vmatpush1.msra.mxu0 0.0
  %5988 = vmatprep.subr.mxu0 0.0
  %5989 = vmatpush1.msra.mxu0 0.0
  %5990 = vmatprep.subr.mxu0 0.0
  %5991 = vmatpush1.msra.mxu0 0.0
  %5992 = vmatprep.subr.mxu0 0.0
  %5993 = vmatpush1.msra.mxu0 0.0
  %5994 = vmatprep.mubr.f32.mxu0 0.0
  %5995 = vmatmul.mubr.f32.gmra.mrb[0].mxu0 %v5928
  %v5996 = vpop.f32.mrb[0].mxu0
  %v5997 = vadd.f32 %v5926, %v5996
  %v5998 = vpop.f32.mrb[0].mxu0
  %5999 = vdwg.mxu0
  %vm6000 = vcmask 1024
  %6001 = vst.msk [vmem:[%s9] sm:$0x3] %vm6000, %v5997
  // Predicated region
  $region38: #{tpu_custom_call.1} parent=0 // pred_check
    _
  $region39: #{tpu_custom_call.1} parent=0 // pred_check_branch
    %6003 = sbr.rel (0) target = $region41
  $region40: #{tpu_custom_call.1} parent=0 // pred_region
    _
  $region41: #{tpu_custom_call.1} parent=0 // pred_fallthru
    _
  // Predicated region
  $region42: #{tpu_custom_call.1} parent=0 // pred_check
    _
  $region43: #{tpu_custom_call.1} parent=0 // pred_check_branch
    %6005 = sbr.rel (0) target = $region45
  $region44: #{tpu_custom_call.1} parent=0 // pred_region
    _
  $region45: #{tpu_custom_call.1} parent=0 // pred_fallthru
    _

</llo_original>
